<compile_context>
chip_gen: v7x
topology: tpu7x:2x2x1
jax: 0.10.0
libtpu: 0.0.40
codegen_flags: <defaults>
</compile_context>

<pallas_src>
import jax
import jax.numpy as jnp
from jax import lax
from jax.experimental import pallas as pl
from jax.experimental.pallas import tpu as pltpu


def _round_up(x, m):
    return (x + m - 1) // m * m


# ---------------------------------------------------------------------------
# Pallas kernels
# ---------------------------------------------------------------------------
def _conv_relu_pool_kernel(quad_ref, w_ref, b_ref, o_ref):
    """Fused conv1 (one merged im2col matmul) + bias + ReLU + 2x2 max-pool.

    quad_ref: (4*M, Kp) bf16 — the four pool-phase patch matrices stacked
              along M.  o_ref: (M, 128) bf16.
    pool(relu(conv+b)) == relu(max4(conv)+b) since bias is per-channel and
    ReLU is monotone.
    """
    m_rows = o_ref.shape[0]
    d = jnp.dot(quad_ref[...], w_ref[...],
                preferred_element_type=jnp.float32)            # (4M, 128) f32
    m = jnp.maximum(jnp.maximum(d[0 * m_rows:1 * m_rows], d[1 * m_rows:2 * m_rows]),
                    jnp.maximum(d[2 * m_rows:3 * m_rows], d[3 * m_rows:4 * m_rows]))
    o_ref[...] = jnp.maximum(m + b_ref[...], 0.0).astype(o_ref.dtype)


def _conv2_fc_chain_kernel(quad_ref, w2c_ref, b2c_ref, w1e_ref, b1f_ref,
                           w2f_ref, b2f_ref, w3f_ref, b3f_ref, o_ref):
    """conv2(+bias+ReLU+pool) -> fc1+ReLU -> fc2+ReLU -> fc3 in one kernel.

    quad_ref rows are ordered (pool-phase, position p, batch b) with b padded
    to BP (=8), so the pooled activation reshapes to (P, BP, 128) along native
    (8,128) tiles.  fc1 then contracts over (p, channel) via a batched einsum
    against the position-expanded weight w1e (P, 128, 128) and a sum over p —
    no lane-crossing flatten of the conv activation is needed.
    """
    p_pos = w1e_ref.shape[0]                    # 25 pooled positions
    bp = o_ref.shape[0]                         # padded batch (8)
    lanes = w2c_ref.shape[1]                    # 128
    m_rows = p_pos * bp                         # 200, multiple of 8

    d = jnp.dot(quad_ref[...], w2c_ref[...],
                preferred_element_type=jnp.float32)            # (4M, 128) f32
    m = jnp.maximum(jnp.maximum(d[0 * m_rows:1 * m_rows], d[1 * m_rows:2 * m_rows]),
                    jnp.maximum(d[2 * m_rows:3 * m_rows], d[3 * m_rows:4 * m_rows]))
    pooled = jnp.maximum(m + b2c_ref[...], 0.0)                # (M, 128) f32
    pooled = pooled.reshape(p_pos, bp, lanes).astype(jnp.bfloat16)

    # fc1: h1[b, n] = sum_{p, c} pooled[p, b, c] * w1e[p, c, n]
    h = jnp.einsum('pbc,pcn->pbn', pooled, w1e_ref[...],
                   preferred_element_type=jnp.float32)         # (P, BP, 128)
    h1 = jnp.maximum(jnp.sum(h, axis=0) + b1f_ref[...], 0.0)   # (BP, 128) f32

    h2 = jnp.dot(h1.astype(jnp.bfloat16), w2f_ref[...],
                 preferred_element_type=jnp.float32)
    h2 = jnp.maximum(h2 + b2f_ref[...], 0.0)

    h3 = jnp.dot(h2.astype(jnp.bfloat16), w3f_ref[...],
                 preferred_element_type=jnp.float32)
    o_ref[...] = (h3 + b3f_ref[...]).astype(o_ref.dtype)


# ---------------------------------------------------------------------------
# im2col helpers (wrapper-side XLA glue; operands already bf16)
# ---------------------------------------------------------------------------
def _pool_phase_patches_bij(x, kh, kw):
    """Per pool-phase im2col with rows ordered (b, i, j).

    x: (B, H, W, C).  Returns ([4 x (B*POH*POW, C*kh*kw)], (POH, POW)).
    Columns ordered (c, dh, dw) to match the PyTorch weight flatten.
    """
    B, H, W, C = x.shape
    OH, OW = H - kh + 1, W - kw + 1
    assert OH % 2 == 0 and OW % 2 == 0, "2x2/2 pool needs even conv output"
    POH, POW = OH // 2, OW // 2
    phases = []
    for ph in range(2):
        for pw in range(2):
            taps = []
            for dh in range(kh):
                for dw in range(kw):
                    hs, ws = ph + dh, pw + dw
                    taps.append(x[:, hs:hs + 2 * (POH - 1) + 1:2,
                                  ws:ws + 2 * (POW - 1) + 1:2, :])
            p = jnp.stack(taps, axis=-1)                 # (B,POH,POW,C,kh*kw)
            phases.append(p.reshape(B * POH * POW, C * kh * kw))
    return phases, (POH, POW)


def _pool_phase_patches_pbatch(x, kh, kw, bp):
    """Per pool-phase im2col with rows ordered (position p, batch b), b padded
    to `bp`, so the fused conv2+FC kernel can reshape the pooled output to
    (P, bp, 128) without a relayout."""
    B, H, W, C = x.shape
    OH, OW = H - kh + 1, W - kw + 1
    assert OH % 2 == 0 and OW % 2 == 0
    POH, POW = OH // 2, OW // 2
    phases = []
    for ph in range(2):
        for pw in range(2):
            taps = []
            for dh in range(kh):
                for dw in range(kw):
                    hs, ws = ph + dh, pw + dw
                    taps.append(x[:, hs:hs + 2 * (POH - 1) + 1:2,
                                  ws:ws + 2 * (POW - 1) + 1:2, :])
            p = jnp.stack(taps, axis=-1)                 # (B,POH,POW,C,kh*kw)
            p = jnp.transpose(p, (1, 2, 0, 3, 4))        # (POH,POW,B,C,kh*kw)
            p = p.reshape(POH * POW, B, C * kh * kw)
            p = jnp.pad(p, ((0, 0), (0, bp - B), (0, 0)))
            phases.append(p.reshape(POH * POW * bp, C * kh * kw))
    return phases, (POH, POW)


# ---------------------------------------------------------------------------
# One-time parameter preparation (outside the per-step jit)  [review #5]
# ---------------------------------------------------------------------------
def prepare_params(params):
    bf16, f32 = jnp.bfloat16, jnp.float32

    def pad2(a, r, c):
        return jnp.pad(a, ((0, r - a.shape[0]), (0, c - a.shape[1])))

    def pad_row(v, n):
        return jnp.pad(v, (0, n - v.shape[0])).reshape(1, n).astype(f32)

    c1w, c1b = params["conv1_w"], params["conv1_b"]
    c2w, c2b = params["conv2_w"], params["conv2_b"]
    c1o, c1i, kh, kw = c1w.shape
    c2o = c2w.shape[0]
    k1 = c1i * kh * kw
    k2 = c1o * kh * kw

    # conv weights -> (K, Cout) padded, bf16; columns/rows ordered (c, dh, dw)
    w1c = pad2(c1w.reshape(c1o, k1).T, _round_up(k1, 128), 128).astype(bf16)
    b1c = pad_row(c1b, 128)
    w2c = pad2(c2w.reshape(c2o, k2).T, _round_up(k2, 128), 128).astype(bf16)
    b2c = pad_row(c2b, 128)

    # fc1 weight, expanded per pooled position p: w1e[p, c, n] = fc1_w[n, c*P + p]
    n1 = params["fc1_w"].shape[0]
    p_pos = params["fc1_w"].shape[1] // c2o          # 25 = 5*5
    w1e = params["fc1_w"].reshape(n1, c2o, p_pos)
    w1e = jnp.transpose(w1e, (2, 1, 0))              # (P, c2o, n1)
    w1e = jnp.pad(w1e, ((0, 0), (0, 128 - c2o), (0, 128 - n1))).astype(bf16)
    b1f = pad_row(params["fc1_b"], 128)

    w2f = pad2(params["fc2_w"].T, 128, 128).astype(bf16)
    b2f = pad_row(params["fc2_b"], 128)
    w3f = pad2(params["fc3_w"].T, 128, 128).astype(bf16)
    b3f = pad_row(params["fc3_b"], 128)

    prep = dict(w1c=w1c, b1c=b1c, w2c=w2c, b2c=b2c, w1e=w1e, b1f=b1f,
                w2f=w2f, b2f=b2f, w3f=w3f, b3f=b3f)
    meta = dict(filter_size=kh, c1_out=c1o, c2_out=c2o, p_pos=p_pos,
                num_classes=params["fc3_b"].shape[0])
    return prep, meta


# ---------------------------------------------------------------------------
# Forward
# ---------------------------------------------------------------------------
def convnet_forward(prep, x, meta):
    """x: (B, Cin, H, W) f32, NCHW (PyTorch layout). Returns (B, num_classes)."""
    kh = kw = meta["filter_size"]
    vmem = pl.BlockSpec(memory_space=pltpu.MemorySpace.VMEM)

    # Single NCHW -> NHWC transpose; bf16 from here on (matmul operand dtype).
    x = jnp.transpose(x, (0, 2, 3, 1)).astype(jnp.bfloat16)
    B = x.shape[0]

    # --- conv1 + ReLU + pool : one merged-phase matmul kernel -------------
    phases1, (p1h, p1w) = _pool_phase_patches_bij(x, kh, kw)
    m1 = B * p1h * p1w
    mp1 = _round_up(m1, 8)
    k1p = prep["w1c"].shape[0]
    quad1 = jnp.concatenate(
        [jnp.pad(p, ((0, mp1 - m1), (0, k1p - p.shape[1]))) for p in phases1],
        axis=0)                                           # (4*mp1, k1p) bf16

    # NOTE(v7x/v5e scaling): at non-trivial batch, tile this call with a
    # parallel grid over M (dimension_semantics=("parallel",)) and size the
    # M tile against the scoped-VMEM budget; at B=2 grid=() is strictly best.
    out1 = pl.pallas_call(
        _conv_relu_pool_kernel,
        out_shape=jax.ShapeDtypeStruct((mp1, 128), jnp.bfloat16),
        in_specs=[vmem, vmem, vmem],
        out_specs=vmem,
    )(quad1, prep["w1c"], prep["b1c"])

    y1 = out1[:m1].reshape(B, p1h, p1w, 128)[..., :meta["c1_out"]]

    # --- conv2 + ReLU + pool + fc1 + ReLU + fc2 + ReLU + fc3 : one kernel -
    bp = _round_up(B, 8)
    phases2, (p2h, p2w) = _pool_phase_patches_pbatch(y1, kh, kw, bp)
    assert p2h * p2w == meta["p_pos"], (p2h, p2w, meta["p_pos"])
    k2p = prep["w2c"].shape[0]
    quad2 = jnp.concatenate(
        [jnp.pad(p, ((0, 0), (0, k2p - p.shape[1]))) for p in phases2],
        axis=0)                                           # (4*P*bp, k2p) bf16

    out = pl.pallas_call(
        _conv2_fc_chain_kernel,
        out_shape=jax.ShapeDtypeStruct((bp, 128), jnp.float32),
        in_specs=[vmem] * 9,
        out_specs=vmem,
    )(quad2, prep["w2c"], prep["b2c"], prep["w1e"], prep["b1f"],
      prep["w2f"], prep["b2f"], prep["w3f"], prep["b3f"])

    return out[:B, :meta["num_classes"]]


# ---------------------------------------------------------------------------
# Parameter init + pure-JAX f32 reference (matches the PyTorch module)
# ---------------------------------------------------------------------------
def init_params(key, input_channels, output_channels, num_classes,
                filter_size=5):
    ks = jax.random.split(key, 10)
    s = 0.1
    return {
        "conv1_w": s * jax.random.normal(
            ks[0], (output_channels, input_channels, filter_size, filter_size),
            jnp.float32),
        "conv1_b": s * jax.random.normal(ks[1], (output_channels,), jnp.float32),
        "conv2_w": s * jax.random.normal(
            ks[2], (16, output_channels, filter_size, filter_size), jnp.float32),
        "conv2_b": s * jax.random.normal(ks[3], (16,), jnp.float32),
        "fc1_w": s * jax.random.normal(ks[4], (120, 16 * 5 * 5), jnp.float32),
        "fc1_b": s * jax.random.normal(ks[5], (120,), jnp.float32),
        "fc2_w": s * jax.random.normal(ks[6], (84, 120), jnp.float32),
        "fc2_b": s * jax.random.normal(ks[7], (84,), jnp.float32),
        "fc3_w": s * jax.random.normal(ks[8], (num_classes, 84), jnp.float32),
        "fc3_b": s * jax.random.normal(ks[9], (num_classes,), jnp.float32),
    }


def reference_forward(params, x):
    def conv(inp, w, b):
        y = lax.conv_general_dilated(inp, w, (1, 1), "VALID",
                                     dimension_numbers=("NCHW", "OIHW", "NCHW"))
        return y + b[None, :, None, None]

    def pool(t):
        return lax.reduce_window(t, -jnp.inf, lax.max,
                                 (1, 1, 2, 2), (1, 1, 2, 2), "VALID")

    h = pool(jax.nn.relu(conv(x, params["conv1_w"], params["conv1_b"])))
    h = pool(jax.nn.relu(conv(h, params["conv2_w"], params["conv2_b"])))
    h = h.reshape(h.shape[0], -1)                     # (c, h, w) flatten order
    h = jax.nn.relu(h @ params["fc1_w"].T + params["fc1_b"])
    h = jax.nn.relu(h @ params["fc2_w"].T + params["fc2_b"])
    return h @ params["fc3_w"].T + params["fc3_b"]


if __name__ == "__main__":
    key = jax.random.PRNGKey(0)
    kx, kp = jax.random.split(key)

    batch = 2
    input_channels = 3
    output_channels = 6
    num_classes = 10
    # 32x32 spatial is required so the flatten matches 16*5*5.
    x = jax.random.normal(kx, (batch, input_channels, 32, 32), jnp.float32)
    params = init_params(kp, input_channels, output_channels, num_classes)

    # One-time weight preprocessing outside the per-step jit (review #5).
    prep, meta = prepare_params(params)
    forward = jax.jit(lambda p, xx: convnet_forward(p, xx, meta))

    logits = forward(prep, x)
    jax.block_until_ready(logits)
    assert logits.shape == (batch, num_classes), logits.shape

    # Correctness vs. a pure-JAX f32 reference (bf16 matmuls -> loose check).
    ref = reference_forward(params, x)
    rel = float(jnp.max(jnp.abs(logits - ref)) / jnp.maximum(jnp.max(jnp.abs(ref)), 1e-3))
    assert rel < 0.05, f"relative error too large: {rel}"
    print("KERNEL_OK")
</pallas_src>

<mosaic_0001>
module attributes {stable_mosaic.version = 11 : i64} {
  func.func @_conv_relu_pool_kernel(%arg0: memref<1568x128xbf16, #tpu.memory_space<vmem>>, %arg1: memref<128x128xbf16, #tpu.memory_space<vmem>>, %arg2: memref<1x128xf32, #tpu.memory_space<vmem>>, %arg3: memref<392x128xbf16, #tpu.memory_space<vmem>>) attributes {dimension_semantics = [], scalar_prefetch = 0 : i64, scratch_operands = 0 : i64, tpu.core_type = #tpu.core_type<tc>} {
    %c0 = arith.constant 0 : index
    %c0_0 = arith.constant 0 : index
    %0 = vector.load %arg0[%c0, %c0_0] : memref<1568x128xbf16, #tpu.memory_space<vmem>>, vector<1568x128xbf16>
    %c0_1 = arith.constant 0 : index
    %c0_2 = arith.constant 0 : index
    %1 = vector.load %arg1[%c0_1, %c0_2] : memref<128x128xbf16, #tpu.memory_space<vmem>>, vector<128x128xbf16>
    %cst = arith.constant dense<0.000000e+00> : vector<1568x128xf32>
    %2 = tpu.matmul %0, %1, %cst {dimension_numbers = #tpu.dot_dimension_numbers<[1], [0], [0], [1], [0, 0, 1, 1], [], []>} : vector<1568x128xbf16>, vector<128x128xbf16>, vector<1568x128xf32> -> vector<1568x128xf32>
    %3 = vector.extract_strided_slice %2 {offsets = [0, 0], sizes = [392, 128], strides = [1, 1]} : vector<1568x128xf32> to vector<392x128xf32>
    %4 = vector.extract_strided_slice %2 {offsets = [392, 0], sizes = [392, 128], strides = [1, 1]} : vector<1568x128xf32> to vector<392x128xf32>
    %5 = arith.maximumf %3, %4 : vector<392x128xf32>
    %6 = vector.extract_strided_slice %2 {offsets = [784, 0], sizes = [392, 128], strides = [1, 1]} : vector<1568x128xf32> to vector<392x128xf32>
    %7 = vector.extract_strided_slice %2 {offsets = [1176, 0], sizes = [392, 128], strides = [1, 1]} : vector<1568x128xf32> to vector<392x128xf32>
    %8 = arith.maximumf %6, %7 : vector<392x128xf32>
    %9 = arith.maximumf %5, %8 : vector<392x128xf32>
    %c0_3 = arith.constant 0 : index
    %c0_4 = arith.constant 0 : index
    %10 = vector.load %arg2[%c0_3, %c0_4] : memref<1x128xf32, #tpu.memory_space<vmem>>, vector<1x128xf32>
    %11 = vector.broadcast %10 : vector<1x128xf32> to vector<392x128xf32>
    %12 = arith.addf %9, %11 : vector<392x128xf32>
    %cst_5 = arith.constant 0.000000e+00 : f32
    %13 = vector.broadcast %cst_5 : f32 to vector<392x128xf32>
    %14 = arith.maximumf %12, %13 : vector<392x128xf32>
    %15 = arith.truncf %14 : vector<392x128xf32> to vector<392x128xbf16>
    %c0_6 = arith.constant 0 : index
    %c0_7 = arith.constant 0 : index
    %16 = vector.load %arg3[%c0_6, %c0_7] : memref<392x128xbf16, #tpu.memory_space<vmem>>, vector<392x128xbf16>
    tpu.vector_store %arg3[%c0_6, %c0_7], %15 {strides = array<i32>} : memref<392x128xbf16, #tpu.memory_space<vmem>>, vector<392x128xbf16>,
    return
  }
}

module attributes {stable_mosaic.version = 11 : i64} {
  func.func @_conv2_fc_chain_kernel(%arg0: memref<800x256xbf16, #tpu.memory_space<vmem>>, %arg1: memref<256x128xbf16, #tpu.memory_space<vmem>>, %arg2: memref<1x128xf32, #tpu.memory_space<vmem>>, %arg3: memref<25x128x128xbf16, #tpu.memory_space<vmem>>, %arg4: memref<1x128xf32, #tpu.memory_space<vmem>>, %arg5: memref<128x128xbf16, #tpu.memory_space<vmem>>, %arg6: memref<1x128xf32, #tpu.memory_space<vmem>>, %arg7: memref<128x128xbf16, #tpu.memory_space<vmem>>, %arg8: memref<1x128xf32, #tpu.memory_space<vmem>>, %arg9: memref<8x128xf32, #tpu.memory_space<vmem>>) attributes {dimension_semantics = [], scalar_prefetch = 0 : i64, scratch_operands = 0 : i64, tpu.core_type = #tpu.core_type<tc>} {
    %c0 = arith.constant 0 : index
    %c0_0 = arith.constant 0 : index
    %0 = vector.load %arg0[%c0, %c0_0] : memref<800x256xbf16, #tpu.memory_space<vmem>>, vector<800x256xbf16>
    %c0_1 = arith.constant 0 : index
    %c0_2 = arith.constant 0 : index
    %1 = vector.load %arg1[%c0_1, %c0_2] : memref<256x128xbf16, #tpu.memory_space<vmem>>, vector<256x128xbf16>
    %cst = arith.constant dense<0.000000e+00> : vector<800x128xf32>
    %2 = tpu.matmul %0, %1, %cst {dimension_numbers = #tpu.dot_dimension_numbers<[1], [0], [0], [1], [0, 0, 1, 1], [], []>} : vector<800x256xbf16>, vector<256x128xbf16>, vector<800x128xf32> -> vector<800x128xf32>
    %3 = vector.extract_strided_slice %2 {offsets = [0, 0], sizes = [200, 128], strides = [1, 1]} : vector<800x128xf32> to vector<200x128xf32>
    %4 = vector.extract_strided_slice %2 {offsets = [200, 0], sizes = [200, 128], strides = [1, 1]} : vector<800x128xf32> to vector<200x128xf32>
    %5 = arith.maximumf %3, %4 : vector<200x128xf32>
    %6 = vector.extract_strided_slice %2 {offsets = [400, 0], sizes = [200, 128], strides = [1, 1]} : vector<800x128xf32> to vector<200x128xf32>
    %7 = vector.extract_strided_slice %2 {offsets = [600, 0], sizes = [200, 128], strides = [1, 1]} : vector<800x128xf32> to vector<200x128xf32>
    %8 = arith.maximumf %6, %7 : vector<200x128xf32>
    %9 = arith.maximumf %5, %8 : vector<200x128xf32>
    %c0_3 = arith.constant 0 : index
    %c0_4 = arith.constant 0 : index
    %10 = vector.load %arg2[%c0_3, %c0_4] : memref<1x128xf32, #tpu.memory_space<vmem>>, vector<1x128xf32>
    %11 = vector.broadcast %10 : vector<1x128xf32> to vector<200x128xf32>
    %12 = arith.addf %9, %11 : vector<200x128xf32>
    %cst_5 = arith.constant 0.000000e+00 : f32
    %13 = vector.broadcast %cst_5 : f32 to vector<200x128xf32>
    %14 = arith.maximumf %12, %13 : vector<200x128xf32>
    %15 = vector.shape_cast %14 : vector<200x128xf32> to vector<25x8x128xf32>
    %16 = arith.truncf %15 : vector<25x8x128xf32> to vector<25x8x128xbf16>
    %c0_6 = arith.constant 0 : index
    %c0_7 = arith.constant 0 : index
    %c0_8 = arith.constant 0 : index
    %17 = vector.load %arg3[%c0_6, %c0_7, %c0_8] : memref<25x128x128xbf16, #tpu.memory_space<vmem>>, vector<25x128x128xbf16>
    "tpu.trace_start"() <{level = 10 : i32, message = "pbc,pcn->pbn"}> : () -> ()
    %cst_9 = arith.constant dense<0.000000e+00> : vector<25x8x128xf32>
    %18 = tpu.matmul %16, %17, %cst_9 {dimension_numbers = #tpu.dot_dimension_numbers<[2], [1], [1], [2], [0, 0, 0, 1, 1, 2], [0], [0]>} : vector<25x8x128xbf16>, vector<25x128x128xbf16>, vector<25x8x128xf32> -> vector<25x8x128xf32>
    "tpu.trace_stop"() : () -> ()
    %cst_10 = arith.constant dense<0.000000e+00> : vector<8x128xf32>
    %19 = vector.multi_reduction <add>, %18, %cst_10 [0] : vector<25x8x128xf32> to vector<8x128xf32>
    %c0_11 = arith.constant 0 : index
    %c0_12 = arith.constant 0 : index
    %20 = vector.load %arg4[%c0_11, %c0_12] : memref<1x128xf32, #tpu.memory_space<vmem>>, vector<1x128xf32>
    %21 = vector.broadcast %20 : vector<1x128xf32> to vector<8x128xf32>
    %22 = arith.addf %19, %21 : vector<8x128xf32>
    %cst_13 = arith.constant 0.000000e+00 : f32
    %23 = vector.broadcast %cst_13 : f32 to vector<8x128xf32>
    %24 = arith.maximumf %22, %23 : vector<8x128xf32>
    %25 = arith.truncf %24 : vector<8x128xf32> to vector<8x128xbf16>
    %c0_14 = arith.constant 0 : index
    %c0_15 = arith.constant 0 : index
    %26 = vector.load %arg5[%c0_14, %c0_15] : memref<128x128xbf16, #tpu.memory_space<vmem>>, vector<128x128xbf16>
    %cst_16 = arith.constant dense<0.000000e+00> : vector<8x128xf32>
    %27 = tpu.matmul %25, %26, %cst_16 {dimension_numbers = #tpu.dot_dimension_numbers<[1], [0], [0], [1], [0, 0, 1, 1], [], []>} : vector<8x128xbf16>, vector<128x128xbf16>, vector<8x128xf32> -> vector<8x128xf32>
    %c0_17 = arith.constant 0 : index
    %c0_18 = arith.constant 0 : index
    %28 = vector.load %arg6[%c0_17, %c0_18] : memref<1x128xf32, #tpu.memory_space<vmem>>, vector<1x128xf32>
    %29 = vector.broadcast %28 : vector<1x128xf32> to vector<8x128xf32>
    %30 = arith.addf %27, %29 : vector<8x128xf32>
    %cst_19 = arith.constant 0.000000e+00 : f32
    %31 = vector.broadcast %cst_19 : f32 to vector<8x128xf32>
    %32 = arith.maximumf %30, %31 : vector<8x128xf32>
    %33 = arith.truncf %32 : vector<8x128xf32> to vector<8x128xbf16>
    %c0_20 = arith.constant 0 : index
    %c0_21 = arith.constant 0 : index
    %34 = vector.load %arg7[%c0_20, %c0_21] : memref<128x128xbf16, #tpu.memory_space<vmem>>, vector<128x128xbf16>
    %cst_22 = arith.constant dense<0.000000e+00> : vector<8x128xf32>
    %35 = tpu.matmul %33, %34, %cst_22 {dimension_numbers = #tpu.dot_dimension_numbers<[1], [0], [0], [1], [0, 0, 1, 1], [], []>} : vector<8x128xbf16>, vector<128x128xbf16>, vector<8x128xf32> -> vector<8x128xf32>
    %c0_23 = arith.constant 0 : index
    %c0_24 = arith.constant 0 : index
    %36 = vector.load %arg8[%c0_23, %c0_24] : memref<1x128xf32, #tpu.memory_space<vmem>>, vector<1x128xf32>
    %37 = vector.broadcast %36 : vector<1x128xf32> to vector<8x128xf32>
    %38 = arith.addf %35, %37 : vector<8x128xf32>
    %c0_25 = arith.constant 0 : index
    %c0_26 = arith.constant 0 : index
    %39 = vector.load %arg9[%c0_25, %c0_26] : memref<8x128xf32, #tpu.memory_space<vmem>>, vector<8x128xf32>
    tpu.vector_store %arg9[%c0_25, %c0_26], %38 {strides = array<i32>} : memref<8x128xf32, #tpu.memory_space<vmem>>, vector<8x128xf32>,
    return
  }
}

</mosaic_0001>

<llo_original>
// kernel: _lambda_.2
$region0: #{_lambda_.2}
  #allocation0 [shape = 'u32[]', space=smem, size = 0x4, offset = 0x4, fixed_abs, tag = 'smem constant byte address 0x4 - core index']
  #allocation1 [shape = 'u32[144,128]{1,0:T(1,128)}', space=vmem, size = 0x12000, scoped, tag = 'internal scratch']
  %s0 = inlined_call_operand.vmem [shape: bf16[1568,128], index: 0, kind: input, shape index: {}]
  %s1 = inlined_call_operand.vmem [shape: bf16[128,128], index: 1, kind: input, shape index: {}]
  %s2 = inlined_call_operand.vmem [shape: f32[1,128], index: 2, kind: input, shape index: {}]
  %s3 = inlined_call_operand.vmem [shape: bf16[392,128], index: 3, kind: output, shape index: {}]
  %s4 = sld [smem:[#allocation0]]
  $region22: #{_lambda_.2} parent=0
    _
  %s6 = ssub.s32 1, %s4
  %s7 = scalar_select 0, %s6, %s4
  // Predicated region
  $region2: #{_lambda_.2} parent=0 // pred_check
    _
  $region3: #{_lambda_.2} parent=0 // pred_check_branch
    %9 = sbr.rel (0) target = $region5
  $region4: #{_lambda_.2} parent=0 // pred_region
    _
  $region5: #{_lambda_.2} parent=0 // pred_fallthru
    _
  // Predicated region
  $region6: #{_lambda_.2} parent=0 // pred_check
    _
  $region7: #{_lambda_.2} parent=0 // pred_check_branch
    %11 = sbr.rel (0) target = $region9
  $region8: #{_lambda_.2} parent=0 // pred_region
    _
  $region9: #{_lambda_.2} parent=0 // pred_fallthru
    _
  // Predicated region
  $region10: #{_lambda_.2} parent=0 // pred_check
    _
  $region11: #{_lambda_.2} parent=0 // pred_check_branch
    %13 = sbr.rel (0) target = $region13
  $region12: #{_lambda_.2} parent=0 // pred_region
    _
  $region13: #{_lambda_.2} parent=0 // pred_fallthru
    _
  %v15 = vld [vmem:[%s0] sm:$0xf]
  %v16 = vld [vmem:[%s0 + $0x4] sm:$0xf]
  %v17 = vld [vmem:[%s0 + $0x8] sm:$0xf]
  %v18 = vld [vmem:[%s0 + $0xc] sm:$0xf]
  %v19 = vld [vmem:[%s0 + $0x10] sm:$0xf]
  %v20 = vld [vmem:[%s0 + $0x14] sm:$0xf]
  %v21 = vld [vmem:[%s0 + $0x18] sm:$0xf]
  %v22 = vld [vmem:[%s0 + $0x1c] sm:$0xf]
  %v23 = vld [vmem:[%s0 + $0x20] sm:$0xf]
  %v24 = vld [vmem:[%s0 + $0x24] sm:$0xf]
  %v25 = vld [vmem:[%s0 + $0x28] sm:$0xf]
  %v26 = vld [vmem:[%s0 + $0x2c] sm:$0xf]
  %v27 = vld [vmem:[%s0 + $0x30] sm:$0xf]
  %v28 = vld [vmem:[%s0 + $0x34] sm:$0xf]
  %v29 = vld [vmem:[%s0 + $0x38] sm:$0xf]
  %v30 = vld [vmem:[%s0 + $0x3c] sm:$0xf]
  %v31 = vld [vmem:[%s0 + $0x40] sm:$0xf]
  %v32 = vld [vmem:[%s0 + $0x44] sm:$0xf]
  %v33 = vld [vmem:[%s0 + $0x48] sm:$0xf]
  %v34 = vld [vmem:[%s0 + $0x4c] sm:$0xf]
  %v35 = vld [vmem:[%s0 + $0x50] sm:$0xf]
  %v36 = vld [vmem:[%s0 + $0x54] sm:$0xf]
  %v37 = vld [vmem:[%s0 + $0x58] sm:$0xf]
  %v38 = vld [vmem:[%s0 + $0x5c] sm:$0xf]
  %v39 = vld [vmem:[%s0 + $0x60] sm:$0xf]
  %v40 = vld [vmem:[%s0 + $0x64] sm:$0xf]
  %v41 = vld [vmem:[%s0 + $0x68] sm:$0xf]
  %v42 = vld [vmem:[%s0 + $0x6c] sm:$0xf]
  %v43 = vld [vmem:[%s0 + $0x70] sm:$0xf]
  %v44 = vld [vmem:[%s0 + $0x74] sm:$0xf]
  %v45 = vld [vmem:[%s0 + $0x78] sm:$0xf]
  %v46 = vld [vmem:[%s0 + $0x7c] sm:$0xf]
  %v47 = vld [vmem:[%s0 + $0x80] sm:$0xf]
  %v48 = vld [vmem:[%s0 + $0x84] sm:$0xf]
  %v49 = vld [vmem:[%s0 + $0x88] sm:$0xf]
  %v50 = vld [vmem:[%s0 + $0x8c] sm:$0xf]
  %v51 = vld [vmem:[%s0 + $0x90] sm:$0xf]
  %v52 = vld [vmem:[%s0 + $0x94] sm:$0xf]
  %v53 = vld [vmem:[%s0 + $0x98] sm:$0xf]
  %v54 = vld [vmem:[%s0 + $0x9c] sm:$0xf]
  %v55 = vld [vmem:[%s0 + $0xa0] sm:$0xf]
  %v56 = vld [vmem:[%s0 + $0xa4] sm:$0xf]
  %v57 = vld [vmem:[%s0 + $0xa8] sm:$0xf]
  %v58 = vld [vmem:[%s0 + $0xac] sm:$0xf]
  %v59 = vld [vmem:[%s0 + $0xb0] sm:$0xf]
  %v60 = vld [vmem:[%s0 + $0xb4] sm:$0xf]
  %v61 = vld [vmem:[%s0 + $0xb8] sm:$0xf]
  %v62 = vld [vmem:[%s0 + $0xbc] sm:$0xf]
  %v63 = vld [vmem:[%s0 + $0xc0] sm:$0xf]
  %v64 = vld [vmem:[%s0 + $0xc4] sm:$0xf]
  %v65 = vld [vmem:[%s0 + $0xc8] sm:$0xf]
  %v66 = vld [vmem:[%s0 + $0xcc] sm:$0xf]
  %v67 = vld [vmem:[%s0 + $0xd0] sm:$0xf]
  %v68 = vld [vmem:[%s0 + $0xd4] sm:$0xf]
  %v69 = vld [vmem:[%s0 + $0xd8] sm:$0xf]
  %v70 = vld [vmem:[%s0 + $0xdc] sm:$0xf]
  %v71 = vld [vmem:[%s0 + $0xe0] sm:$0xf]
  %v72 = vld [vmem:[%s0 + $0xe4] sm:$0xf]
  %v73 = vld [vmem:[%s0 + $0xe8] sm:$0xf]
  %v74 = vld [vmem:[%s0 + $0xec] sm:$0xf]
  %v75 = vld [vmem:[%s0 + $0xf0] sm:$0xf]
  %v76 = vld [vmem:[%s0 + $0xf4] sm:$0xf]
  %v77 = vld [vmem:[%s0 + $0xf8] sm:$0xf]
  %v78 = vld [vmem:[%s0 + $0xfc] sm:$0xf]
  %v79 = vld [vmem:[%s0 + $0x100] sm:$0xf]
  %v80 = vld [vmem:[%s0 + $0x104] sm:$0xf]
  %v81 = vld [vmem:[%s0 + $0x108] sm:$0xf]
  %v82 = vld [vmem:[%s0 + $0x10c] sm:$0xf]
  %v83 = vld [vmem:[%s0 + $0x110] sm:$0xf]
  %v84 = vld [vmem:[%s0 + $0x114] sm:$0xf]
  %v85 = vld [vmem:[%s0 + $0x118] sm:$0xf]
  %v86 = vld [vmem:[%s0 + $0x11c] sm:$0xf]
  %v87 = vld [vmem:[%s0 + $0x120] sm:$0xf]
  %v88 = vld [vmem:[%s0 + $0x124] sm:$0xf]
  %v89 = vld [vmem:[%s0 + $0x128] sm:$0xf]
  %v90 = vld [vmem:[%s0 + $0x12c] sm:$0xf]
  %v91 = vld [vmem:[%s0 + $0x130] sm:$0xf]
  %v92 = vld [vmem:[%s0 + $0x134] sm:$0xf]
  %v93 = vld [vmem:[%s0 + $0x138] sm:$0xf]
  %v94 = vld [vmem:[%s0 + $0x13c] sm:$0xf]
  %v95 = vld [vmem:[%s0 + $0x140] sm:$0xf]
  %v96 = vld [vmem:[%s0 + $0x144] sm:$0xf]
  %v97 = vld [vmem:[%s0 + $0x148] sm:$0xf]
  %v98 = vld [vmem:[%s0 + $0x14c] sm:$0xf]
  %v99 = vld [vmem:[%s0 + $0x150] sm:$0xf]
  %v100 = vld [vmem:[%s0 + $0x154] sm:$0xf]
  %v101 = vld [vmem:[%s0 + $0x158] sm:$0xf]
  %v102 = vld [vmem:[%s0 + $0x15c] sm:$0xf]
  %v103 = vld [vmem:[%s0 + $0x160] sm:$0xf]
  %v104 = vld [vmem:[%s0 + $0x164] sm:$0xf]
  %v105 = vld [vmem:[%s0 + $0x168] sm:$0xf]
  %v106 = vld [vmem:[%s0 + $0x16c] sm:$0xf]
  %v107 = vld [vmem:[%s0 + $0x170] sm:$0xf]
  %v108 = vld [vmem:[%s0 + $0x174] sm:$0xf]
  %v109 = vld [vmem:[%s0 + $0x178] sm:$0xf]
  %v110 = vld [vmem:[%s0 + $0x17c] sm:$0xf]
  %v111 = vld [vmem:[%s0 + $0x180] sm:$0xf]
  %v112 = vld [vmem:[%s0 + $0x184] sm:$0xf]
  %v113 = vld [vmem:[%s0 + $0x188] sm:$0xf]
  %v114 = vld [vmem:[%s0 + $0x18c] sm:$0xf]
  %v115 = vld [vmem:[%s0 + $0x190] sm:$0xf]
  %v116 = vld [vmem:[%s0 + $0x194] sm:$0xf]
  %v117 = vld [vmem:[%s0 + $0x198] sm:$0xf]
  %v118 = vld [vmem:[%s0 + $0x19c] sm:$0xf]
  %v119 = vld [vmem:[%s0 + $0x1a0] sm:$0xf]
  %v120 = vld [vmem:[%s0 + $0x1a4] sm:$0xf]
  %v121 = vld [vmem:[%s0 + $0x1a8] sm:$0xf]
  %v122 = vld [vmem:[%s0 + $0x1ac] sm:$0xf]
  %v123 = vld [vmem:[%s0 + $0x1b0] sm:$0xf]
  %v124 = vld [vmem:[%s0 + $0x1b4] sm:$0xf]
  %v125 = vld [vmem:[%s0 + $0x1b8] sm:$0xf]
  %v126 = vld [vmem:[%s0 + $0x1bc] sm:$0xf]
  %v127 = vld [vmem:[%s0 + $0x1c0] sm:$0xf]
  %v128 = vld [vmem:[%s0 + $0x1c4] sm:$0xf]
  %v129 = vld [vmem:[%s0 + $0x1c8] sm:$0xf]
  %v130 = vld [vmem:[%s0 + $0x1cc] sm:$0xf]
  %v131 = vld [vmem:[%s0 + $0x1d0] sm:$0xf]
  %v132 = vld [vmem:[%s0 + $0x1d4] sm:$0xf]
  %v133 = vld [vmem:[%s0 + $0x1d8] sm:$0xf]
  %v134 = vld [vmem:[%s0 + $0x1dc] sm:$0xf]
  %v135 = vld [vmem:[%s0 + $0x1e0] sm:$0xf]
  %v136 = vld [vmem:[%s0 + $0x1e4] sm:$0xf]
  %v137 = vld [vmem:[%s0 + $0x1e8] sm:$0xf]
  %v138 = vld [vmem:[%s0 + $0x1ec] sm:$0xf]
  %v139 = vld [vmem:[%s0 + $0x1f0] sm:$0xf]
  %v140 = vld [vmem:[%s0 + $0x1f4] sm:$0xf]
  %v141 = vld [vmem:[%s0 + $0x1f8] sm:$0xf]
  %v142 = vld [vmem:[%s0 + $0x1fc] sm:$0xf]
  %v143 = vld [vmem:[%s0 + $0x200] sm:$0xf]
  %v144 = vld [vmem:[%s0 + $0x204] sm:$0xf]
  %v145 = vld [vmem:[%s0 + $0x208] sm:$0xf]
  %v146 = vld [vmem:[%s0 + $0x20c] sm:$0xf]
  %v147 = vld [vmem:[%s0 + $0x210] sm:$0xf]
  %v148 = vld [vmem:[%s0 + $0x214] sm:$0xf]
  %v149 = vld [vmem:[%s0 + $0x218] sm:$0xf]
  %v150 = vld [vmem:[%s0 + $0x21c] sm:$0xf]
  %v151 = vld [vmem:[%s0 + $0x220] sm:$0xf]
  %v152 = vld [vmem:[%s0 + $0x224] sm:$0xf]
  %v153 = vld [vmem:[%s0 + $0x228] sm:$0xf]
  %v154 = vld [vmem:[%s0 + $0x22c] sm:$0xf]
  %v155 = vld [vmem:[%s0 + $0x230] sm:$0xf]
  %v156 = vld [vmem:[%s0 + $0x234] sm:$0xf]
  %v157 = vld [vmem:[%s0 + $0x238] sm:$0xf]
  %v158 = vld [vmem:[%s0 + $0x23c] sm:$0xf]
  %v159 = vld [vmem:[%s0 + $0x240] sm:$0xf]
  %v160 = vld [vmem:[%s0 + $0x244] sm:$0xf]
  %v161 = vld [vmem:[%s0 + $0x248] sm:$0xf]
  %v162 = vld [vmem:[%s0 + $0x24c] sm:$0xf]
  %v163 = vld [vmem:[%s0 + $0x250] sm:$0xf]
  %v164 = vld [vmem:[%s0 + $0x254] sm:$0xf]
  %v165 = vld [vmem:[%s0 + $0x258] sm:$0xf]
  %v166 = vld [vmem:[%s0 + $0x25c] sm:$0xf]
  %v167 = vld [vmem:[%s0 + $0x260] sm:$0xf]
  %v168 = vld [vmem:[%s0 + $0x264] sm:$0xf]
  %v169 = vld [vmem:[%s0 + $0x268] sm:$0xf]
  %v170 = vld [vmem:[%s0 + $0x26c] sm:$0xf]
  %v171 = vld [vmem:[%s0 + $0x270] sm:$0xf]
  %v172 = vld [vmem:[%s0 + $0x274] sm:$0xf]
  %v173 = vld [vmem:[%s0 + $0x278] sm:$0xf]
  %v174 = vld [vmem:[%s0 + $0x27c] sm:$0xf]
  %v175 = vld [vmem:[%s0 + $0x280] sm:$0xf]
  %v176 = vld [vmem:[%s0 + $0x284] sm:$0xf]
  %v177 = vld [vmem:[%s0 + $0x288] sm:$0xf]
  %v178 = vld [vmem:[%s0 + $0x28c] sm:$0xf]
  %v179 = vld [vmem:[%s0 + $0x290] sm:$0xf]
  %v180 = vld [vmem:[%s0 + $0x294] sm:$0xf]
  %v181 = vld [vmem:[%s0 + $0x298] sm:$0xf]
  %v182 = vld [vmem:[%s0 + $0x29c] sm:$0xf]
  %v183 = vld [vmem:[%s0 + $0x2a0] sm:$0xf]
  %v184 = vld [vmem:[%s0 + $0x2a4] sm:$0xf]
  %v185 = vld [vmem:[%s0 + $0x2a8] sm:$0xf]
  %v186 = vld [vmem:[%s0 + $0x2ac] sm:$0xf]
  %v187 = vld [vmem:[%s0 + $0x2b0] sm:$0xf]
  %v188 = vld [vmem:[%s0 + $0x2b4] sm:$0xf]
  %v189 = vld [vmem:[%s0 + $0x2b8] sm:$0xf]
  %v190 = vld [vmem:[%s0 + $0x2bc] sm:$0xf]
  %v191 = vld [vmem:[%s0 + $0x2c0] sm:$0xf]
  %v192 = vld [vmem:[%s0 + $0x2c4] sm:$0xf]
  %v193 = vld [vmem:[%s0 + $0x2c8] sm:$0xf]
  %v194 = vld [vmem:[%s0 + $0x2cc] sm:$0xf]
  %v195 = vld [vmem:[%s0 + $0x2d0] sm:$0xf]
  %v196 = vld [vmem:[%s0 + $0x2d4] sm:$0xf]
  %v197 = vld [vmem:[%s0 + $0x2d8] sm:$0xf]
  %v198 = vld [vmem:[%s0 + $0x2dc] sm:$0xf]
  %v199 = vld [vmem:[%s0 + $0x2e0] sm:$0xf]
  %v200 = vld [vmem:[%s0 + $0x2e4] sm:$0xf]
  %v201 = vld [vmem:[%s0 + $0x2e8] sm:$0xf]
  %v202 = vld [vmem:[%s0 + $0x2ec] sm:$0xf]
  %v203 = vld [vmem:[%s0 + $0x2f0] sm:$0xf]
  %v204 = vld [vmem:[%s0 + $0x2f4] sm:$0xf]
  %v205 = vld [vmem:[%s0 + $0x2f8] sm:$0xf]
  %v206 = vld [vmem:[%s0 + $0x2fc] sm:$0xf]
  %v207 = vld [vmem:[%s0 + $0x300] sm:$0xf]
  %v208 = vld [vmem:[%s0 + $0x304] sm:$0xf]
  %v209 = vld [vmem:[%s0 + $0x308] sm:$0xf]
  %v210 = vld [vmem:[%s0 + $0x30c] sm:$0xf]
  %v211 = vld [vmem:[%s1] sm:$0xf]
  %v212 = vld [vmem:[%s1 + $0x4] sm:$0xf]
  %v213 = vld [vmem:[%s1 + $0x8] sm:$0xf]
  %v214 = vld [vmem:[%s1 + $0xc] sm:$0xf]
  %v215 = vld [vmem:[%s1 + $0x10] sm:$0xf]
  %v216 = vld [vmem:[%s1 + $0x14] sm:$0xf]
  %v217 = vld [vmem:[%s1 + $0x18] sm:$0xf]
  %v218 = vld [vmem:[%s1 + $0x1c] sm:$0xf]
  %v219 = vld [vmem:[%s1 + $0x20] sm:$0xf]
  %v220 = vld [vmem:[%s1 + $0x24] sm:$0xf]
  %v221 = vld [vmem:[%s1 + $0x28] sm:$0xf]
  %v222 = vld [vmem:[%s1 + $0x2c] sm:$0xf]
  %v223 = vld [vmem:[%s1 + $0x30] sm:$0xf]
  %v224 = vld [vmem:[%s1 + $0x34] sm:$0xf]
  %v225 = vld [vmem:[%s1 + $0x38] sm:$0xf]
  %v226 = vld [vmem:[%s1 + $0x3c] sm:$0xf]
  %v423 = vunpack.c.l.b16 %v15
  %v424 = vunpack.c.l.b16 %v16
  %v425 = vunpack.c.l.b16 %v17
  %v426 = vunpack.c.l.b16 %v18
  %v427 = vunpack.c.l.b16 %v19
  %v428 = vunpack.c.l.b16 %v20
  %v429 = vunpack.c.l.b16 %v21
  %v430 = vunpack.c.l.b16 %v22
  %v431 = vunpack.c.l.b16 %v23
  %v432 = vunpack.c.l.b16 %v24
  %v433 = vunpack.c.l.b16 %v25
  %v434 = vunpack.c.l.b16 %v26
  %v435 = vunpack.c.l.b16 %v27
  %v436 = vunpack.c.l.b16 %v28
  %v437 = vunpack.c.l.b16 %v29
  %v438 = vunpack.c.l.b16 %v30
  %v439 = vunpack.c.l.b16 %v31
  %v440 = vunpack.c.l.b16 %v32
  %v441 = vunpack.c.l.b16 %v33
  %v442 = vunpack.c.l.b16 %v34
  %v443 = vunpack.c.l.b16 %v35
  %v444 = vunpack.c.l.b16 %v36
  %v445 = vunpack.c.l.b16 %v37
  %v446 = vunpack.c.l.b16 %v38
  %v447 = vunpack.c.l.b16 %v39
  %v448 = vunpack.c.l.b16 %v40
  %v449 = vunpack.c.l.b16 %v41
  %v450 = vunpack.c.l.b16 %v42
  %v451 = vunpack.c.l.b16 %v43
  %v452 = vunpack.c.l.b16 %v44
  %v453 = vunpack.c.l.b16 %v45
  %v454 = vunpack.c.l.b16 %v46
  %v455 = vunpack.c.l.b16 %v47
  %v456 = vunpack.c.l.b16 %v48
  %v457 = vunpack.c.l.b16 %v49
  %v458 = vunpack.c.l.b16 %v50
  %v459 = vunpack.c.l.b16 %v51
  %v460 = vunpack.c.l.b16 %v52
  %v461 = vunpack.c.l.b16 %v53
  %v462 = vunpack.c.l.b16 %v54
  %v463 = vunpack.c.l.b16 %v55
  %v464 = vunpack.c.l.b16 %v56
  %v465 = vunpack.c.l.b16 %v57
  %v466 = vunpack.c.l.b16 %v58
  %v467 = vunpack.c.l.b16 %v59
  %v468 = vunpack.c.l.b16 %v60
  %v469 = vunpack.c.l.b16 %v61
  %v470 = vunpack.c.l.b16 %v62
  %v471 = vunpack.c.l.b16 %v63
  %v472 = vunpack.c.l.b16 %v64
  %v473 = vunpack.c.l.b16 %v65
  %v474 = vunpack.c.l.b16 %v66
  %v475 = vunpack.c.l.b16 %v67
  %v476 = vunpack.c.l.b16 %v68
  %v477 = vunpack.c.l.b16 %v69
  %v478 = vunpack.c.l.b16 %v70
  %v479 = vunpack.c.l.b16 %v71
  %v480 = vunpack.c.l.b16 %v72
  %v481 = vunpack.c.l.b16 %v73
  %v482 = vunpack.c.l.b16 %v74
  %v483 = vunpack.c.l.b16 %v75
  %v484 = vunpack.c.l.b16 %v76
  %v485 = vunpack.c.l.b16 %v77
  %v486 = vunpack.c.l.b16 %v78
  %v487 = vunpack.c.l.b16 %v79
  %v488 = vunpack.c.l.b16 %v80
  %v489 = vunpack.c.l.b16 %v81
  %v490 = vunpack.c.l.b16 %v82
  %v491 = vunpack.c.l.b16 %v83
  %v492 = vunpack.c.l.b16 %v84
  %v493 = vunpack.c.l.b16 %v85
  %v494 = vunpack.c.l.b16 %v86
  %v495 = vunpack.c.l.b16 %v87
  %v496 = vunpack.c.l.b16 %v88
  %v497 = vunpack.c.l.b16 %v89
  %v498 = vunpack.c.l.b16 %v90
  %v499 = vunpack.c.l.b16 %v91
  %v500 = vunpack.c.l.b16 %v92
  %v501 = vunpack.c.l.b16 %v93
  %v502 = vunpack.c.l.b16 %v94
  %v503 = vunpack.c.l.b16 %v95
  %v504 = vunpack.c.l.b16 %v96
  %v505 = vunpack.c.l.b16 %v97
  %v506 = vunpack.c.l.b16 %v98
  %v507 = vunpack.c.l.b16 %v99
  %v508 = vunpack.c.l.b16 %v100
  %v509 = vunpack.c.l.b16 %v101
  %v510 = vunpack.c.l.b16 %v102
  %v511 = vunpack.c.l.b16 %v103
  %v512 = vunpack.c.l.b16 %v104
  %v513 = vunpack.c.l.b16 %v105
  %v514 = vunpack.c.l.b16 %v106
  %v515 = vunpack.c.l.b16 %v107
  %v516 = vunpack.c.l.b16 %v108
  %v517 = vunpack.c.l.b16 %v109
  %v518 = vunpack.c.l.b16 %v110
  %v519 = vunpack.c.l.b16 %v111
  %v520 = vunpack.c.l.b16 %v112
  %v521 = vunpack.c.l.b16 %v113
  %v522 = vunpack.c.l.b16 %v114
  %v523 = vunpack.c.l.b16 %v115
  %v524 = vunpack.c.l.b16 %v116
  %v525 = vunpack.c.l.b16 %v117
  %v526 = vunpack.c.l.b16 %v118
  %v527 = vunpack.c.l.b16 %v119
  %v528 = vunpack.c.l.b16 %v120
  %v529 = vunpack.c.l.b16 %v121
  %v530 = vunpack.c.l.b16 %v122
  %v531 = vunpack.c.l.b16 %v123
  %v532 = vunpack.c.l.b16 %v124
  %v533 = vunpack.c.l.b16 %v125
  %v534 = vunpack.c.l.b16 %v126
  %v535 = vunpack.c.l.b16 %v127
  %v536 = vunpack.c.l.b16 %v128
  %v537 = vunpack.c.l.b16 %v129
  %v538 = vunpack.c.l.b16 %v130
  %v539 = vunpack.c.l.b16 %v131
  %v540 = vunpack.c.l.b16 %v132
  %v541 = vunpack.c.l.b16 %v133
  %v542 = vunpack.c.l.b16 %v134
  %v543 = vunpack.c.l.b16 %v135
  %v544 = vunpack.c.l.b16 %v136
  %v545 = vunpack.c.l.b16 %v137
  %v546 = vunpack.c.l.b16 %v138
  %v547 = vunpack.c.l.b16 %v139
  %v548 = vunpack.c.l.b16 %v140
  %v549 = vunpack.c.l.b16 %v141
  %v550 = vunpack.c.l.b16 %v142
  %v551 = vunpack.c.l.b16 %v143
  %v552 = vunpack.c.l.b16 %v144
  %v553 = vunpack.c.l.b16 %v145
  %v554 = vunpack.c.l.b16 %v146
  %v555 = vunpack.c.l.b16 %v147
  %v556 = vunpack.c.l.b16 %v148
  %v557 = vunpack.c.l.b16 %v149
  %v558 = vunpack.c.l.b16 %v150
  %v559 = vunpack.c.l.b16 %v151
  %v560 = vunpack.c.l.b16 %v152
  %v561 = vunpack.c.l.b16 %v153
  %v562 = vunpack.c.l.b16 %v154
  %v563 = vunpack.c.l.b16 %v155
  %v564 = vunpack.c.l.b16 %v156
  %v565 = vunpack.c.l.b16 %v157
  %v566 = vunpack.c.l.b16 %v158
  %v567 = vunpack.c.l.b16 %v159
  %v568 = vunpack.c.l.b16 %v160
  %v569 = vunpack.c.l.b16 %v161
  %v570 = vunpack.c.l.b16 %v162
  %v571 = vunpack.c.l.b16 %v163
  %v572 = vunpack.c.l.b16 %v164
  %v573 = vunpack.c.l.b16 %v165
  %v574 = vunpack.c.l.b16 %v166
  %v575 = vunpack.c.l.b16 %v167
  %v576 = vunpack.c.l.b16 %v168
  %v577 = vunpack.c.l.b16 %v169
  %v578 = vunpack.c.l.b16 %v170
  %v579 = vunpack.c.l.b16 %v171
  %v580 = vunpack.c.l.b16 %v172
  %v581 = vunpack.c.l.b16 %v173
  %v582 = vunpack.c.l.b16 %v174
  %v583 = vunpack.c.l.b16 %v175
  %v584 = vunpack.c.l.b16 %v176
  %v585 = vunpack.c.l.b16 %v177
  %v586 = vunpack.c.l.b16 %v178
  %v587 = vunpack.c.l.b16 %v179
  %v588 = vunpack.c.l.b16 %v180
  %v589 = vunpack.c.l.b16 %v181
  %v590 = vunpack.c.l.b16 %v182
  %v591 = vunpack.c.l.b16 %v183
  %v592 = vunpack.c.l.b16 %v184
  %v593 = vunpack.c.l.b16 %v185
  %v594 = vunpack.c.l.b16 %v186
  %v595 = vunpack.c.l.b16 %v187
  %v596 = vunpack.c.l.b16 %v188
  %v597 = vunpack.c.l.b16 %v189
  %v598 = vunpack.c.l.b16 %v190
  %v599 = vunpack.c.l.b16 %v191
  %v600 = vunpack.c.l.b16 %v192
  %v601 = vunpack.c.l.b16 %v193
  %v602 = vunpack.c.l.b16 %v194
  %v603 = vunpack.c.l.b16 %v195
  %v604 = vunpack.c.l.b16 %v196
  %v605 = vunpack.c.l.b16 %v197
  %v606 = vunpack.c.l.b16 %v198
  %v607 = vunpack.c.l.b16 %v199
  %v608 = vunpack.c.l.b16 %v200
  %v609 = vunpack.c.l.b16 %v201
  %v610 = vunpack.c.l.b16 %v202
  %v611 = vunpack.c.l.b16 %v203
  %v612 = vunpack.c.l.b16 %v204
  %v613 = vunpack.c.l.b16 %v205
  %v614 = vunpack.c.l.b16 %v206
  %v615 = vunpack.c.l.b16 %v207
  %v616 = vunpack.c.l.b16 %v208
  %v617 = vunpack.c.l.b16 %v209
  %v618 = vunpack.c.l.b16 %v210
  %v619 = vpack.c.b16 %v424, %v423
  %v620 = vpack.c.b16 %v426, %v425
  %v621 = vpack.c.b16 %v428, %v427
  %v622 = vpack.c.b16 %v430, %v429
  %v623 = vpack.c.b16 %v432, %v431
  %v624 = vpack.c.b16 %v434, %v433
  %v625 = vpack.c.b16 %v436, %v435
  %v626 = vpack.c.b16 %v438, %v437
  %v627 = vpack.c.b16 %v440, %v439
  %v628 = vpack.c.b16 %v442, %v441
  %v629 = vpack.c.b16 %v444, %v443
  %v630 = vpack.c.b16 %v446, %v445
  %v631 = vpack.c.b16 %v448, %v447
  %v632 = vpack.c.b16 %v450, %v449
  %v633 = vpack.c.b16 %v452, %v451
  %v634 = vpack.c.b16 %v454, %v453
  %v635 = vpack.c.b16 %v456, %v455
  %v636 = vpack.c.b16 %v458, %v457
  %v637 = vpack.c.b16 %v460, %v459
  %v638 = vpack.c.b16 %v462, %v461
  %v639 = vpack.c.b16 %v464, %v463
  %v640 = vpack.c.b16 %v466, %v465
  %v641 = vpack.c.b16 %v468, %v467
  %v642 = vpack.c.b16 %v470, %v469
  %v643 = vpack.c.b16 %v472, %v471
  %v644 = vpack.c.b16 %v474, %v473
  %v645 = vpack.c.b16 %v476, %v475
  %v646 = vpack.c.b16 %v478, %v477
  %v647 = vpack.c.b16 %v480, %v479
  %v648 = vpack.c.b16 %v482, %v481
  %v649 = vpack.c.b16 %v484, %v483
  %v650 = vpack.c.b16 %v486, %v485
  %v651 = vpack.c.b16 %v488, %v487
  %v652 = vpack.c.b16 %v490, %v489
  %v653 = vpack.c.b16 %v492, %v491
  %v654 = vpack.c.b16 %v494, %v493
  %v655 = vpack.c.b16 %v496, %v495
  %v656 = vpack.c.b16 %v498, %v497
  %v657 = vpack.c.b16 %v500, %v499
  %v658 = vpack.c.b16 %v502, %v501
  %v659 = vpack.c.b16 %v504, %v503
  %v660 = vpack.c.b16 %v506, %v505
  %v661 = vpack.c.b16 %v508, %v507
  %v662 = vpack.c.b16 %v510, %v509
  %v663 = vpack.c.b16 %v512, %v511
  %v664 = vpack.c.b16 %v514, %v513
  %v665 = vpack.c.b16 %v516, %v515
  %v666 = vpack.c.b16 %v518, %v517
  %v667 = vpack.c.b16 %v520, %v519
  %v668 = vpack.c.b16 %v522, %v521
  %v669 = vpack.c.b16 %v524, %v523
  %v670 = vpack.c.b16 %v526, %v525
  %v671 = vpack.c.b16 %v528, %v527
  %v672 = vpack.c.b16 %v530, %v529
  %v673 = vpack.c.b16 %v532, %v531
  %v674 = vpack.c.b16 %v534, %v533
  %v675 = vpack.c.b16 %v536, %v535
  %v676 = vpack.c.b16 %v538, %v537
  %v677 = vpack.c.b16 %v540, %v539
  %v678 = vpack.c.b16 %v542, %v541
  %v679 = vpack.c.b16 %v544, %v543
  %v680 = vpack.c.b16 %v546, %v545
  %v681 = vpack.c.b16 %v548, %v547
  %v682 = vpack.c.b16 %v550, %v549
  %v683 = vpack.c.b16 %v552, %v551
  %v684 = vpack.c.b16 %v554, %v553
  %v685 = vpack.c.b16 %v556, %v555
  %v686 = vpack.c.b16 %v558, %v557
  %v687 = vpack.c.b16 %v560, %v559
  %v688 = vpack.c.b16 %v562, %v561
  %v689 = vpack.c.b16 %v564, %v563
  %v690 = vpack.c.b16 %v566, %v565
  %v691 = vpack.c.b16 %v568, %v567
  %v692 = vpack.c.b16 %v570, %v569
  %v693 = vpack.c.b16 %v572, %v571
  %v694 = vpack.c.b16 %v574, %v573
  %v695 = vpack.c.b16 %v576, %v575
  %v696 = vpack.c.b16 %v578, %v577
  %v697 = vpack.c.b16 %v580, %v579
  %v698 = vpack.c.b16 %v582, %v581
  %v699 = vpack.c.b16 %v584, %v583
  %v700 = vpack.c.b16 %v586, %v585
  %v701 = vpack.c.b16 %v588, %v587
  %v702 = vpack.c.b16 %v590, %v589
  %v703 = vpack.c.b16 %v592, %v591
  %v704 = vpack.c.b16 %v594, %v593
  %v705 = vpack.c.b16 %v596, %v595
  %v706 = vpack.c.b16 %v598, %v597
  %v707 = vpack.c.b16 %v600, %v599
  %v708 = vpack.c.b16 %v602, %v601
  %v709 = vpack.c.b16 %v604, %v603
  %v710 = vpack.c.b16 %v606, %v605
  %v711 = vpack.c.b16 %v608, %v607
  %v712 = vpack.c.b16 %v610, %v609
  %v713 = vpack.c.b16 %v612, %v611
  %v714 = vpack.c.b16 %v614, %v613
  %v715 = vpack.c.b16 %v616, %v615
  %v716 = vpack.c.b16 %v618, %v617
  %v831 = vunpack.c.l.b16 %v211
  %v832 = vunpack.c.l.b16 %v212
  %v833 = vunpack.c.l.b16 %v213
  %v834 = vunpack.c.l.b16 %v214
  %v835 = vunpack.c.l.b16 %v215
  %v836 = vunpack.c.l.b16 %v216
  %v837 = vunpack.c.l.b16 %v217
  %v838 = vunpack.c.l.b16 %v218
  %v839 = vunpack.c.l.b16 %v219
  %v840 = vunpack.c.l.b16 %v220
  %v841 = vunpack.c.l.b16 %v221
  %v842 = vunpack.c.l.b16 %v222
  %v843 = vunpack.c.l.b16 %v223
  %v844 = vunpack.c.l.b16 %v224
  %v845 = vunpack.c.l.b16 %v225
  %v846 = vunpack.c.l.b16 %v226
  %v847 = vpack.c.b16 %v832, %v831
  %v848 = vpack.c.b16 %v834, %v833
  %v849 = vpack.c.b16 %v836, %v835
  %v850 = vpack.c.b16 %v838, %v837
  %v851 = vpack.c.b16 %v840, %v839
  %v852 = vpack.c.b16 %v842, %v841
  %v853 = vpack.c.b16 %v844, %v843
  %v854 = vpack.c.b16 %v846, %v845
  %863 = vmatprep.subr.bf16.mxu0 0
  %864 = vmatpush1.bf16.msra.mxu0 %v847
  %865 = vmatprep.subr.bf16.mxu0 0
  %866 = vmatpush1.bf16.msra.mxu0 %v848
  %867 = vmatprep.subr.bf16.mxu0 0
  %868 = vmatpush1.bf16.msra.mxu0 %v849
  %869 = vmatprep.subr.bf16.mxu0 0
  %870 = vmatpush1.bf16.msra.mxu0 %v850
  %871 = vmatprep.subr.bf16.mxu0 0
  %872 = vmatpush1.bf16.msra.mxu0 %v851
  %873 = vmatprep.subr.bf16.mxu0 0
  %874 = vmatpush1.bf16.msra.mxu0 %v852
  %875 = vmatprep.subr.bf16.mxu0 0
  %876 = vmatpush1.bf16.msra.mxu0 %v853
  %877 = vmatprep.subr.bf16.mxu0 0
  %878 = vmatpush1.bf16.msra.mxu0 %v854
  %879 = vmatprep.subr.bf16.mxu0 0
  %880 = vmatpush1.bf16.msra.mxu0 0
  %881 = vmatprep.subr.bf16.mxu0 0
  %882 = vmatpush1.bf16.msra.mxu0 0
  %883 = vmatprep.subr.bf16.mxu0 0
  %884 = vmatpush1.bf16.msra.mxu0 0
  %885 = vmatprep.subr.bf16.mxu0 0
  %886 = vmatpush1.bf16.msra.mxu0 0
  %887 = vmatprep.subr.bf16.mxu0 0
  %888 = vmatpush1.bf16.msra.mxu0 0
  %889 = vmatprep.subr.bf16.mxu0 0
  %890 = vmatpush1.bf16.msra.mxu0 0
  %891 = vmatprep.subr.bf16.mxu0 0
  %892 = vmatpush1.bf16.msra.mxu0 0
  %893 = vmatprep.subr.bf16.mxu0 0
  %894 = vmatpush1.bf16.msra.mxu0 0
  %895 = vmatprep.mubr.bf16.mxu0 0
  %896 = vmatmul.mubr.bf16.gmra.mrb[0].mxu0 %v619
  %v897 = vpop.f32.mrb[0].mxu0
  %v898 = vadd.f32 0.0, %v897
  %v899 = vpop.f32.mrb[0].mxu0
  %v900 = vpop.f32.mrb[0].mxu0
  %v901 = vadd.f32 0.0, %v900
  %v902 = vpop.f32.mrb[0].mxu0
  %903 = vmatprep.mubr.bf16.mxu0 0
  %904 = vmatmul.mubr.bf16.gmra.mrb[0].mxu0 %v620
  %v905 = vpop.f32.mrb[0].mxu0
  %v906 = vadd.f32 0.0, %v905
  %v907 = vpop.f32.mrb[0].mxu0
  %v908 = vpop.f32.mrb[0].mxu0
  %v909 = vadd.f32 0.0, %v908
  %v910 = vpop.f32.mrb[0].mxu0
  %911 = vmatprep.mubr.bf16.mxu0 0
  %912 = vmatmul.mubr.bf16.gmra.mrb[0].mxu0 %v621
  %v913 = vpop.f32.mrb[0].mxu0
  %v914 = vadd.f32 0.0, %v913
  %v915 = vpop.f32.mrb[0].mxu0
  %v916 = vpop.f32.mrb[0].mxu0
  %v917 = vadd.f32 0.0, %v916
  %v918 = vpop.f32.mrb[0].mxu0
  %919 = vmatprep.mubr.bf16.mxu0 0
  %920 = vmatmul.mubr.bf16.gmra.mrb[0].mxu0 %v622
  %v921 = vpop.f32.mrb[0].mxu0
  %v922 = vadd.f32 0.0, %v921
  %v923 = vpop.f32.mrb[0].mxu0
  %v924 = vpop.f32.mrb[0].mxu0
  %v925 = vadd.f32 0.0, %v924
  %v926 = vpop.f32.mrb[0].mxu0
  %927 = vmatprep.mubr.bf16.mxu0 0
  %928 = vmatmul.mubr.bf16.gmra.mrb[0].mxu0 %v623
  %v929 = vpop.f32.mrb[0].mxu0
  %v930 = vadd.f32 0.0, %v929
  %v931 = vpop.f32.mrb[0].mxu0
  %v932 = vpop.f32.mrb[0].mxu0
  %v933 = vadd.f32 0.0, %v932
  %v934 = vpop.f32.mrb[0].mxu0
  %935 = vmatprep.mubr.bf16.mxu0 0
  %936 = vmatmul.mubr.bf16.gmra.mrb[0].mxu0 %v624
  %v937 = vpop.f32.mrb[0].mxu0
  %v938 = vadd.f32 0.0, %v937
  %v939 = vpop.f32.mrb[0].mxu0
  %v940 = vpop.f32.mrb[0].mxu0
  %v941 = vadd.f32 0.0, %v940
  %v942 = vpop.f32.mrb[0].mxu0
  %943 = vmatprep.mubr.bf16.mxu0 0
  %944 = vmatmul.mubr.bf16.gmra.mrb[0].mxu0 %v625
  %v945 = vpop.f32.mrb[0].mxu0
  %v946 = vadd.f32 0.0, %v945
  %v947 = vpop.f32.mrb[0].mxu0
  %v948 = vpop.f32.mrb[0].mxu0
  %v949 = vadd.f32 0.0, %v948
  %v950 = vpop.f32.mrb[0].mxu0
  %951 = vmatprep.mubr.bf16.mxu0 0
  %952 = vmatmul.mubr.bf16.gmra.mrb[0].mxu0 %v626
  %v953 = vpop.f32.mrb[0].mxu0
  %v954 = vadd.f32 0.0, %v953
  %v955 = vpop.f32.mrb[0].mxu0
  %v956 = vpop.f32.mrb[0].mxu0
  %v957 = vadd.f32 0.0, %v956
  %v958 = vpop.f32.mrb[0].mxu0
  %959 = vmatprep.mubr.bf16.mxu0 0
  %960 = vmatmul.mubr.bf16.gmra.mrb[0].mxu0 %v627
  %v961 = vpop.f32.mrb[0].mxu0
  %v962 = vadd.f32 0.0, %v961
  %v963 = vpop.f32.mrb[0].mxu0
  %v964 = vpop.f32.mrb[0].mxu0
  %v965 = vadd.f32 0.0, %v964
  %v966 = vpop.f32.mrb[0].mxu0
  %967 = vmatprep.mubr.bf16.mxu0 0
  %968 = vmatmul.mubr.bf16.gmra.mrb[0].mxu0 %v628
  %v969 = vpop.f32.mrb[0].mxu0
  %v970 = vadd.f32 0.0, %v969
  %v971 = vpop.f32.mrb[0].mxu0
  %v972 = vpop.f32.mrb[0].mxu0
  %v973 = vadd.f32 0.0, %v972
  %v974 = vpop.f32.mrb[0].mxu0
  %975 = vmatprep.mubr.bf16.mxu0 0
  %976 = vmatmul.mubr.bf16.gmra.mrb[0].mxu0 %v629
  %v977 = vpop.f32.mrb[0].mxu0
  %v978 = vadd.f32 0.0, %v977
  %v979 = vpop.f32.mrb[0].mxu0
  %v980 = vpop.f32.mrb[0].mxu0
  %v981 = vadd.f32 0.0, %v980
  %v982 = vpop.f32.mrb[0].mxu0
  %983 = vmatprep.mubr.bf16.mxu0 0
  %984 = vmatmul.mubr.bf16.gmra.mrb[0].mxu0 %v630
  %v985 = vpop.f32.mrb[0].mxu0
  %v986 = vadd.f32 0.0, %v985
  %v987 = vpop.f32.mrb[0].mxu0
  %v988 = vpop.f32.mrb[0].mxu0
  %v989 = vadd.f32 0.0, %v988
  %v990 = vpop.f32.mrb[0].mxu0
  %991 = vmatprep.mubr.bf16.mxu0 0
  %992 = vmatmul.mubr.bf16.gmra.mrb[0].mxu0 %v631
  %v993 = vpop.f32.mrb[0].mxu0
  %v994 = vadd.f32 0.0, %v993
  %v995 = vpop.f32.mrb[0].mxu0
  %v996 = vpop.f32.mrb[0].mxu0
  %v997 = vadd.f32 0.0, %v996
  %v998 = vpop.f32.mrb[0].mxu0
  %999 = vmatprep.mubr.bf16.mxu0 0
  %1000 = vmatmul.mubr.bf16.gmra.mrb[0].mxu0 %v632
  %v1001 = vpop.f32.mrb[0].mxu0
  %v1002 = vadd.f32 0.0, %v1001
  %v1003 = vpop.f32.mrb[0].mxu0
  %v1004 = vpop.f32.mrb[0].mxu0
  %v1005 = vadd.f32 0.0, %v1004
  %v1006 = vpop.f32.mrb[0].mxu0
  %1007 = vmatprep.mubr.bf16.mxu0 0
  %1008 = vmatmul.mubr.bf16.gmra.mrb[0].mxu0 %v633
  %v1009 = vpop.f32.mrb[0].mxu0
  %v1010 = vadd.f32 0.0, %v1009
  %v1011 = vpop.f32.mrb[0].mxu0
  %v1012 = vpop.f32.mrb[0].mxu0
  %v1013 = vadd.f32 0.0, %v1012
  %v1014 = vpop.f32.mrb[0].mxu0
  %1015 = vmatprep.mubr.bf16.mxu0 0
  %1016 = vmatmul.mubr.bf16.gmra.mrb[0].mxu0 %v634
  %v1017 = vpop.f32.mrb[0].mxu0
  %v1018 = vadd.f32 0.0, %v1017
  %v1019 = vpop.f32.mrb[0].mxu0
  %v1020 = vpop.f32.mrb[0].mxu0
  %v1021 = vadd.f32 0.0, %v1020
  %v1022 = vpop.f32.mrb[0].mxu0
  %1023 = vmatprep.mubr.bf16.mxu0 0
  %1024 = vmatmul.mubr.bf16.gmra.mrb[0].mxu0 %v635
  %v1025 = vpop.f32.mrb[0].mxu0
  %v1026 = vadd.f32 0.0, %v1025
  %v1027 = vpop.f32.mrb[0].mxu0
  %v1028 = vpop.f32.mrb[0].mxu0
  %v1029 = vadd.f32 0.0, %v1028
  %v1030 = vpop.f32.mrb[0].mxu0
  %1031 = vmatprep.mubr.bf16.mxu0 0
  %1032 = vmatmul.mubr.bf16.gmra.mrb[0].mxu0 %v636
  %v1033 = vpop.f32.mrb[0].mxu0
  %v1034 = vadd.f32 0.0, %v1033
  %v1035 = vpop.f32.mrb[0].mxu0
  %v1036 = vpop.f32.mrb[0].mxu0
  %v1037 = vadd.f32 0.0, %v1036
  %v1038 = vpop.f32.mrb[0].mxu0
  %1039 = vmatprep.mubr.bf16.mxu0 0
  %1040 = vmatmul.mubr.bf16.gmra.mrb[0].mxu0 %v637
  %v1041 = vpop.f32.mrb[0].mxu0
  %v1042 = vadd.f32 0.0, %v1041
  %v1043 = vpop.f32.mrb[0].mxu0
  %v1044 = vpop.f32.mrb[0].mxu0
  %v1045 = vadd.f32 0.0, %v1044
  %v1046 = vpop.f32.mrb[0].mxu0
  %1047 = vmatprep.mubr.bf16.mxu0 0
  %1048 = vmatmul.mubr.bf16.gmra.mrb[0].mxu0 %v638
  %v1049 = vpop.f32.mrb[0].mxu0
  %v1050 = vadd.f32 0.0, %v1049
  %v1051 = vpop.f32.mrb[0].mxu0
  %v1052 = vpop.f32.mrb[0].mxu0
  %v1053 = vadd.f32 0.0, %v1052
  %v1054 = vpop.f32.mrb[0].mxu0
  %1055 = vmatprep.mubr.bf16.mxu0 0
  %1056 = vmatmul.mubr.bf16.gmra.mrb[0].mxu0 %v639
  %v1057 = vpop.f32.mrb[0].mxu0
  %v1058 = vadd.f32 0.0, %v1057
  %v1059 = vpop.f32.mrb[0].mxu0
  %v1060 = vpop.f32.mrb[0].mxu0
  %v1061 = vadd.f32 0.0, %v1060
  %v1062 = vpop.f32.mrb[0].mxu0
  %1063 = vmatprep.mubr.bf16.mxu0 0
  %1064 = vmatmul.mubr.bf16.gmra.mrb[0].mxu0 %v640
  %v1065 = vpop.f32.mrb[0].mxu0
  %v1066 = vadd.f32 0.0, %v1065
  %v1067 = vpop.f32.mrb[0].mxu0
  %v1068 = vpop.f32.mrb[0].mxu0
  %v1069 = vadd.f32 0.0, %v1068
  %v1070 = vpop.f32.mrb[0].mxu0
  %1071 = vmatprep.mubr.bf16.mxu0 0
  %1072 = vmatmul.mubr.bf16.gmra.mrb[0].mxu0 %v641
  %v1073 = vpop.f32.mrb[0].mxu0
  %v1074 = vadd.f32 0.0, %v1073
  %v1075 = vpop.f32.mrb[0].mxu0
  %v1076 = vpop.f32.mrb[0].mxu0
  %v1077 = vadd.f32 0.0, %v1076
  %v1078 = vpop.f32.mrb[0].mxu0
  %1079 = vmatprep.mubr.bf16.mxu0 0
  %1080 = vmatmul.mubr.bf16.gmra.mrb[0].mxu0 %v642
  %v1081 = vpop.f32.mrb[0].mxu0
  %v1082 = vadd.f32 0.0, %v1081
  %v1083 = vpop.f32.mrb[0].mxu0
  %v1084 = vpop.f32.mrb[0].mxu0
  %v1085 = vadd.f32 0.0, %v1084
  %v1086 = vpop.f32.mrb[0].mxu0
  %1087 = vmatprep.mubr.bf16.mxu0 0
  %1088 = vmatmul.mubr.bf16.gmra.mrb[0].mxu0 %v643
  %v1089 = vpop.f32.mrb[0].mxu0
  %v1090 = vadd.f32 0.0, %v1089
  %v1091 = vpop.f32.mrb[0].mxu0
  %v1092 = vpop.f32.mrb[0].mxu0
  %v1093 = vadd.f32 0.0, %v1092
  %v1094 = vpop.f32.mrb[0].mxu0
  %1095 = vmatprep.mubr.bf16.mxu0 0
  %1096 = vmatmul.mubr.bf16.gmra.mrb[0].mxu0 %v644
  %v1097 = vpop.f32.mrb[0].mxu0
  %v1098 = vadd.f32 0.0, %v1097
  %v1099 = vpop.f32.mrb[0].mxu0
  %v1100 = vpop.f32.mrb[0].mxu0
  %v1101 = vadd.f32 0.0, %v1100
  %v1102 = vpop.f32.mrb[0].mxu0
  %1103 = vmatprep.mubr.bf16.mxu0 0
  %1104 = vmatmul.mubr.bf16.gmra.mrb[0].mxu0 %v645
  %v1105 = vpop.f32.mrb[0].mxu0
  %v1106 = vadd.f32 0.0, %v1105
  %v1107 = vpop.f32.mrb[0].mxu0
  %v1108 = vpop.f32.mrb[0].mxu0
  %v1109 = vadd.f32 0.0, %v1108
  %v1110 = vpop.f32.mrb[0].mxu0
  %1111 = vmatprep.mubr.bf16.mxu0 0
  %1112 = vmatmul.mubr.bf16.gmra.mrb[0].mxu0 %v646
  %v1113 = vpop.f32.mrb[0].mxu0
  %v1114 = vadd.f32 0.0, %v1113
  %v1115 = vpop.f32.mrb[0].mxu0
  %v1116 = vpop.f32.mrb[0].mxu0
  %v1117 = vadd.f32 0.0, %v1116
  %v1118 = vpop.f32.mrb[0].mxu0
  %1119 = vmatprep.mubr.bf16.mxu0 0
  %1120 = vmatmul.mubr.bf16.gmra.mrb[0].mxu0 %v647
  %v1121 = vpop.f32.mrb[0].mxu0
  %v1122 = vadd.f32 0.0, %v1121
  %v1123 = vpop.f32.mrb[0].mxu0
  %v1124 = vpop.f32.mrb[0].mxu0
  %v1125 = vadd.f32 0.0, %v1124
  %v1126 = vpop.f32.mrb[0].mxu0
  %1127 = vmatprep.mubr.bf16.mxu0 0
  %1128 = vmatmul.mubr.bf16.gmra.mrb[0].mxu0 %v648
  %v1129 = vpop.f32.mrb[0].mxu0
  %v1130 = vadd.f32 0.0, %v1129
  %v1131 = vpop.f32.mrb[0].mxu0
  %v1132 = vpop.f32.mrb[0].mxu0
  %v1133 = vadd.f32 0.0, %v1132
  %v1134 = vpop.f32.mrb[0].mxu0
  %1135 = vmatprep.mubr.bf16.mxu0 0
  %1136 = vmatmul.mubr.bf16.gmra.mrb[0].mxu0 %v649
  %v1137 = vpop.f32.mrb[0].mxu0
  %v1138 = vadd.f32 0.0, %v1137
  %v1139 = vpop.f32.mrb[0].mxu0
  %v1140 = vpop.f32.mrb[0].mxu0
  %v1141 = vadd.f32 0.0, %v1140
  %v1142 = vpop.f32.mrb[0].mxu0
  %1143 = vmatprep.mubr.bf16.mxu0 0
  %1144 = vmatmul.mubr.bf16.gmra.mrb[0].mxu0 %v650
  %v1145 = vpop.f32.mrb[0].mxu0
  %v1146 = vadd.f32 0.0, %v1145
  %v1147 = vpop.f32.mrb[0].mxu0
  %v1148 = vpop.f32.mrb[0].mxu0
  %v1149 = vadd.f32 0.0, %v1148
  %v1150 = vpop.f32.mrb[0].mxu0
  %1151 = vmatprep.mubr.bf16.mxu0 0
  %1152 = vmatmul.mubr.bf16.gmra.mrb[0].mxu0 %v651
  %v1153 = vpop.f32.mrb[0].mxu0
  %v1154 = vadd.f32 0.0, %v1153
  %v1155 = vpop.f32.mrb[0].mxu0
  %v1156 = vpop.f32.mrb[0].mxu0
  %v1157 = vadd.f32 0.0, %v1156
  %v1158 = vpop.f32.mrb[0].mxu0
  %1159 = vmatprep.mubr.bf16.mxu0 0
  %1160 = vmatmul.mubr.bf16.gmra.mrb[0].mxu0 %v652
  %v1161 = vpop.f32.mrb[0].mxu0
  %v1162 = vadd.f32 0.0, %v1161
  %v1163 = vpop.f32.mrb[0].mxu0
  %v1164 = vpop.f32.mrb[0].mxu0
  %v1165 = vadd.f32 0.0, %v1164
  %v1166 = vpop.f32.mrb[0].mxu0
  %1167 = vmatprep.mubr.bf16.mxu0 0
  %1168 = vmatmul.mubr.bf16.gmra.mrb[0].mxu0 %v653
  %v1169 = vpop.f32.mrb[0].mxu0
  %v1170 = vadd.f32 0.0, %v1169
  %v1171 = vpop.f32.mrb[0].mxu0
  %v1172 = vpop.f32.mrb[0].mxu0
  %v1173 = vadd.f32 0.0, %v1172
  %v1174 = vpop.f32.mrb[0].mxu0
  %1175 = vmatprep.mubr.bf16.mxu0 0
  %1176 = vmatmul.mubr.bf16.gmra.mrb[0].mxu0 %v654
  %v1177 = vpop.f32.mrb[0].mxu0
  %v1178 = vadd.f32 0.0, %v1177
  %v1179 = vpop.f32.mrb[0].mxu0
  %v1180 = vpop.f32.mrb[0].mxu0
  %v1181 = vadd.f32 0.0, %v1180
  %v1182 = vpop.f32.mrb[0].mxu0
  %1183 = vmatprep.mubr.bf16.mxu0 0
  %1184 = vmatmul.mubr.bf16.gmra.mrb[0].mxu0 %v655
  %v1185 = vpop.f32.mrb[0].mxu0
  %v1186 = vadd.f32 0.0, %v1185
  %v1187 = vpop.f32.mrb[0].mxu0
  %v1188 = vpop.f32.mrb[0].mxu0
  %v1189 = vadd.f32 0.0, %v1188
  %v1190 = vpop.f32.mrb[0].mxu0
  %1191 = vmatprep.mubr.bf16.mxu0 0
  %1192 = vmatmul.mubr.bf16.gmra.mrb[0].mxu0 %v656
  %v1193 = vpop.f32.mrb[0].mxu0
  %v1194 = vadd.f32 0.0, %v1193
  %v1195 = vpop.f32.mrb[0].mxu0
  %v1196 = vpop.f32.mrb[0].mxu0
  %v1197 = vadd.f32 0.0, %v1196
  %v1198 = vpop.f32.mrb[0].mxu0
  %1199 = vmatprep.mubr.bf16.mxu0 0
  %1200 = vmatmul.mubr.bf16.gmra.mrb[0].mxu0 %v657
  %v1201 = vpop.f32.mrb[0].mxu0
  %v1202 = vadd.f32 0.0, %v1201
  %v1203 = vpop.f32.mrb[0].mxu0
  %v1204 = vpop.f32.mrb[0].mxu0
  %v1205 = vadd.f32 0.0, %v1204
  %v1206 = vpop.f32.mrb[0].mxu0
  %1207 = vmatprep.mubr.bf16.mxu0 0
  %1208 = vmatmul.mubr.bf16.gmra.mrb[0].mxu0 %v658
  %v1209 = vpop.f32.mrb[0].mxu0
  %v1210 = vadd.f32 0.0, %v1209
  %v1211 = vpop.f32.mrb[0].mxu0
  %v1212 = vpop.f32.mrb[0].mxu0
  %v1213 = vadd.f32 0.0, %v1212
  %v1214 = vpop.f32.mrb[0].mxu0
  %1215 = vmatprep.mubr.bf16.mxu0 0
  %1216 = vmatmul.mubr.bf16.gmra.mrb[0].mxu0 %v659
  %v1217 = vpop.f32.mrb[0].mxu0
  %v1218 = vadd.f32 0.0, %v1217
  %v1219 = vpop.f32.mrb[0].mxu0
  %v1220 = vpop.f32.mrb[0].mxu0
  %v1221 = vadd.f32 0.0, %v1220
  %v1222 = vpop.f32.mrb[0].mxu0
  %1223 = vmatprep.mubr.bf16.mxu0 0
  %1224 = vmatmul.mubr.bf16.gmra.mrb[0].mxu0 %v660
  %v1225 = vpop.f32.mrb[0].mxu0
  %v1226 = vadd.f32 0.0, %v1225
  %v1227 = vpop.f32.mrb[0].mxu0
  %v1228 = vpop.f32.mrb[0].mxu0
  %v1229 = vadd.f32 0.0, %v1228
  %v1230 = vpop.f32.mrb[0].mxu0
  %1231 = vmatprep.mubr.bf16.mxu0 0
  %1232 = vmatmul.mubr.bf16.gmra.mrb[0].mxu0 %v661
  %v1233 = vpop.f32.mrb[0].mxu0
  %v1234 = vadd.f32 0.0, %v1233
  %v1235 = vpop.f32.mrb[0].mxu0
  %v1236 = vpop.f32.mrb[0].mxu0
  %v1237 = vadd.f32 0.0, %v1236
  %v1238 = vpop.f32.mrb[0].mxu0
  %1239 = vmatprep.mubr.bf16.mxu0 0
  %1240 = vmatmul.mubr.bf16.gmra.mrb[0].mxu0 %v662
  %v1241 = vpop.f32.mrb[0].mxu0
  %v1242 = vadd.f32 0.0, %v1241
  %v1243 = vpop.f32.mrb[0].mxu0
  %v1244 = vpop.f32.mrb[0].mxu0
  %v1245 = vadd.f32 0.0, %v1244
  %v1246 = vpop.f32.mrb[0].mxu0
  %1247 = vmatprep.mubr.bf16.mxu0 0
  %1248 = vmatmul.mubr.bf16.gmra.mrb[0].mxu0 %v663
  %v1249 = vpop.f32.mrb[0].mxu0
  %v1250 = vadd.f32 0.0, %v1249
  %v1251 = vpop.f32.mrb[0].mxu0
  %v1252 = vpop.f32.mrb[0].mxu0
  %v1253 = vadd.f32 0.0, %v1252
  %v1254 = vpop.f32.mrb[0].mxu0
  %1255 = vmatprep.mubr.bf16.mxu0 0
  %1256 = vmatmul.mubr.bf16.gmra.mrb[0].mxu0 %v664
  %v1257 = vpop.f32.mrb[0].mxu0
  %v1258 = vadd.f32 0.0, %v1257
  %v1259 = vpop.f32.mrb[0].mxu0
  %v1260 = vpop.f32.mrb[0].mxu0
  %v1261 = vadd.f32 0.0, %v1260
  %v1262 = vpop.f32.mrb[0].mxu0
  %1263 = vmatprep.mubr.bf16.mxu0 0
  %1264 = vmatmul.mubr.bf16.gmra.mrb[0].mxu0 %v665
  %v1265 = vpop.f32.mrb[0].mxu0
  %v1266 = vadd.f32 0.0, %v1265
  %v1267 = vpop.f32.mrb[0].mxu0
  %v1268 = vpop.f32.mrb[0].mxu0
  %v1269 = vadd.f32 0.0, %v1268
  %v1270 = vpop.f32.mrb[0].mxu0
  %1271 = vmatprep.mubr.bf16.mxu0 0
  %1272 = vmatmul.mubr.bf16.gmra.mrb[0].mxu0 %v666
  %v1273 = vpop.f32.mrb[0].mxu0
  %v1274 = vadd.f32 0.0, %v1273
  %v1275 = vpop.f32.mrb[0].mxu0
  %v1276 = vpop.f32.mrb[0].mxu0
  %v1277 = vadd.f32 0.0, %v1276
  %v1278 = vpop.f32.mrb[0].mxu0
  %1279 = vmatprep.mubr.bf16.mxu0 0
  %1280 = vmatmul.mubr.bf16.gmra.mrb[0].mxu0 %v667
  %v1281 = vpop.f32.mrb[0].mxu0
  %v1282 = vadd.f32 0.0, %v1281
  %v1283 = vpop.f32.mrb[0].mxu0
  %v1284 = vpop.f32.mrb[0].mxu0
  %v1285 = vadd.f32 0.0, %v1284
  %v1286 = vpop.f32.mrb[0].mxu0
  %1287 = vmatprep.mubr.bf16.mxu0 0
  %1288 = vmatmul.mubr.bf16.gmra.mrb[0].mxu0 %v668
  %v1289 = vpop.f32.mrb[0].mxu0
  %v1290 = vadd.f32 0.0, %v1289
  %v1291 = vpop.f32.mrb[0].mxu0
  %v1292 = vpop.f32.mrb[0].mxu0
  %v1293 = vadd.f32 0.0, %v1292
  %v1294 = vpop.f32.mrb[0].mxu0
  %1295 = vmatprep.mubr.bf16.mxu0 0
  %1296 = vmatmul.mubr.bf16.gmra.mrb[0].mxu0 %v669
  %v1297 = vpop.f32.mrb[0].mxu0
  %v1298 = vadd.f32 0.0, %v1297
  %v1299 = vpop.f32.mrb[0].mxu0
  %v1300 = vpop.f32.mrb[0].mxu0
  %v1301 = vadd.f32 0.0, %v1300
  %v1302 = vpop.f32.mrb[0].mxu0
  %1303 = vmatprep.mubr.bf16.mxu0 0
  %1304 = vmatmul.mubr.bf16.gmra.mrb[0].mxu0 %v670
  %v1305 = vpop.f32.mrb[0].mxu0
  %v1306 = vadd.f32 0.0, %v1305
  %v1307 = vpop.f32.mrb[0].mxu0
  %v1308 = vpop.f32.mrb[0].mxu0
  %v1309 = vadd.f32 0.0, %v1308
  %v1310 = vpop.f32.mrb[0].mxu0
  %1311 = vmatprep.mubr.bf16.mxu0 0
  %1312 = vmatmul.mubr.bf16.gmra.mrb[0].mxu0 %v671
  %v1313 = vpop.f32.mrb[0].mxu0
  %v1314 = vadd.f32 0.0, %v1313
  %v1315 = vpop.f32.mrb[0].mxu0
  %v1316 = vpop.f32.mrb[0].mxu0
  %v1317 = vadd.f32 0.0, %v1316
  %v1318 = vpop.f32.mrb[0].mxu0
  %1319 = vmatprep.mubr.bf16.mxu0 0
  %1320 = vmatmul.mubr.bf16.gmra.mrb[0].mxu0 %v672
  %v1321 = vpop.f32.mrb[0].mxu0
  %v1322 = vadd.f32 0.0, %v1321
  %v1323 = vpop.f32.mrb[0].mxu0
  %v1324 = vpop.f32.mrb[0].mxu0
  %v1325 = vadd.f32 0.0, %v1324
  %v1326 = vpop.f32.mrb[0].mxu0
  %1327 = vmatprep.mubr.bf16.mxu0 0
  %1328 = vmatmul.mubr.bf16.gmra.mrb[0].mxu0 %v673
  %v1329 = vpop.f32.mrb[0].mxu0
  %v1330 = vadd.f32 0.0, %v1329
  %v1331 = vpop.f32.mrb[0].mxu0
  %v1332 = vpop.f32.mrb[0].mxu0
  %v1333 = vadd.f32 0.0, %v1332
  %v1334 = vpop.f32.mrb[0].mxu0
  %1335 = vmatprep.mubr.bf16.mxu0 0
  %1336 = vmatmul.mubr.bf16.gmra.mrb[0].mxu0 %v674
  %v1337 = vpop.f32.mrb[0].mxu0
  %v1338 = vadd.f32 0.0, %v1337
  %v1339 = vpop.f32.mrb[0].mxu0
  %v1340 = vpop.f32.mrb[0].mxu0
  %v1341 = vadd.f32 0.0, %v1340
  %v1342 = vpop.f32.mrb[0].mxu0
  %1343 = vmatprep.mubr.bf16.mxu0 0
  %1344 = vmatmul.mubr.bf16.gmra.mrb[0].mxu0 %v675
  %v1345 = vpop.f32.mrb[0].mxu0
  %v1346 = vadd.f32 0.0, %v1345
  %v1347 = vpop.f32.mrb[0].mxu0
  %v1348 = vpop.f32.mrb[0].mxu0
  %v1349 = vadd.f32 0.0, %v1348
  %v1350 = vpop.f32.mrb[0].mxu0
  %1351 = vmatprep.mubr.bf16.mxu0 0
  %1352 = vmatmul.mubr.bf16.gmra.mrb[0].mxu0 %v676
  %v1353 = vpop.f32.mrb[0].mxu0
  %v1354 = vadd.f32 0.0, %v1353
  %v1355 = vpop.f32.mrb[0].mxu0
  %v1356 = vpop.f32.mrb[0].mxu0
  %v1357 = vadd.f32 0.0, %v1356
  %v1358 = vpop.f32.mrb[0].mxu0
  %1359 = vmatprep.mubr.bf16.mxu0 0
  %1360 = vmatmul.mubr.bf16.gmra.mrb[0].mxu0 %v677
  %v1361 = vpop.f32.mrb[0].mxu0
  %v1362 = vadd.f32 0.0, %v1361
  %v1363 = vpop.f32.mrb[0].mxu0
  %v1364 = vpop.f32.mrb[0].mxu0
  %v1365 = vadd.f32 0.0, %v1364
  %v1366 = vpop.f32.mrb[0].mxu0
  %1367 = vmatprep.mubr.bf16.mxu0 0
  %1368 = vmatmul.mubr.bf16.gmra.mrb[0].mxu0 %v678
  %v1369 = vpop.f32.mrb[0].mxu0
  %v1370 = vadd.f32 0.0, %v1369
  %v1371 = vpop.f32.mrb[0].mxu0
  %v1372 = vpop.f32.mrb[0].mxu0
  %v1373 = vadd.f32 0.0, %v1372
  %v1374 = vpop.f32.mrb[0].mxu0
  %1375 = vmatprep.mubr.bf16.mxu0 0
  %1376 = vmatmul.mubr.bf16.gmra.mrb[0].mxu0 %v679
  %v1377 = vpop.f32.mrb[0].mxu0
  %v1378 = vadd.f32 0.0, %v1377
  %v1379 = vpop.f32.mrb[0].mxu0
  %v1380 = vpop.f32.mrb[0].mxu0
  %v1381 = vadd.f32 0.0, %v1380
  %v1382 = vpop.f32.mrb[0].mxu0
  %1383 = vmatprep.mubr.bf16.mxu0 0
  %1384 = vmatmul.mubr.bf16.gmra.mrb[0].mxu0 %v680
  %v1385 = vpop.f32.mrb[0].mxu0
  %v1386 = vadd.f32 0.0, %v1385
  %v1387 = vpop.f32.mrb[0].mxu0
  %v1388 = vpop.f32.mrb[0].mxu0
  %v1389 = vadd.f32 0.0, %v1388
  %v1390 = vpop.f32.mrb[0].mxu0
  %1391 = vmatprep.mubr.bf16.mxu0 0
  %1392 = vmatmul.mubr.bf16.gmra.mrb[0].mxu0 %v681
  %v1393 = vpop.f32.mrb[0].mxu0
  %v1394 = vadd.f32 0.0, %v1393
  %v1395 = vpop.f32.mrb[0].mxu0
  %v1396 = vpop.f32.mrb[0].mxu0
  %v1397 = vadd.f32 0.0, %v1396
  %v1398 = vpop.f32.mrb[0].mxu0
  %1399 = vmatprep.mubr.bf16.mxu0 0
  %1400 = vmatmul.mubr.bf16.gmra.mrb[0].mxu0 %v682
  %v1401 = vpop.f32.mrb[0].mxu0
  %v1402 = vadd.f32 0.0, %v1401
  %v1403 = vpop.f32.mrb[0].mxu0
  %v1404 = vpop.f32.mrb[0].mxu0
  %v1405 = vadd.f32 0.0, %v1404
  %v1406 = vpop.f32.mrb[0].mxu0
  %1407 = vmatprep.mubr.bf16.mxu0 0
  %1408 = vmatmul.mubr.bf16.gmra.mrb[0].mxu0 %v683
  %v1409 = vpop.f32.mrb[0].mxu0
  %v1410 = vadd.f32 0.0, %v1409
  %v1411 = vpop.f32.mrb[0].mxu0
  %v1412 = vpop.f32.mrb[0].mxu0
  %v1413 = vadd.f32 0.0, %v1412
  %v1414 = vpop.f32.mrb[0].mxu0
  %1415 = vmatprep.mubr.bf16.mxu0 0
  %1416 = vmatmul.mubr.bf16.gmra.mrb[0].mxu0 %v684
  %v1417 = vpop.f32.mrb[0].mxu0
  %v1418 = vadd.f32 0.0, %v1417
  %v1419 = vpop.f32.mrb[0].mxu0
  %v1420 = vpop.f32.mrb[0].mxu0
  %v1421 = vadd.f32 0.0, %v1420
  %v1422 = vpop.f32.mrb[0].mxu0
  %1423 = vmatprep.mubr.bf16.mxu0 0
  %1424 = vmatmul.mubr.bf16.gmra.mrb[0].mxu0 %v685
  %v1425 = vpop.f32.mrb[0].mxu0
  %v1426 = vadd.f32 0.0, %v1425
  %v1427 = vpop.f32.mrb[0].mxu0
  %v1428 = vpop.f32.mrb[0].mxu0
  %v1429 = vadd.f32 0.0, %v1428
  %v1430 = vpop.f32.mrb[0].mxu0
  %1431 = vmatprep.mubr.bf16.mxu0 0
  %1432 = vmatmul.mubr.bf16.gmra.mrb[0].mxu0 %v686
  %v1433 = vpop.f32.mrb[0].mxu0
  %v1434 = vadd.f32 0.0, %v1433
  %v1435 = vpop.f32.mrb[0].mxu0
  %v1436 = vpop.f32.mrb[0].mxu0
  %v1437 = vadd.f32 0.0, %v1436
  %v1438 = vpop.f32.mrb[0].mxu0
  %1439 = vmatprep.mubr.bf16.mxu0 0
  %1440 = vmatmul.mubr.bf16.gmra.mrb[0].mxu0 %v687
  %v1441 = vpop.f32.mrb[0].mxu0
  %v1442 = vadd.f32 0.0, %v1441
  %v1443 = vpop.f32.mrb[0].mxu0
  %v1444 = vpop.f32.mrb[0].mxu0
  %v1445 = vadd.f32 0.0, %v1444
  %v1446 = vpop.f32.mrb[0].mxu0
  %1447 = vmatprep.mubr.bf16.mxu0 0
  %1448 = vmatmul.mubr.bf16.gmra.mrb[0].mxu0 %v688
  %v1449 = vpop.f32.mrb[0].mxu0
  %v1450 = vadd.f32 0.0, %v1449
  %v1451 = vpop.f32.mrb[0].mxu0
  %v1452 = vpop.f32.mrb[0].mxu0
  %v1453 = vadd.f32 0.0, %v1452
  %v1454 = vpop.f32.mrb[0].mxu0
  %1455 = vmatprep.mubr.bf16.mxu0 0
  %1456 = vmatmul.mubr.bf16.gmra.mrb[0].mxu0 %v689
  %v1457 = vpop.f32.mrb[0].mxu0
  %v1458 = vadd.f32 0.0, %v1457
  %v1459 = vpop.f32.mrb[0].mxu0
  %v1460 = vpop.f32.mrb[0].mxu0
  %v1461 = vadd.f32 0.0, %v1460
  %v1462 = vpop.f32.mrb[0].mxu0
  %1463 = vmatprep.mubr.bf16.mxu0 0
  %1464 = vmatmul.mubr.bf16.gmra.mrb[0].mxu0 %v690
  %v1465 = vpop.f32.mrb[0].mxu0
  %v1466 = vadd.f32 0.0, %v1465
  %v1467 = vpop.f32.mrb[0].mxu0
  %v1468 = vpop.f32.mrb[0].mxu0
  %v1469 = vadd.f32 0.0, %v1468
  %v1470 = vpop.f32.mrb[0].mxu0
  %1471 = vmatprep.mubr.bf16.mxu0 0
  %1472 = vmatmul.mubr.bf16.gmra.mrb[0].mxu0 %v691
  %v1473 = vpop.f32.mrb[0].mxu0
  %v1474 = vadd.f32 0.0, %v1473
  %v1475 = vpop.f32.mrb[0].mxu0
  %v1476 = vpop.f32.mrb[0].mxu0
  %v1477 = vadd.f32 0.0, %v1476
  %v1478 = vpop.f32.mrb[0].mxu0
  %1479 = vmatprep.mubr.bf16.mxu0 0
  %1480 = vmatmul.mubr.bf16.gmra.mrb[0].mxu0 %v692
  %v1481 = vpop.f32.mrb[0].mxu0
  %v1482 = vadd.f32 0.0, %v1481
  %v1483 = vpop.f32.mrb[0].mxu0
  %v1484 = vpop.f32.mrb[0].mxu0
  %v1485 = vadd.f32 0.0, %v1484
  %v1486 = vpop.f32.mrb[0].mxu0
  %1487 = vmatprep.mubr.bf16.mxu0 0
  %1488 = vmatmul.mubr.bf16.gmra.mrb[0].mxu0 %v693
  %v1489 = vpop.f32.mrb[0].mxu0
  %v1490 = vadd.f32 0.0, %v1489
  %v1491 = vpop.f32.mrb[0].mxu0
  %v1492 = vpop.f32.mrb[0].mxu0
  %v1493 = vadd.f32 0.0, %v1492
  %v1494 = vpop.f32.mrb[0].mxu0
  %1495 = vmatprep.mubr.bf16.mxu0 0
  %1496 = vmatmul.mubr.bf16.gmra.mrb[0].mxu0 %v694
  %v1497 = vpop.f32.mrb[0].mxu0
  %v1498 = vadd.f32 0.0, %v1497
  %v1499 = vpop.f32.mrb[0].mxu0
  %v1500 = vpop.f32.mrb[0].mxu0
  %v1501 = vadd.f32 0.0, %v1500
  %v1502 = vpop.f32.mrb[0].mxu0
  %1503 = vmatprep.mubr.bf16.mxu0 0
  %1504 = vmatmul.mubr.bf16.gmra.mrb[0].mxu0 %v695
  %v1505 = vpop.f32.mrb[0].mxu0
  %v1506 = vadd.f32 0.0, %v1505
  %v1507 = vpop.f32.mrb[0].mxu0
  %v1508 = vpop.f32.mrb[0].mxu0
  %v1509 = vadd.f32 0.0, %v1508
  %v1510 = vpop.f32.mrb[0].mxu0
  %1511 = vmatprep.mubr.bf16.mxu0 0
  %1512 = vmatmul.mubr.bf16.gmra.mrb[0].mxu0 %v696
  %v1513 = vpop.f32.mrb[0].mxu0
  %v1514 = vadd.f32 0.0, %v1513
  %v1515 = vpop.f32.mrb[0].mxu0
  %v1516 = vpop.f32.mrb[0].mxu0
  %v1517 = vadd.f32 0.0, %v1516
  %v1518 = vpop.f32.mrb[0].mxu0
  %1519 = vmatprep.mubr.bf16.mxu0 0
  %1520 = vmatmul.mubr.bf16.gmra.mrb[0].mxu0 %v697
  %v1521 = vpop.f32.mrb[0].mxu0
  %v1522 = vadd.f32 0.0, %v1521
  %v1523 = vpop.f32.mrb[0].mxu0
  %v1524 = vpop.f32.mrb[0].mxu0
  %v1525 = vadd.f32 0.0, %v1524
  %v1526 = vpop.f32.mrb[0].mxu0
  %1527 = vmatprep.mubr.bf16.mxu0 0
  %1528 = vmatmul.mubr.bf16.gmra.mrb[0].mxu0 %v698
  %v1529 = vpop.f32.mrb[0].mxu0
  %v1530 = vadd.f32 0.0, %v1529
  %v1531 = vpop.f32.mrb[0].mxu0
  %v1532 = vpop.f32.mrb[0].mxu0
  %v1533 = vadd.f32 0.0, %v1532
  %v1534 = vpop.f32.mrb[0].mxu0
  %1535 = vmatprep.mubr.bf16.mxu0 0
  %1536 = vmatmul.mubr.bf16.gmra.mrb[0].mxu0 %v699
  %v1537 = vpop.f32.mrb[0].mxu0
  %v1538 = vadd.f32 0.0, %v1537
  %v1539 = vpop.f32.mrb[0].mxu0
  %v1540 = vpop.f32.mrb[0].mxu0
  %v1541 = vadd.f32 0.0, %v1540
  %v1542 = vpop.f32.mrb[0].mxu0
  %1543 = vmatprep.mubr.bf16.mxu0 0
  %1544 = vmatmul.mubr.bf16.gmra.mrb[0].mxu0 %v700
  %v1545 = vpop.f32.mrb[0].mxu0
  %v1546 = vadd.f32 0.0, %v1545
  %v1547 = vpop.f32.mrb[0].mxu0
  %v1548 = vpop.f32.mrb[0].mxu0
  %v1549 = vadd.f32 0.0, %v1548
  %v1550 = vpop.f32.mrb[0].mxu0
  %1551 = vmatprep.mubr.bf16.mxu0 0
  %1552 = vmatmul.mubr.bf16.gmra.mrb[0].mxu0 %v701
  %v1553 = vpop.f32.mrb[0].mxu0
  %v1554 = vadd.f32 0.0, %v1553
  %v1555 = vpop.f32.mrb[0].mxu0
  %v1556 = vpop.f32.mrb[0].mxu0
  %v1557 = vadd.f32 0.0, %v1556
  %v1558 = vpop.f32.mrb[0].mxu0
  %1559 = vmatprep.mubr.bf16.mxu0 0
  %1560 = vmatmul.mubr.bf16.gmra.mrb[0].mxu0 %v702
  %v1561 = vpop.f32.mrb[0].mxu0
  %v1562 = vadd.f32 0.0, %v1561
  %v1563 = vpop.f32.mrb[0].mxu0
  %v1564 = vpop.f32.mrb[0].mxu0
  %v1565 = vadd.f32 0.0, %v1564
  %v1566 = vpop.f32.mrb[0].mxu0
  %1567 = vmatprep.mubr.bf16.mxu0 0
  %1568 = vmatmul.mubr.bf16.gmra.mrb[0].mxu0 %v703
  %v1569 = vpop.f32.mrb[0].mxu0
  %v1570 = vadd.f32 0.0, %v1569
  %v1571 = vpop.f32.mrb[0].mxu0
  %v1572 = vpop.f32.mrb[0].mxu0
  %v1573 = vadd.f32 0.0, %v1572
  %v1574 = vpop.f32.mrb[0].mxu0
  %1575 = vmatprep.mubr.bf16.mxu0 0
  %1576 = vmatmul.mubr.bf16.gmra.mrb[0].mxu0 %v704
  %v1577 = vpop.f32.mrb[0].mxu0
  %v1578 = vadd.f32 0.0, %v1577
  %v1579 = vpop.f32.mrb[0].mxu0
  %v1580 = vpop.f32.mrb[0].mxu0
  %v1581 = vadd.f32 0.0, %v1580
  %v1582 = vpop.f32.mrb[0].mxu0
  %1583 = vmatprep.mubr.bf16.mxu0 0
  %1584 = vmatmul.mubr.bf16.gmra.mrb[0].mxu0 %v705
  %v1585 = vpop.f32.mrb[0].mxu0
  %v1586 = vadd.f32 0.0, %v1585
  %v1587 = vpop.f32.mrb[0].mxu0
  %v1588 = vpop.f32.mrb[0].mxu0
  %v1589 = vadd.f32 0.0, %v1588
  %v1590 = vpop.f32.mrb[0].mxu0
  %1591 = vmatprep.mubr.bf16.mxu0 0
  %1592 = vmatmul.mubr.bf16.gmra.mrb[0].mxu0 %v706
  %v1593 = vpop.f32.mrb[0].mxu0
  %v1594 = vadd.f32 0.0, %v1593
  %v1595 = vpop.f32.mrb[0].mxu0
  %v1596 = vpop.f32.mrb[0].mxu0
  %v1597 = vadd.f32 0.0, %v1596
  %v1598 = vpop.f32.mrb[0].mxu0
  %1599 = vmatprep.mubr.bf16.mxu0 0
  %1600 = vmatmul.mubr.bf16.gmra.mrb[0].mxu0 %v707
  %v1601 = vpop.f32.mrb[0].mxu0
  %v1602 = vadd.f32 0.0, %v1601
  %v1603 = vpop.f32.mrb[0].mxu0
  %v1604 = vpop.f32.mrb[0].mxu0
  %v1605 = vadd.f32 0.0, %v1604
  %v1606 = vpop.f32.mrb[0].mxu0
  %1607 = vmatprep.mubr.bf16.mxu0 0
  %1608 = vmatmul.mubr.bf16.gmra.mrb[0].mxu0 %v708
  %v1609 = vpop.f32.mrb[0].mxu0
  %v1610 = vadd.f32 0.0, %v1609
  %v1611 = vpop.f32.mrb[0].mxu0
  %v1612 = vpop.f32.mrb[0].mxu0
  %v1613 = vadd.f32 0.0, %v1612
  %v1614 = vpop.f32.mrb[0].mxu0
  %1615 = vmatprep.mubr.bf16.mxu0 0
  %1616 = vmatmul.mubr.bf16.gmra.mrb[0].mxu0 %v709
  %v1617 = vpop.f32.mrb[0].mxu0
  %v1618 = vadd.f32 0.0, %v1617
  %v1619 = vpop.f32.mrb[0].mxu0
  %v1620 = vpop.f32.mrb[0].mxu0
  %v1621 = vadd.f32 0.0, %v1620
  %v1622 = vpop.f32.mrb[0].mxu0
  %1623 = vmatprep.mubr.bf16.mxu0 0
  %1624 = vmatmul.mubr.bf16.gmra.mrb[0].mxu0 %v710
  %v1625 = vpop.f32.mrb[0].mxu0
  %v1626 = vadd.f32 0.0, %v1625
  %v1627 = vpop.f32.mrb[0].mxu0
  %v1628 = vpop.f32.mrb[0].mxu0
  %v1629 = vadd.f32 0.0, %v1628
  %v1630 = vpop.f32.mrb[0].mxu0
  %1631 = vmatprep.mubr.bf16.mxu0 0
  %1632 = vmatmul.mubr.bf16.gmra.mrb[0].mxu0 %v711
  %v1633 = vpop.f32.mrb[0].mxu0
  %v1634 = vadd.f32 0.0, %v1633
  %v1635 = vpop.f32.mrb[0].mxu0
  %v1636 = vpop.f32.mrb[0].mxu0
  %v1637 = vadd.f32 0.0, %v1636
  %v1638 = vpop.f32.mrb[0].mxu0
  %1639 = vmatprep.mubr.bf16.mxu0 0
  %1640 = vmatmul.mubr.bf16.gmra.mrb[0].mxu0 %v712
  %v1641 = vpop.f32.mrb[0].mxu0
  %v1642 = vadd.f32 0.0, %v1641
  %v1643 = vpop.f32.mrb[0].mxu0
  %v1644 = vpop.f32.mrb[0].mxu0
  %v1645 = vadd.f32 0.0, %v1644
  %v1646 = vpop.f32.mrb[0].mxu0
  %1647 = vmatprep.mubr.bf16.mxu0 0
  %1648 = vmatmul.mubr.bf16.gmra.mrb[0].mxu0 %v713
  %v1649 = vpop.f32.mrb[0].mxu0
  %v1650 = vadd.f32 0.0, %v1649
  %v1651 = vpop.f32.mrb[0].mxu0
  %v1652 = vpop.f32.mrb[0].mxu0
  %v1653 = vadd.f32 0.0, %v1652
  %v1654 = vpop.f32.mrb[0].mxu0
  %1655 = vmatprep.mubr.bf16.mxu0 0
  %1656 = vmatmul.mubr.bf16.gmra.mrb[0].mxu0 %v714
  %v1657 = vpop.f32.mrb[0].mxu0
  %v1658 = vadd.f32 0.0, %v1657
  %v1659 = vpop.f32.mrb[0].mxu0
  %v1660 = vpop.f32.mrb[0].mxu0
  %v1661 = vadd.f32 0.0, %v1660
  %v1662 = vpop.f32.mrb[0].mxu0
  %1663 = vmatprep.mubr.bf16.mxu0 0
  %1664 = vmatmul.mubr.bf16.gmra.mrb[0].mxu0 %v715
  %v1665 = vpop.f32.mrb[0].mxu0
  %v1666 = vadd.f32 0.0, %v1665
  %v1667 = vpop.f32.mrb[0].mxu0
  %v1668 = vpop.f32.mrb[0].mxu0
  %v1669 = vadd.f32 0.0, %v1668
  %v1670 = vpop.f32.mrb[0].mxu0
  %1671 = vmatprep.mubr.bf16.mxu0 0
  %1672 = vmatmul.mubr.bf16.gmra.mrb[0].mxu0 %v716
  %v1673 = vpop.f32.mrb[0].mxu0
  %v1674 = vadd.f32 0.0, %v1673
  %v1675 = vpop.f32.mrb[0].mxu0
  %v1676 = vpop.f32.mrb[0].mxu0
  %v1677 = vadd.f32 0.0, %v1676
  %v1678 = vpop.f32.mrb[0].mxu0
  %1679 = vdwg.mxu0
  %v1680 = vmax.f32 %v898, %v1093
  %v1681 = vmax.f32 %v901, %v1098
  %v1682 = vmax.f32 %v906, %v1101
  %v1683 = vmax.f32 %v909, %v1106
  %v1684 = vmax.f32 %v914, %v1109
  %v1685 = vmax.f32 %v917, %v1114
  %v1686 = vmax.f32 %v922, %v1117
  %v1687 = vmax.f32 %v925, %v1122
  %v1688 = vmax.f32 %v930, %v1125
  %v1689 = vmax.f32 %v933, %v1130
  %v1690 = vmax.f32 %v938, %v1133
  %v1691 = vmax.f32 %v941, %v1138
  %v1692 = vmax.f32 %v946, %v1141
  %v1693 = vmax.f32 %v949, %v1146
  %v1694 = vmax.f32 %v954, %v1149
  %v1695 = vmax.f32 %v957, %v1154
  %v1696 = vmax.f32 %v962, %v1157
  %v1697 = vmax.f32 %v965, %v1162
  %v1698 = vmax.f32 %v970, %v1165
  %v1699 = vmax.f32 %v973, %v1170
  %v1700 = vmax.f32 %v978, %v1173
  %v1701 = vmax.f32 %v981, %v1178
  %v1702 = vmax.f32 %v986, %v1181
  %v1703 = vmax.f32 %v989, %v1186
  %v1704 = vmax.f32 %v994, %v1189
  %v1705 = vmax.f32 %v997, %v1194
  %v1706 = vmax.f32 %v1002, %v1197
  %v1707 = vmax.f32 %v1005, %v1202
  %v1708 = vmax.f32 %v1010, %v1205
  %v1709 = vmax.f32 %v1013, %v1210
  %v1710 = vmax.f32 %v1018, %v1213
  %v1711 = vmax.f32 %v1021, %v1218
  %v1712 = vmax.f32 %v1026, %v1221
  %v1713 = vmax.f32 %v1029, %v1226
  %v1714 = vmax.f32 %v1034, %v1229
  %v1715 = vmax.f32 %v1037, %v1234
  %v1716 = vmax.f32 %v1042, %v1237
  %v1717 = vmax.f32 %v1045, %v1242
  %v1718 = vmax.f32 %v1050, %v1245
  %v1719 = vmax.f32 %v1053, %v1250
  %v1720 = vmax.f32 %v1058, %v1253
  %v1721 = vmax.f32 %v1061, %v1258
  %v1722 = vmax.f32 %v1066, %v1261
  %v1723 = vmax.f32 %v1069, %v1266
  %v1724 = vmax.f32 %v1074, %v1269
  %v1725 = vmax.f32 %v1077, %v1274
  %v1726 = vmax.f32 %v1082, %v1277
  %v1727 = vmax.f32 %v1085, %v1282
  %v1728 = vmax.f32 %v1090, %v1285
  %v1729 = vmax.f32 %v1290, %v1485
  %v1730 = vmax.f32 %v1293, %v1490
  %v1731 = vmax.f32 %v1298, %v1493
  %v1732 = vmax.f32 %v1301, %v1498
  %v1733 = vmax.f32 %v1306, %v1501
  %v1734 = vmax.f32 %v1309, %v1506
  %v1735 = vmax.f32 %v1314, %v1509
  %v1736 = vmax.f32 %v1317, %v1514
  %v1737 = vmax.f32 %v1322, %v1517
  %v1738 = vmax.f32 %v1325, %v1522
  %v1739 = vmax.f32 %v1330, %v1525
  %v1740 = vmax.f32 %v1333, %v1530
  %v1741 = vmax.f32 %v1338, %v1533
  %v1742 = vmax.f32 %v1341, %v1538
  %v1743 = vmax.f32 %v1346, %v1541
  %v1744 = vmax.f32 %v1349, %v1546
  %v1745 = vmax.f32 %v1354, %v1549
  %v1746 = vmax.f32 %v1357, %v1554
  %v1747 = vmax.f32 %v1362, %v1557
  %v1748 = vmax.f32 %v1365, %v1562
  %v1749 = vmax.f32 %v1370, %v1565
  %v1750 = vmax.f32 %v1373, %v1570
  %v1751 = vmax.f32 %v1378, %v1573
  %v1752 = vmax.f32 %v1381, %v1578
  %v1753 = vmax.f32 %v1386, %v1581
  %v1754 = vmax.f32 %v1389, %v1586
  %v1755 = vmax.f32 %v1394, %v1589
  %v1756 = vmax.f32 %v1397, %v1594
  %v1757 = vmax.f32 %v1402, %v1597
  %v1758 = vmax.f32 %v1405, %v1602
  %v1759 = vmax.f32 %v1410, %v1605
  %v1760 = vmax.f32 %v1413, %v1610
  %v1761 = vmax.f32 %v1418, %v1613
  %v1762 = vmax.f32 %v1421, %v1618
  %v1763 = vmax.f32 %v1426, %v1621
  %v1764 = vmax.f32 %v1429, %v1626
  %v1765 = vmax.f32 %v1434, %v1629
  %v1766 = vmax.f32 %v1437, %v1634
  %v1767 = vmax.f32 %v1442, %v1637
  %v1768 = vmax.f32 %v1445, %v1642
  %v1769 = vmax.f32 %v1450, %v1645
  %v1770 = vmax.f32 %v1453, %v1650
  %v1771 = vmax.f32 %v1458, %v1653
  %v1772 = vmax.f32 %v1461, %v1658
  %v1773 = vmax.f32 %v1466, %v1661
  %v1774 = vmax.f32 %v1469, %v1666
  %v1775 = vmax.f32 %v1474, %v1669
  %v1776 = vmax.f32 %v1477, %v1674
  %v1777 = vmax.f32 %v1482, %v1677
  %v1778 = vmax.f32 %v1680, %v1729
  %v1779 = vmax.f32 %v1681, %v1730
  %v1780 = vmax.f32 %v1682, %v1731
  %v1781 = vmax.f32 %v1683, %v1732
  %v1782 = vmax.f32 %v1684, %v1733
  %v1783 = vmax.f32 %v1685, %v1734
  %v1784 = vmax.f32 %v1686, %v1735
  %v1785 = vmax.f32 %v1687, %v1736
  %v1786 = vmax.f32 %v1688, %v1737
  %v1787 = vmax.f32 %v1689, %v1738
  %v1788 = vmax.f32 %v1690, %v1739
  %v1789 = vmax.f32 %v1691, %v1740
  %v1790 = vmax.f32 %v1692, %v1741
  %v1791 = vmax.f32 %v1693, %v1742
  %v1792 = vmax.f32 %v1694, %v1743
  %v1793 = vmax.f32 %v1695, %v1744
  %v1794 = vmax.f32 %v1696, %v1745
  %v1795 = vmax.f32 %v1697, %v1746
  %v1796 = vmax.f32 %v1698, %v1747
  %v1797 = vmax.f32 %v1699, %v1748
  %v1798 = vmax.f32 %v1700, %v1749
  %v1799 = vmax.f32 %v1701, %v1750
  %v1800 = vmax.f32 %v1702, %v1751
  %v1801 = vmax.f32 %v1703, %v1752
  %v1802 = vmax.f32 %v1704, %v1753
  %v1803 = vmax.f32 %v1705, %v1754
  %v1804 = vmax.f32 %v1706, %v1755
  %v1805 = vmax.f32 %v1707, %v1756
  %v1806 = vmax.f32 %v1708, %v1757
  %v1807 = vmax.f32 %v1709, %v1758
  %v1808 = vmax.f32 %v1710, %v1759
  %v1809 = vmax.f32 %v1711, %v1760
  %v1810 = vmax.f32 %v1712, %v1761
  %v1811 = vmax.f32 %v1713, %v1762
  %v1812 = vmax.f32 %v1714, %v1763
  %v1813 = vmax.f32 %v1715, %v1764
  %v1814 = vmax.f32 %v1716, %v1765
  %v1815 = vmax.f32 %v1717, %v1766
  %v1816 = vmax.f32 %v1718, %v1767
  %v1817 = vmax.f32 %v1719, %v1768
  %v1818 = vmax.f32 %v1720, %v1769
  %v1819 = vmax.f32 %v1721, %v1770
  %v1820 = vmax.f32 %v1722, %v1771
  %v1821 = vmax.f32 %v1723, %v1772
  %v1822 = vmax.f32 %v1724, %v1773
  %v1823 = vmax.f32 %v1725, %v1774
  %v1824 = vmax.f32 %v1726, %v1775
  %v1825 = vmax.f32 %v1727, %v1776
  %v1826 = vmax.f32 %v1728, %v1777
  %v1827 = vld [vmem:[%s2] sm:$0x1]
  %v1829 = vlaneseq
  %v1830 = vshrl.u32 %v1829, 7
  %v1831 = vsub.s32 0, %v1830
  %v1832 = vrot.slane %v1827, %v1831
  %v1834 = vadd.f32 %v1778, %v1832
  %v1835 = vadd.f32 %v1779, %v1832
  %v1836 = vadd.f32 %v1780, %v1832
  %v1837 = vadd.f32 %v1781, %v1832
  %v1838 = vadd.f32 %v1782, %v1832
  %v1839 = vadd.f32 %v1783, %v1832
  %v1840 = vadd.f32 %v1784, %v1832
  %v1841 = vadd.f32 %v1785, %v1832
  %v1842 = vadd.f32 %v1786, %v1832
  %v1843 = vadd.f32 %v1787, %v1832
  %v1844 = vadd.f32 %v1788, %v1832
  %v1845 = vadd.f32 %v1789, %v1832
  %v1846 = vadd.f32 %v1790, %v1832
  %v1847 = vadd.f32 %v1791, %v1832
  %v1848 = vadd.f32 %v1792, %v1832
  %v1849 = vadd.f32 %v1793, %v1832
  %v1850 = vadd.f32 %v1794, %v1832
  %v1851 = vadd.f32 %v1795, %v1832
  %v1852 = vadd.f32 %v1796, %v1832
  %v1853 = vadd.f32 %v1797, %v1832
  %v1854 = vadd.f32 %v1798, %v1832
  %v1855 = vadd.f32 %v1799, %v1832
  %v1856 = vadd.f32 %v1800, %v1832
  %v1857 = vadd.f32 %v1801, %v1832
  %v1858 = vadd.f32 %v1802, %v1832
  %v1859 = vadd.f32 %v1803, %v1832
  %v1860 = vadd.f32 %v1804, %v1832
  %v1861 = vadd.f32 %v1805, %v1832
  %v1862 = vadd.f32 %v1806, %v1832
  %v1863 = vadd.f32 %v1807, %v1832
  %v1864 = vadd.f32 %v1808, %v1832
  %v1865 = vadd.f32 %v1809, %v1832
  %v1866 = vadd.f32 %v1810, %v1832
  %v1867 = vadd.f32 %v1811, %v1832
  %v1868 = vadd.f32 %v1812, %v1832
  %v1869 = vadd.f32 %v1813, %v1832
  %v1870 = vadd.f32 %v1814, %v1832
  %v1871 = vadd.f32 %v1815, %v1832
  %v1872 = vadd.f32 %v1816, %v1832
  %v1873 = vadd.f32 %v1817, %v1832
  %v1874 = vadd.f32 %v1818, %v1832
  %v1875 = vadd.f32 %v1819, %v1832
  %v1876 = vadd.f32 %v1820, %v1832
  %v1877 = vadd.f32 %v1821, %v1832
  %v1878 = vadd.f32 %v1822, %v1832
  %v1879 = vadd.f32 %v1823, %v1832
  %v1880 = vadd.f32 %v1824, %v1832
  %v1881 = vadd.f32 %v1825, %v1832
  %v1882 = vadd.f32 %v1826, %v1832
  %v1883 = vmax.f32 %v1834, 0.0
  %v1884 = vmax.f32 %v1835, 0.0
  %v1885 = vmax.f32 %v1836, 0.0
  %v1886 = vmax.f32 %v1837, 0.0
  %v1887 = vmax.f32 %v1838, 0.0
  %v1888 = vmax.f32 %v1839, 0.0
  %v1889 = vmax.f32 %v1840, 0.0
  %v1890 = vmax.f32 %v1841, 0.0
  %v1891 = vmax.f32 %v1842, 0.0
  %v1892 = vmax.f32 %v1843, 0.0
  %v1893 = vmax.f32 %v1844, 0.0
  %v1894 = vmax.f32 %v1845, 0.0
  %v1895 = vmax.f32 %v1846, 0.0
  %v1896 = vmax.f32 %v1847, 0.0
  %v1897 = vmax.f32 %v1848, 0.0
  %v1898 = vmax.f32 %v1849, 0.0
  %v1899 = vmax.f32 %v1850, 0.0
  %v1900 = vmax.f32 %v1851, 0.0
  %v1901 = vmax.f32 %v1852, 0.0
  %v1902 = vmax.f32 %v1853, 0.0
  %v1903 = vmax.f32 %v1854, 0.0
  %v1904 = vmax.f32 %v1855, 0.0
  %v1905 = vmax.f32 %v1856, 0.0
  %v1906 = vmax.f32 %v1857, 0.0
  %v1907 = vmax.f32 %v1858, 0.0
  %v1908 = vmax.f32 %v1859, 0.0
  %v1909 = vmax.f32 %v1860, 0.0
  %v1910 = vmax.f32 %v1861, 0.0
  %v1911 = vmax.f32 %v1862, 0.0
  %v1912 = vmax.f32 %v1863, 0.0
  %v1913 = vmax.f32 %v1864, 0.0
  %v1914 = vmax.f32 %v1865, 0.0
  %v1915 = vmax.f32 %v1866, 0.0
  %v1916 = vmax.f32 %v1867, 0.0
  %v1917 = vmax.f32 %v1868, 0.0
  %v1918 = vmax.f32 %v1869, 0.0
  %v1919 = vmax.f32 %v1870, 0.0
  %v1920 = vmax.f32 %v1871, 0.0
  %v1921 = vmax.f32 %v1872, 0.0
  %v1922 = vmax.f32 %v1873, 0.0
  %v1923 = vmax.f32 %v1874, 0.0
  %v1924 = vmax.f32 %v1875, 0.0
  %v1925 = vmax.f32 %v1876, 0.0
  %v1926 = vmax.f32 %v1877, 0.0
  %v1927 = vmax.f32 %v1878, 0.0
  %v1928 = vmax.f32 %v1879, 0.0
  %v1929 = vmax.f32 %v1880, 0.0
  %v1930 = vmax.f32 %v1881, 0.0
  %v1931 = vmax.f32 %v1882, 0.0
  %v1932 = vpack.c.bf16 %v1884, %v1883
  %v1933 = vpack.c.bf16 %v1886, %v1885
  %v1934 = vpack.c.bf16 %v1888, %v1887
  %v1935 = vpack.c.bf16 %v1890, %v1889
  %v1936 = vpack.c.bf16 %v1892, %v1891
  %v1937 = vpack.c.bf16 %v1894, %v1893
  %v1938 = vpack.c.bf16 %v1896, %v1895
  %v1939 = vpack.c.bf16 %v1898, %v1897
  %v1940 = vpack.c.bf16 %v1900, %v1899
  %v1941 = vpack.c.bf16 %v1902, %v1901
  %v1942 = vpack.c.bf16 %v1904, %v1903
  %v1943 = vpack.c.bf16 %v1906, %v1905
  %v1944 = vpack.c.bf16 %v1908, %v1907
  %v1945 = vpack.c.bf16 %v1910, %v1909
  %v1946 = vpack.c.bf16 %v1912, %v1911
  %v1947 = vpack.c.bf16 %v1914, %v1913
  %v1948 = vpack.c.bf16 %v1916, %v1915
  %v1949 = vpack.c.bf16 %v1918, %v1917
  %v1950 = vpack.c.bf16 %v1920, %v1919
  %v1951 = vpack.c.bf16 %v1922, %v1921
  %v1952 = vpack.c.bf16 %v1924, %v1923
  %v1953 = vpack.c.bf16 %v1926, %v1925
  %v1954 = vpack.c.bf16 %v1928, %v1927
  %v1955 = vpack.c.bf16 %v1930, %v1929
  %v1956 = vpack.c.bf16 %v1931, %v1931
  %v1982 = vunpack.c.l.b16 %v1932
  %v1983 = vunpack.c.h.b16 %v1932
  %v1984 = vunpack.c.l.b16 %v1933
  %v1985 = vunpack.c.h.b16 %v1933
  %v1986 = vunpack.c.l.b16 %v1934
  %v1987 = vunpack.c.h.b16 %v1934
  %v1988 = vunpack.c.l.b16 %v1935
  %v1989 = vunpack.c.h.b16 %v1935
  %v1990 = vunpack.c.l.b16 %v1936
  %v1991 = vunpack.c.h.b16 %v1936
  %v1992 = vunpack.c.l.b16 %v1937
  %v1993 = vunpack.c.h.b16 %v1937
  %v1994 = vunpack.c.l.b16 %v1938
  %v1995 = vunpack.c.h.b16 %v1938
  %v1996 = vunpack.c.l.b16 %v1939
  %v1997 = vunpack.c.h.b16 %v1939
  %v1998 = vunpack.c.l.b16 %v1940
  %v1999 = vunpack.c.h.b16 %v1940
  %v2000 = vunpack.c.l.b16 %v1941
  %v2001 = vunpack.c.h.b16 %v1941
  %v2002 = vunpack.c.l.b16 %v1942
  %v2003 = vunpack.c.h.b16 %v1942
  %v2004 = vunpack.c.l.b16 %v1943
  %v2005 = vunpack.c.h.b16 %v1943
  %v2006 = vunpack.c.l.b16 %v1944
  %v2007 = vunpack.c.h.b16 %v1944
  %v2008 = vunpack.c.l.b16 %v1945
  %v2009 = vunpack.c.h.b16 %v1945
  %v2010 = vunpack.c.l.b16 %v1946
  %v2011 = vunpack.c.h.b16 %v1946
  %v2012 = vunpack.c.l.b16 %v1947
  %v2013 = vunpack.c.h.b16 %v1947
  %v2014 = vunpack.c.l.b16 %v1948
  %v2015 = vunpack.c.h.b16 %v1948
  %v2016 = vunpack.c.l.b16 %v1949
  %v2017 = vunpack.c.h.b16 %v1949
  %v2018 = vunpack.c.l.b16 %v1950
  %v2019 = vunpack.c.h.b16 %v1950
  %v2020 = vunpack.c.l.b16 %v1951
  %v2021 = vunpack.c.h.b16 %v1951
  %v2022 = vunpack.c.l.b16 %v1952
  %v2023 = vunpack.c.h.b16 %v1952
  %v2024 = vunpack.c.l.b16 %v1953
  %v2025 = vunpack.c.h.b16 %v1953
  %v2026 = vunpack.c.l.b16 %v1954
  %v2027 = vunpack.c.h.b16 %v1954
  %v2028 = vunpack.c.l.b16 %v1955
  %v2029 = vunpack.c.h.b16 %v1955
  %v2030 = vunpack.c.l.b16 %v1956
  %v2031 = vpack.c.b16 %v1982, %v1982
  %v2032 = vpack.c.b16 %v1983, %v1983
  %v2033 = vpack.c.b16 %v1984, %v1984
  %v2034 = vpack.c.b16 %v1985, %v1985
  %v2035 = vpack.c.b16 %v1986, %v1986
  %v2036 = vpack.c.b16 %v1987, %v1987
  %v2037 = vpack.c.b16 %v1988, %v1988
  %v2038 = vpack.c.b16 %v1989, %v1989
  %v2039 = vpack.c.b16 %v1990, %v1990
  %v2040 = vpack.c.b16 %v1991, %v1991
  %v2041 = vpack.c.b16 %v1992, %v1992
  %v2042 = vpack.c.b16 %v1993, %v1993
  %v2043 = vpack.c.b16 %v1994, %v1994
  %v2044 = vpack.c.b16 %v1995, %v1995
  %v2045 = vpack.c.b16 %v1996, %v1996
  %v2046 = vpack.c.b16 %v1997, %v1997
  %v2047 = vpack.c.b16 %v1998, %v1998
  %v2048 = vpack.c.b16 %v1999, %v1999
  %v2049 = vpack.c.b16 %v2000, %v2000
  %v2050 = vpack.c.b16 %v2001, %v2001
  %v2051 = vpack.c.b16 %v2002, %v2002
  %v2052 = vpack.c.b16 %v2003, %v2003
  %v2053 = vpack.c.b16 %v2004, %v2004
  %v2054 = vpack.c.b16 %v2005, %v2005
  %v2055 = vpack.c.b16 %v2006, %v2006
  %v2056 = vpack.c.b16 %v2007, %v2007
  %v2057 = vpack.c.b16 %v2008, %v2008
  %v2058 = vpack.c.b16 %v2009, %v2009
  %v2059 = vpack.c.b16 %v2010, %v2010
  %v2060 = vpack.c.b16 %v2011, %v2011
  %v2061 = vpack.c.b16 %v2012, %v2012
  %v2062 = vpack.c.b16 %v2013, %v2013
  %v2063 = vpack.c.b16 %v2014, %v2014
  %v2064 = vpack.c.b16 %v2015, %v2015
  %v2065 = vpack.c.b16 %v2016, %v2016
  %v2066 = vpack.c.b16 %v2017, %v2017
  %v2067 = vpack.c.b16 %v2018, %v2018
  %v2068 = vpack.c.b16 %v2019, %v2019
  %v2069 = vpack.c.b16 %v2020, %v2020
  %v2070 = vpack.c.b16 %v2021, %v2021
  %v2071 = vpack.c.b16 %v2022, %v2022
  %v2072 = vpack.c.b16 %v2023, %v2023
  %v2073 = vpack.c.b16 %v2024, %v2024
  %v2074 = vpack.c.b16 %v2025, %v2025
  %v2075 = vpack.c.b16 %v2026, %v2026
  %v2076 = vpack.c.b16 %v2027, %v2027
  %v2077 = vpack.c.b16 %v2028, %v2028
  %v2078 = vpack.c.b16 %v2029, %v2029
  %v2079 = vpack.c.b16 %v2030, %v2030
  %2129 = vst [vmem:[%s3] sm:$0xf] %v2031
  %2130 = vst [vmem:[%s3 + $0x4] sm:$0xf] %v2032
  %2131 = vst [vmem:[%s3 + $0x8] sm:$0xf] %v2033
  %2132 = vst [vmem:[%s3 + $0xc] sm:$0xf] %v2034
  %2133 = vst [vmem:[%s3 + $0x10] sm:$0xf] %v2035
  %2134 = vst [vmem:[%s3 + $0x14] sm:$0xf] %v2036
  %2135 = vst [vmem:[%s3 + $0x18] sm:$0xf] %v2037
  %2136 = vst [vmem:[%s3 + $0x1c] sm:$0xf] %v2038
  %2137 = vst [vmem:[%s3 + $0x20] sm:$0xf] %v2039
  %2138 = vst [vmem:[%s3 + $0x24] sm:$0xf] %v2040
  %2139 = vst [vmem:[%s3 + $0x28] sm:$0xf] %v2041
  %2140 = vst [vmem:[%s3 + $0x2c] sm:$0xf] %v2042
  %2141 = vst [vmem:[%s3 + $0x30] sm:$0xf] %v2043
  %2142 = vst [vmem:[%s3 + $0x34] sm:$0xf] %v2044
  %2143 = vst [vmem:[%s3 + $0x38] sm:$0xf] %v2045
  %2144 = vst [vmem:[%s3 + $0x3c] sm:$0xf] %v2046
  %2145 = vst [vmem:[%s3 + $0x40] sm:$0xf] %v2047
  %2146 = vst [vmem:[%s3 + $0x44] sm:$0xf] %v2048
  %2147 = vst [vmem:[%s3 + $0x48] sm:$0xf] %v2049
  %2148 = vst [vmem:[%s3 + $0x4c] sm:$0xf] %v2050
  %2149 = vst [vmem:[%s3 + $0x50] sm:$0xf] %v2051
  %2150 = vst [vmem:[%s3 + $0x54] sm:$0xf] %v2052
  %2151 = vst [vmem:[%s3 + $0x58] sm:$0xf] %v2053
  %2152 = vst [vmem:[%s3 + $0x5c] sm:$0xf] %v2054
  %2153 = vst [vmem:[%s3 + $0x60] sm:$0xf] %v2055
  %2154 = vst [vmem:[%s3 + $0x64] sm:$0xf] %v2056
  %2155 = vst [vmem:[%s3 + $0x68] sm:$0xf] %v2057
  %2156 = vst [vmem:[%s3 + $0x6c] sm:$0xf] %v2058
  %2157 = vst [vmem:[%s3 + $0x70] sm:$0xf] %v2059
  %2158 = vst [vmem:[%s3 + $0x74] sm:$0xf] %v2060
  %2159 = vst [vmem:[%s3 + $0x78] sm:$0xf] %v2061
  %2160 = vst [vmem:[%s3 + $0x7c] sm:$0xf] %v2062
  %2161 = vst [vmem:[%s3 + $0x80] sm:$0xf] %v2063
  %2162 = vst [vmem:[%s3 + $0x84] sm:$0xf] %v2064
  %2163 = vst [vmem:[%s3 + $0x88] sm:$0xf] %v2065
  %2164 = vst [vmem:[%s3 + $0x8c] sm:$0xf] %v2066
  %2165 = vst [vmem:[%s3 + $0x90] sm:$0xf] %v2067
  %2166 = vst [vmem:[%s3 + $0x94] sm:$0xf] %v2068
  %2167 = vst [vmem:[%s3 + $0x98] sm:$0xf] %v2069
  %2168 = vst [vmem:[%s3 + $0x9c] sm:$0xf] %v2070
  %2169 = vst [vmem:[%s3 + $0xa0] sm:$0xf] %v2071
  %2170 = vst [vmem:[%s3 + $0xa4] sm:$0xf] %v2072
  %2171 = vst [vmem:[%s3 + $0xa8] sm:$0xf] %v2073
  %2172 = vst [vmem:[%s3 + $0xac] sm:$0xf] %v2074
  %2173 = vst [vmem:[%s3 + $0xb0] sm:$0xf] %v2075
  %2174 = vst [vmem:[%s3 + $0xb4] sm:$0xf] %v2076
  %2175 = vst [vmem:[%s3 + $0xb8] sm:$0xf] %v2077
  %2176 = vst [vmem:[%s3 + $0xbc] sm:$0xf] %v2078
  %2177 = vst [vmem:[%s3 + $0xc0] sm:$0xf] %v2079
  // Predicated region
  $region14: #{_lambda_.2} parent=0 // pred_check
    _
  $region15: #{_lambda_.2} parent=0 // pred_check_branch
    %2179 = sbr.rel (0) target = $region17
  $region16: #{_lambda_.2} parent=0 // pred_region
    _
  $region17: #{_lambda_.2} parent=0 // pred_fallthru
    _
  // Predicated region
  $region18: #{_lambda_.2} parent=0 // pred_check
    _
  $region19: #{_lambda_.2} parent=0 // pred_check_branch
    %2181 = sbr.rel (0) target = $region21
  $region20: #{_lambda_.2} parent=0 // pred_region
    _
  $region21: #{_lambda_.2} parent=0 // pred_fallthru
    _

// kernel: _lambda_.3
$region0: #{_lambda_.3}
  #allocation0 [shape = 'u32[]', space=smem, size = 0x4, offset = 0x4, fixed_abs, tag = 'smem constant byte address 0x4 - core index']
  #allocation1 [shape = 'u32[144,128]{1,0:T(1,128)}', space=vmem, size = 0x12000, scoped, tag = 'internal scratch']
  %s0 = inlined_call_operand.vmem [shape: bf16[800,256], index: 0, kind: input, shape index: {}]
  %s1 = inlined_call_operand.vmem [shape: bf16[256,128], index: 1, kind: input, shape index: {}]
  %s2 = inlined_call_operand.vmem [shape: f32[1,128], index: 2, kind: input, shape index: {}]
  %s3 = inlined_call_operand.vmem [shape: bf16[25,128,128], index: 3, kind: input, shape index: {}]
  %s4 = inlined_call_operand.vmem [shape: f32[1,128], index: 4, kind: input, shape index: {}]
  %s5 = inlined_call_operand.vmem [shape: bf16[128,128], index: 5, kind: input, shape index: {}]
  %s6 = inlined_call_operand.vmem [shape: f32[1,128], index: 6, kind: input, shape index: {}]
  %s7 = inlined_call_operand.vmem [shape: bf16[128,128], index: 7, kind: input, shape index: {}]
  %s8 = inlined_call_operand.vmem [shape: f32[1,128], index: 8, kind: input, shape index: {}]
  %s9 = inlined_call_operand.vmem [shape: f32[8,128], index: 9, kind: output, shape index: {}]
  %s10 = sld [smem:[#allocation0]]
  $region46: #{_lambda_.3} parent=0
    _
  %s12 = ssub.s32 1, %s10
  %s13 = scalar_select 0, %s12, %s10
  // Predicated region
  $region2: #{_lambda_.3} parent=0 // pred_check
    _
  $region3: #{_lambda_.3} parent=0 // pred_check_branch
    %15 = sbr.rel (0) target = $region5
  $region4: #{_lambda_.3} parent=0 // pred_region
    _
  $region5: #{_lambda_.3} parent=0 // pred_fallthru
    _
  // Predicated region
  $region6: #{_lambda_.3} parent=0 // pred_check
    _
  $region7: #{_lambda_.3} parent=0 // pred_check_branch
    %17 = sbr.rel (0) target = $region9
  $region8: #{_lambda_.3} parent=0 // pred_region
    _
  $region9: #{_lambda_.3} parent=0 // pred_fallthru
    _
  // Predicated region
  $region10: #{_lambda_.3} parent=0 // pred_check
    _
  $region11: #{_lambda_.3} parent=0 // pred_check_branch
    %19 = sbr.rel (0) target = $region13
  $region12: #{_lambda_.3} parent=0 // pred_region
    _
  $region13: #{_lambda_.3} parent=0 // pred_fallthru
    _
  // Predicated region
  $region14: #{_lambda_.3} parent=0 // pred_check
    _
  $region15: #{_lambda_.3} parent=0 // pred_check_branch
    %21 = sbr.rel (0) target = $region17
  $region16: #{_lambda_.3} parent=0 // pred_region
    _
  $region17: #{_lambda_.3} parent=0 // pred_fallthru
    _
  // Predicated region
  $region18: #{_lambda_.3} parent=0 // pred_check
    _
  $region19: #{_lambda_.3} parent=0 // pred_check_branch
    %23 = sbr.rel (0) target = $region21
  $region20: #{_lambda_.3} parent=0 // pred_region
    _
  $region21: #{_lambda_.3} parent=0 // pred_fallthru
    _
  // Predicated region
  $region22: #{_lambda_.3} parent=0 // pred_check
    _
  $region23: #{_lambda_.3} parent=0 // pred_check_branch
    %25 = sbr.rel (0) target = $region25
  $region24: #{_lambda_.3} parent=0 // pred_region
    _
  $region25: #{_lambda_.3} parent=0 // pred_fallthru
    _
  // Predicated region
  $region26: #{_lambda_.3} parent=0 // pred_check
    _
  $region27: #{_lambda_.3} parent=0 // pred_check_branch
    %27 = sbr.rel (0) target = $region29
  $region28: #{_lambda_.3} parent=0 // pred_region
    _
  $region29: #{_lambda_.3} parent=0 // pred_fallthru
    _
  // Predicated region
  $region30: #{_lambda_.3} parent=0 // pred_check
    _
  $region31: #{_lambda_.3} parent=0 // pred_check_branch
    %29 = sbr.rel (0) target = $region33
  $region32: #{_lambda_.3} parent=0 // pred_region
    _
  $region33: #{_lambda_.3} parent=0 // pred_fallthru
    _
  // Predicated region
  $region34: #{_lambda_.3} parent=0 // pred_check
    _
  $region35: #{_lambda_.3} parent=0 // pred_check_branch
    %31 = sbr.rel (0) target = $region37
  $region36: #{_lambda_.3} parent=0 // pred_region
    _
  $region37: #{_lambda_.3} parent=0 // pred_fallthru
    _
  %v33 = vld [vmem:[%s0] sm:$0xff]
  %v34 = vld [vmem:[%s0 + $0x8] sm:$0xff]
  %v35 = vld [vmem:[%s0 + $0x10] sm:$0xff]
  %v36 = vld [vmem:[%s0 + $0x18] sm:$0xff]
  %v37 = vld [vmem:[%s0 + $0x20] sm:$0xff]
  %v38 = vld [vmem:[%s0 + $0x28] sm:$0xff]
  %v39 = vld [vmem:[%s0 + $0x30] sm:$0xff]
  %v40 = vld [vmem:[%s0 + $0x38] sm:$0xff]
  %v41 = vld [vmem:[%s0 + $0x40] sm:$0xff]
  %v42 = vld [vmem:[%s0 + $0x48] sm:$0xff]
  %v43 = vld [vmem:[%s0 + $0x50] sm:$0xff]
  %v44 = vld [vmem:[%s0 + $0x58] sm:$0xff]
  %v45 = vld [vmem:[%s0 + $0x60] sm:$0xff]
  %v46 = vld [vmem:[%s0 + $0x68] sm:$0xff]
  %v47 = vld [vmem:[%s0 + $0x70] sm:$0xff]
  %v48 = vld [vmem:[%s0 + $0x78] sm:$0xff]
  %v49 = vld [vmem:[%s0 + $0x80] sm:$0xff]
  %v50 = vld [vmem:[%s0 + $0x88] sm:$0xff]
  %v51 = vld [vmem:[%s0 + $0x90] sm:$0xff]
  %v52 = vld [vmem:[%s0 + $0x98] sm:$0xff]
  %v53 = vld [vmem:[%s0 + $0xa0] sm:$0xff]
  %v54 = vld [vmem:[%s0 + $0xa8] sm:$0xff]
  %v55 = vld [vmem:[%s0 + $0xb0] sm:$0xff]
  %v56 = vld [vmem:[%s0 + $0xb8] sm:$0xff]
  %v57 = vld [vmem:[%s0 + $0xc0] sm:$0xff]
  %v58 = vld [vmem:[%s0 + $0xc8] sm:$0xff]
  %v59 = vld [vmem:[%s0 + $0xd0] sm:$0xff]
  %v60 = vld [vmem:[%s0 + $0xd8] sm:$0xff]
  %v61 = vld [vmem:[%s0 + $0xe0] sm:$0xff]
  %v62 = vld [vmem:[%s0 + $0xe8] sm:$0xff]
  %v63 = vld [vmem:[%s0 + $0xf0] sm:$0xff]
  %v64 = vld [vmem:[%s0 + $0xf8] sm:$0xff]
  %v65 = vld [vmem:[%s0 + $0x100] sm:$0xff]
  %v66 = vld [vmem:[%s0 + $0x108] sm:$0xff]
  %v67 = vld [vmem:[%s0 + $0x110] sm:$0xff]
  %v68 = vld [vmem:[%s0 + $0x118] sm:$0xff]
  %v69 = vld [vmem:[%s0 + $0x120] sm:$0xff]
  %v70 = vld [vmem:[%s0 + $0x128] sm:$0xff]
  %v71 = vld [vmem:[%s0 + $0x130] sm:$0xff]
  %v72 = vld [vmem:[%s0 + $0x138] sm:$0xff]
  %v73 = vld [vmem:[%s0 + $0x140] sm:$0xff]
  %v74 = vld [vmem:[%s0 + $0x148] sm:$0xff]
  %v75 = vld [vmem:[%s0 + $0x150] sm:$0xff]
  %v76 = vld [vmem:[%s0 + $0x158] sm:$0xff]
  %v77 = vld [vmem:[%s0 + $0x160] sm:$0xff]
  %v78 = vld [vmem:[%s0 + $0x168] sm:$0xff]
  %v79 = vld [vmem:[%s0 + $0x170] sm:$0xff]
  %v80 = vld [vmem:[%s0 + $0x178] sm:$0xff]
  %v81 = vld [vmem:[%s0 + $0x180] sm:$0xff]
  %v82 = vld [vmem:[%s0 + $0x188] sm:$0xff]
  %v83 = vld [vmem:[%s0 + $0x190] sm:$0xff]
  %v84 = vld [vmem:[%s0 + $0x198] sm:$0xff]
  %v85 = vld [vmem:[%s0 + $0x1a0] sm:$0xff]
  %v86 = vld [vmem:[%s0 + $0x1a8] sm:$0xff]
  %v87 = vld [vmem:[%s0 + $0x1b0] sm:$0xff]
  %v88 = vld [vmem:[%s0 + $0x1b8] sm:$0xff]
  %v89 = vld [vmem:[%s0 + $0x1c0] sm:$0xff]
  %v90 = vld [vmem:[%s0 + $0x1c8] sm:$0xff]
  %v91 = vld [vmem:[%s0 + $0x1d0] sm:$0xff]
  %v92 = vld [vmem:[%s0 + $0x1d8] sm:$0xff]
  %v93 = vld [vmem:[%s0 + $0x1e0] sm:$0xff]
  %v94 = vld [vmem:[%s0 + $0x1e8] sm:$0xff]
  %v95 = vld [vmem:[%s0 + $0x1f0] sm:$0xff]
  %v96 = vld [vmem:[%s0 + $0x1f8] sm:$0xff]
  %v97 = vld [vmem:[%s0 + $0x200] sm:$0xff]
  %v98 = vld [vmem:[%s0 + $0x208] sm:$0xff]
  %v99 = vld [vmem:[%s0 + $0x210] sm:$0xff]
  %v100 = vld [vmem:[%s0 + $0x218] sm:$0xff]
  %v101 = vld [vmem:[%s0 + $0x220] sm:$0xff]
  %v102 = vld [vmem:[%s0 + $0x228] sm:$0xff]
  %v103 = vld [vmem:[%s0 + $0x230] sm:$0xff]
  %v104 = vld [vmem:[%s0 + $0x238] sm:$0xff]
  %v105 = vld [vmem:[%s0 + $0x240] sm:$0xff]
  %v106 = vld [vmem:[%s0 + $0x248] sm:$0xff]
  %v107 = vld [vmem:[%s0 + $0x250] sm:$0xff]
  %v108 = vld [vmem:[%s0 + $0x258] sm:$0xff]
  %v109 = vld [vmem:[%s0 + $0x260] sm:$0xff]
  %v110 = vld [vmem:[%s0 + $0x268] sm:$0xff]
  %v111 = vld [vmem:[%s0 + $0x270] sm:$0xff]
  %v112 = vld [vmem:[%s0 + $0x278] sm:$0xff]
  %v113 = vld [vmem:[%s0 + $0x280] sm:$0xff]
  %v114 = vld [vmem:[%s0 + $0x288] sm:$0xff]
  %v115 = vld [vmem:[%s0 + $0x290] sm:$0xff]
  %v116 = vld [vmem:[%s0 + $0x298] sm:$0xff]
  %v117 = vld [vmem:[%s0 + $0x2a0] sm:$0xff]
  %v118 = vld [vmem:[%s0 + $0x2a8] sm:$0xff]
  %v119 = vld [vmem:[%s0 + $0x2b0] sm:$0xff]
  %v120 = vld [vmem:[%s0 + $0x2b8] sm:$0xff]
  %v121 = vld [vmem:[%s0 + $0x2c0] sm:$0xff]
  %v122 = vld [vmem:[%s0 + $0x2c8] sm:$0xff]
  %v123 = vld [vmem:[%s0 + $0x2d0] sm:$0xff]
  %v124 = vld [vmem:[%s0 + $0x2d8] sm:$0xff]
  %v125 = vld [vmem:[%s0 + $0x2e0] sm:$0xff]
  %v126 = vld [vmem:[%s0 + $0x2e8] sm:$0xff]
  %v127 = vld [vmem:[%s0 + $0x2f0] sm:$0xff]
  %v128 = vld [vmem:[%s0 + $0x2f8] sm:$0xff]
  %v129 = vld [vmem:[%s0 + $0x300] sm:$0xff]
  %v130 = vld [vmem:[%s0 + $0x308] sm:$0xff]
  %v131 = vld [vmem:[%s0 + $0x310] sm:$0xff]
  %v132 = vld [vmem:[%s0 + $0x318] sm:$0xff]
  %v133 = vld [vmem:[%s1] sm:$0xf]
  %v134 = vld [vmem:[%s1 + $0x4] sm:$0xf]
  %v135 = vld [vmem:[%s1 + $0x8] sm:$0xf]
  %v136 = vld [vmem:[%s1 + $0xc] sm:$0xf]
  %v137 = vld [vmem:[%s1 + $0x10] sm:$0xf]
  %v138 = vld [vmem:[%s1 + $0x14] sm:$0xf]
  %v139 = vld [vmem:[%s1 + $0x18] sm:$0xf]
  %v140 = vld [vmem:[%s1 + $0x1c] sm:$0xf]
  %v141 = vld [vmem:[%s1 + $0x20] sm:$0xf]
  %v142 = vld [vmem:[%s1 + $0x24] sm:$0xf]
  %v143 = vld [vmem:[%s1 + $0x28] sm:$0xf]
  %v144 = vld [vmem:[%s1 + $0x2c] sm:$0xf]
  %v145 = vld [vmem:[%s1 + $0x30] sm:$0xf]
  %v146 = vld [vmem:[%s1 + $0x34] sm:$0xf]
  %v147 = vld [vmem:[%s1 + $0x38] sm:$0xf]
  %v148 = vld [vmem:[%s1 + $0x3c] sm:$0xf]
  %v149 = vld [vmem:[%s1 + $0x40] sm:$0xf]
  %v150 = vld [vmem:[%s1 + $0x44] sm:$0xf]
  %v151 = vld [vmem:[%s1 + $0x48] sm:$0xf]
  %v152 = vld [vmem:[%s1 + $0x4c] sm:$0xf]
  %v153 = vld [vmem:[%s1 + $0x50] sm:$0xf]
  %v154 = vld [vmem:[%s1 + $0x54] sm:$0xf]
  %v155 = vld [vmem:[%s1 + $0x58] sm:$0xf]
  %v156 = vld [vmem:[%s1 + $0x5c] sm:$0xf]
  %v157 = vld [vmem:[%s1 + $0x60] sm:$0xf]
  %v158 = vld [vmem:[%s1 + $0x64] sm:$0xf]
  %v159 = vld [vmem:[%s1 + $0x68] sm:$0xf]
  %v160 = vld [vmem:[%s1 + $0x6c] sm:$0xf]
  %v161 = vld [vmem:[%s1 + $0x70] sm:$0xf]
  %v162 = vld [vmem:[%s1 + $0x74] sm:$0xf]
  %v163 = vld [vmem:[%s1 + $0x78] sm:$0xf]
  %v164 = vld [vmem:[%s1 + $0x7c] sm:$0xf]
  %v265 = vunpack.c.l.b16 %v33
  %v266 = vunpack.c.h.b16 %v33
  %v267 = vunpack.c.l.b16 %v34
  %v268 = vunpack.c.h.b16 %v34
  %v269 = vunpack.c.l.b16 %v35
  %v270 = vunpack.c.h.b16 %v35
  %v271 = vunpack.c.l.b16 %v36
  %v272 = vunpack.c.h.b16 %v36
  %v273 = vunpack.c.l.b16 %v37
  %v274 = vunpack.c.h.b16 %v37
  %v275 = vunpack.c.l.b16 %v38
  %v276 = vunpack.c.h.b16 %v38
  %v277 = vunpack.c.l.b16 %v39
  %v278 = vunpack.c.h.b16 %v39
  %v279 = vunpack.c.l.b16 %v40
  %v280 = vunpack.c.h.b16 %v40
  %v281 = vunpack.c.l.b16 %v41
  %v282 = vunpack.c.h.b16 %v41
  %v283 = vunpack.c.l.b16 %v42
  %v284 = vunpack.c.h.b16 %v42
  %v285 = vunpack.c.l.b16 %v43
  %v286 = vunpack.c.h.b16 %v43
  %v287 = vunpack.c.l.b16 %v44
  %v288 = vunpack.c.h.b16 %v44
  %v289 = vunpack.c.l.b16 %v45
  %v290 = vunpack.c.h.b16 %v45
  %v291 = vunpack.c.l.b16 %v46
  %v292 = vunpack.c.h.b16 %v46
  %v293 = vunpack.c.l.b16 %v47
  %v294 = vunpack.c.h.b16 %v47
  %v295 = vunpack.c.l.b16 %v48
  %v296 = vunpack.c.h.b16 %v48
  %v297 = vunpack.c.l.b16 %v49
  %v298 = vunpack.c.h.b16 %v49
  %v299 = vunpack.c.l.b16 %v50
  %v300 = vunpack.c.h.b16 %v50
  %v301 = vunpack.c.l.b16 %v51
  %v302 = vunpack.c.h.b16 %v51
  %v303 = vunpack.c.l.b16 %v52
  %v304 = vunpack.c.h.b16 %v52
  %v305 = vunpack.c.l.b16 %v53
  %v306 = vunpack.c.h.b16 %v53
  %v307 = vunpack.c.l.b16 %v54
  %v308 = vunpack.c.h.b16 %v54
  %v309 = vunpack.c.l.b16 %v55
  %v310 = vunpack.c.h.b16 %v55
  %v311 = vunpack.c.l.b16 %v56
  %v312 = vunpack.c.h.b16 %v56
  %v313 = vunpack.c.l.b16 %v57
  %v314 = vunpack.c.h.b16 %v57
  %v315 = vunpack.c.l.b16 %v58
  %v316 = vunpack.c.h.b16 %v58
  %v317 = vunpack.c.l.b16 %v59
  %v318 = vunpack.c.h.b16 %v59
  %v319 = vunpack.c.l.b16 %v60
  %v320 = vunpack.c.h.b16 %v60
  %v321 = vunpack.c.l.b16 %v61
  %v322 = vunpack.c.h.b16 %v61
  %v323 = vunpack.c.l.b16 %v62
  %v324 = vunpack.c.h.b16 %v62
  %v325 = vunpack.c.l.b16 %v63
  %v326 = vunpack.c.h.b16 %v63
  %v327 = vunpack.c.l.b16 %v64
  %v328 = vunpack.c.h.b16 %v64
  %v329 = vunpack.c.l.b16 %v65
  %v330 = vunpack.c.h.b16 %v65
  %v331 = vunpack.c.l.b16 %v66
  %v332 = vunpack.c.h.b16 %v66
  %v333 = vunpack.c.l.b16 %v67
  %v334 = vunpack.c.h.b16 %v67
  %v335 = vunpack.c.l.b16 %v68
  %v336 = vunpack.c.h.b16 %v68
  %v337 = vunpack.c.l.b16 %v69
  %v338 = vunpack.c.h.b16 %v69
  %v339 = vunpack.c.l.b16 %v70
  %v340 = vunpack.c.h.b16 %v70
  %v341 = vunpack.c.l.b16 %v71
  %v342 = vunpack.c.h.b16 %v71
  %v343 = vunpack.c.l.b16 %v72
  %v344 = vunpack.c.h.b16 %v72
  %v345 = vunpack.c.l.b16 %v73
  %v346 = vunpack.c.h.b16 %v73
  %v347 = vunpack.c.l.b16 %v74
  %v348 = vunpack.c.h.b16 %v74
  %v349 = vunpack.c.l.b16 %v75
  %v350 = vunpack.c.h.b16 %v75
  %v351 = vunpack.c.l.b16 %v76
  %v352 = vunpack.c.h.b16 %v76
  %v353 = vunpack.c.l.b16 %v77
  %v354 = vunpack.c.h.b16 %v77
  %v355 = vunpack.c.l.b16 %v78
  %v356 = vunpack.c.h.b16 %v78
  %v357 = vunpack.c.l.b16 %v79
  %v358 = vunpack.c.h.b16 %v79
  %v359 = vunpack.c.l.b16 %v80
  %v360 = vunpack.c.h.b16 %v80
  %v361 = vunpack.c.l.b16 %v81
  %v362 = vunpack.c.h.b16 %v81
  %v363 = vunpack.c.l.b16 %v82
  %v364 = vunpack.c.h.b16 %v82
  %v365 = vunpack.c.l.b16 %v83
  %v366 = vunpack.c.h.b16 %v83
  %v367 = vunpack.c.l.b16 %v84
  %v368 = vunpack.c.h.b16 %v84
  %v369 = vunpack.c.l.b16 %v85
  %v370 = vunpack.c.h.b16 %v85
  %v371 = vunpack.c.l.b16 %v86
  %v372 = vunpack.c.h.b16 %v86
  %v373 = vunpack.c.l.b16 %v87
  %v374 = vunpack.c.h.b16 %v87
  %v375 = vunpack.c.l.b16 %v88
  %v376 = vunpack.c.h.b16 %v88
  %v377 = vunpack.c.l.b16 %v89
  %v378 = vunpack.c.h.b16 %v89
  %v379 = vunpack.c.l.b16 %v90
  %v380 = vunpack.c.h.b16 %v90
  %v381 = vunpack.c.l.b16 %v91
  %v382 = vunpack.c.h.b16 %v91
  %v383 = vunpack.c.l.b16 %v92
  %v384 = vunpack.c.h.b16 %v92
  %v385 = vunpack.c.l.b16 %v93
  %v386 = vunpack.c.h.b16 %v93
  %v387 = vunpack.c.l.b16 %v94
  %v388 = vunpack.c.h.b16 %v94
  %v389 = vunpack.c.l.b16 %v95
  %v390 = vunpack.c.h.b16 %v95
  %v391 = vunpack.c.l.b16 %v96
  %v392 = vunpack.c.h.b16 %v96
  %v393 = vunpack.c.l.b16 %v97
  %v394 = vunpack.c.h.b16 %v97
  %v395 = vunpack.c.l.b16 %v98
  %v396 = vunpack.c.h.b16 %v98
  %v397 = vunpack.c.l.b16 %v99
  %v398 = vunpack.c.h.b16 %v99
  %v399 = vunpack.c.l.b16 %v100
  %v400 = vunpack.c.h.b16 %v100
  %v401 = vunpack.c.l.b16 %v101
  %v402 = vunpack.c.h.b16 %v101
  %v403 = vunpack.c.l.b16 %v102
  %v404 = vunpack.c.h.b16 %v102
  %v405 = vunpack.c.l.b16 %v103
  %v406 = vunpack.c.h.b16 %v103
  %v407 = vunpack.c.l.b16 %v104
  %v408 = vunpack.c.h.b16 %v104
  %v409 = vunpack.c.l.b16 %v105
  %v410 = vunpack.c.h.b16 %v105
  %v411 = vunpack.c.l.b16 %v106
  %v412 = vunpack.c.h.b16 %v106
  %v413 = vunpack.c.l.b16 %v107
  %v414 = vunpack.c.h.b16 %v107
  %v415 = vunpack.c.l.b16 %v108
  %v416 = vunpack.c.h.b16 %v108
  %v417 = vunpack.c.l.b16 %v109
  %v418 = vunpack.c.h.b16 %v109
  %v419 = vunpack.c.l.b16 %v110
  %v420 = vunpack.c.h.b16 %v110
  %v421 = vunpack.c.l.b16 %v111
  %v422 = vunpack.c.h.b16 %v111
  %v423 = vunpack.c.l.b16 %v112
  %v424 = vunpack.c.h.b16 %v112
  %v425 = vunpack.c.l.b16 %v113
  %v426 = vunpack.c.h.b16 %v113
  %v427 = vunpack.c.l.b16 %v114
  %v428 = vunpack.c.h.b16 %v114
  %v429 = vunpack.c.l.b16 %v115
  %v430 = vunpack.c.h.b16 %v115
  %v431 = vunpack.c.l.b16 %v116
  %v432 = vunpack.c.h.b16 %v116
  %v433 = vunpack.c.l.b16 %v117
  %v434 = vunpack.c.h.b16 %v117
  %v435 = vunpack.c.l.b16 %v118
  %v436 = vunpack.c.h.b16 %v118
  %v437 = vunpack.c.l.b16 %v119
  %v438 = vunpack.c.h.b16 %v119
  %v439 = vunpack.c.l.b16 %v120
  %v440 = vunpack.c.h.b16 %v120
  %v441 = vunpack.c.l.b16 %v121
  %v442 = vunpack.c.h.b16 %v121
  %v443 = vunpack.c.l.b16 %v122
  %v444 = vunpack.c.h.b16 %v122
  %v445 = vunpack.c.l.b16 %v123
  %v446 = vunpack.c.h.b16 %v123
  %v447 = vunpack.c.l.b16 %v124
  %v448 = vunpack.c.h.b16 %v124
  %v449 = vunpack.c.l.b16 %v125
  %v450 = vunpack.c.h.b16 %v125
  %v451 = vunpack.c.l.b16 %v126
  %v452 = vunpack.c.h.b16 %v126
  %v453 = vunpack.c.l.b16 %v127
  %v454 = vunpack.c.h.b16 %v127
  %v455 = vunpack.c.l.b16 %v128
  %v456 = vunpack.c.h.b16 %v128
  %v457 = vunpack.c.l.b16 %v129
  %v458 = vunpack.c.h.b16 %v129
  %v459 = vunpack.c.l.b16 %v130
  %v460 = vunpack.c.h.b16 %v130
  %v461 = vunpack.c.l.b16 %v131
  %v462 = vunpack.c.h.b16 %v131
  %v463 = vunpack.c.l.b16 %v132
  %v464 = vunpack.c.h.b16 %v132
  %v465 = vpack.c.b16 %v267, %v265
  %v466 = vpack.c.b16 %v268, %v266
  %v467 = vpack.c.b16 %v271, %v269
  %v468 = vpack.c.b16 %v272, %v270
  %v469 = vpack.c.b16 %v275, %v273
  %v470 = vpack.c.b16 %v276, %v274
  %v471 = vpack.c.b16 %v279, %v277
  %v472 = vpack.c.b16 %v280, %v278
  %v473 = vpack.c.b16 %v283, %v281
  %v474 = vpack.c.b16 %v284, %v282
  %v475 = vpack.c.b16 %v287, %v285
  %v476 = vpack.c.b16 %v288, %v286
  %v477 = vpack.c.b16 %v291, %v289
  %v478 = vpack.c.b16 %v292, %v290
  %v479 = vpack.c.b16 %v295, %v293
  %v480 = vpack.c.b16 %v296, %v294
  %v481 = vpack.c.b16 %v299, %v297
  %v482 = vpack.c.b16 %v300, %v298
  %v483 = vpack.c.b16 %v303, %v301
  %v484 = vpack.c.b16 %v304, %v302
  %v485 = vpack.c.b16 %v307, %v305
  %v486 = vpack.c.b16 %v308, %v306
  %v487 = vpack.c.b16 %v311, %v309
  %v488 = vpack.c.b16 %v312, %v310
  %v489 = vpack.c.b16 %v315, %v313
  %v490 = vpack.c.b16 %v316, %v314
  %v491 = vpack.c.b16 %v319, %v317
  %v492 = vpack.c.b16 %v320, %v318
  %v493 = vpack.c.b16 %v323, %v321
  %v494 = vpack.c.b16 %v324, %v322
  %v495 = vpack.c.b16 %v327, %v325
  %v496 = vpack.c.b16 %v328, %v326
  %v497 = vpack.c.b16 %v331, %v329
  %v498 = vpack.c.b16 %v332, %v330
  %v499 = vpack.c.b16 %v335, %v333
  %v500 = vpack.c.b16 %v336, %v334
  %v501 = vpack.c.b16 %v339, %v337
  %v502 = vpack.c.b16 %v340, %v338
  %v503 = vpack.c.b16 %v343, %v341
  %v504 = vpack.c.b16 %v344, %v342
  %v505 = vpack.c.b16 %v347, %v345
  %v506 = vpack.c.b16 %v348, %v346
  %v507 = vpack.c.b16 %v351, %v349
  %v508 = vpack.c.b16 %v352, %v350
  %v509 = vpack.c.b16 %v355, %v353
  %v510 = vpack.c.b16 %v356, %v354
  %v511 = vpack.c.b16 %v359, %v357
  %v512 = vpack.c.b16 %v360, %v358
  %v513 = vpack.c.b16 %v363, %v361
  %v514 = vpack.c.b16 %v364, %v362
  %v515 = vpack.c.b16 %v367, %v365
  %v516 = vpack.c.b16 %v368, %v366
  %v517 = vpack.c.b16 %v371, %v369
  %v518 = vpack.c.b16 %v372, %v370
  %v519 = vpack.c.b16 %v375, %v373
  %v520 = vpack.c.b16 %v376, %v374
  %v521 = vpack.c.b16 %v379, %v377
  %v522 = vpack.c.b16 %v380, %v378
  %v523 = vpack.c.b16 %v383, %v381
  %v524 = vpack.c.b16 %v384, %v382
  %v525 = vpack.c.b16 %v387, %v385
  %v526 = vpack.c.b16 %v388, %v386
  %v527 = vpack.c.b16 %v391, %v389
  %v528 = vpack.c.b16 %v392, %v390
  %v529 = vpack.c.b16 %v395, %v393
  %v530 = vpack.c.b16 %v396, %v394
  %v531 = vpack.c.b16 %v399, %v397
  %v532 = vpack.c.b16 %v400, %v398
  %v533 = vpack.c.b16 %v403, %v401
  %v534 = vpack.c.b16 %v404, %v402
  %v535 = vpack.c.b16 %v407, %v405
  %v536 = vpack.c.b16 %v408, %v406
  %v537 = vpack.c.b16 %v411, %v409
  %v538 = vpack.c.b16 %v412, %v410
  %v539 = vpack.c.b16 %v415, %v413
  %v540 = vpack.c.b16 %v416, %v414
  %v541 = vpack.c.b16 %v419, %v417
  %v542 = vpack.c.b16 %v420, %v418
  %v543 = vpack.c.b16 %v423, %v421
  %v544 = vpack.c.b16 %v424, %v422
  %v545 = vpack.c.b16 %v427, %v425
  %v546 = vpack.c.b16 %v428, %v426
  %v547 = vpack.c.b16 %v431, %v429
  %v548 = vpack.c.b16 %v432, %v430
  %v549 = vpack.c.b16 %v435, %v433
  %v550 = vpack.c.b16 %v436, %v434
  %v551 = vpack.c.b16 %v439, %v437
  %v552 = vpack.c.b16 %v440, %v438
  %v553 = vpack.c.b16 %v443, %v441
  %v554 = vpack.c.b16 %v444, %v442
  %v555 = vpack.c.b16 %v447, %v445
  %v556 = vpack.c.b16 %v448, %v446
  %v557 = vpack.c.b16 %v451, %v449
  %v558 = vpack.c.b16 %v452, %v450
  %v559 = vpack.c.b16 %v455, %v453
  %v560 = vpack.c.b16 %v456, %v454
  %v561 = vpack.c.b16 %v459, %v457
  %v562 = vpack.c.b16 %v460, %v458
  %v563 = vpack.c.b16 %v463, %v461
  %v564 = vpack.c.b16 %v464, %v462
  %v697 = vunpack.c.l.b16 %v133
  %v698 = vunpack.c.l.b16 %v134
  %v699 = vunpack.c.l.b16 %v135
  %v700 = vunpack.c.l.b16 %v136
  %v701 = vunpack.c.l.b16 %v137
  %v702 = vunpack.c.l.b16 %v138
  %v703 = vunpack.c.l.b16 %v139
  %v704 = vunpack.c.l.b16 %v140
  %v705 = vunpack.c.l.b16 %v141
  %v706 = vunpack.c.l.b16 %v142
  %v707 = vunpack.c.l.b16 %v143
  %v708 = vunpack.c.l.b16 %v144
  %v709 = vunpack.c.l.b16 %v145
  %v710 = vunpack.c.l.b16 %v146
  %v711 = vunpack.c.l.b16 %v147
  %v712 = vunpack.c.l.b16 %v148
  %v713 = vunpack.c.l.b16 %v149
  %v714 = vunpack.c.l.b16 %v150
  %v715 = vunpack.c.l.b16 %v151
  %v716 = vunpack.c.l.b16 %v152
  %v717 = vunpack.c.l.b16 %v153
  %v718 = vunpack.c.l.b16 %v154
  %v719 = vunpack.c.l.b16 %v155
  %v720 = vunpack.c.l.b16 %v156
  %v721 = vunpack.c.l.b16 %v157
  %v722 = vunpack.c.l.b16 %v158
  %v723 = vunpack.c.l.b16 %v159
  %v724 = vunpack.c.l.b16 %v160
  %v725 = vunpack.c.l.b16 %v161
  %v726 = vunpack.c.l.b16 %v162
  %v727 = vunpack.c.l.b16 %v163
  %v728 = vunpack.c.l.b16 %v164
  %v729 = vpack.c.b16 %v698, %v697
  %v730 = vpack.c.b16 %v700, %v699
  %v731 = vpack.c.b16 %v702, %v701
  %v732 = vpack.c.b16 %v704, %v703
  %v733 = vpack.c.b16 %v706, %v705
  %v734 = vpack.c.b16 %v708, %v707
  %v735 = vpack.c.b16 %v710, %v709
  %v736 = vpack.c.b16 %v712, %v711
  %v737 = vpack.c.b16 %v714, %v713
  %v738 = vpack.c.b16 %v716, %v715
  %v739 = vpack.c.b16 %v718, %v717
  %v740 = vpack.c.b16 %v720, %v719
  %v741 = vpack.c.b16 %v722, %v721
  %v742 = vpack.c.b16 %v724, %v723
  %v743 = vpack.c.b16 %v726, %v725
  %v744 = vpack.c.b16 %v728, %v727
  %761 = vmatprep.subr.bf16.mxu0 0
  %762 = vmatpush1.bf16.msra.mxu0 %v729
  %763 = vmatprep.subr.bf16.mxu0 0
  %764 = vmatpush1.bf16.msra.mxu0 %v730
  %765 = vmatprep.subr.bf16.mxu0 0
  %766 = vmatpush1.bf16.msra.mxu0 %v731
  %767 = vmatprep.subr.bf16.mxu0 0
  %768 = vmatpush1.bf16.msra.mxu0 %v732
  %769 = vmatprep.subr.bf16.mxu0 0
  %770 = vmatpush1.bf16.msra.mxu0 %v733
  %771 = vmatprep.subr.bf16.mxu0 0
  %772 = vmatpush1.bf16.msra.mxu0 %v734
  %773 = vmatprep.subr.bf16.mxu0 0
  %774 = vmatpush1.bf16.msra.mxu0 %v735
  %775 = vmatprep.subr.bf16.mxu0 0
  %776 = vmatpush1.bf16.msra.mxu0 %v736
  %777 = vmatprep.subr.bf16.mxu0 0
  %778 = vmatpush1.bf16.msra.mxu0 %v737
  %779 = vmatprep.subr.bf16.mxu0 0
  %780 = vmatpush1.bf16.msra.mxu0 %v738
  %781 = vmatprep.subr.bf16.mxu0 0
  %782 = vmatpush1.bf16.msra.mxu0 %v739
  %783 = vmatprep.subr.bf16.mxu0 0
  %784 = vmatpush1.bf16.msra.mxu0 %v740
  %785 = vmatprep.subr.bf16.mxu0 0
  %786 = vmatpush1.bf16.msra.mxu0 %v741
  %787 = vmatprep.subr.bf16.mxu0 0
  %788 = vmatpush1.bf16.msra.mxu0 %v742
  %789 = vmatprep.subr.bf16.mxu0 0
  %790 = vmatpush1.bf16.msra.mxu0 %v743
  %791 = vmatprep.subr.bf16.mxu0 0
  %792 = vmatpush1.bf16.msra.mxu0 %v744
  %793 = vmatprep.mubr.bf16.mxu0 %v466
  %794 = vmatmul.mubr.bf16.gmra.mrb[0].mxu0 %v465
  %v795 = vpop.f32.mrb[0].mxu0
  %v796 = vadd.f32 0.0, %v795
  %v797 = vpop.f32.mrb[0].mxu0
  %v798 = vpop.f32.mrb[0].mxu0
  %v799 = vadd.f32 0.0, %v798
  %v800 = vpop.f32.mrb[0].mxu0
  %801 = vmatprep.mubr.bf16.mxu0 %v468
  %802 = vmatmul.mubr.bf16.gmra.mrb[0].mxu0 %v467
  %v803 = vpop.f32.mrb[0].mxu0
  %v804 = vadd.f32 0.0, %v803
  %v805 = vpop.f32.mrb[0].mxu0
  %v806 = vpop.f32.mrb[0].mxu0
  %v807 = vadd.f32 0.0, %v806
  %v808 = vpop.f32.mrb[0].mxu0
  %809 = vmatprep.mubr.bf16.mxu0 %v470
  %810 = vmatmul.mubr.bf16.gmra.mrb[0].mxu0 %v469
  %v811 = vpop.f32.mrb[0].mxu0
  %v812 = vadd.f32 0.0, %v811
  %v813 = vpop.f32.mrb[0].mxu0
  %v814 = vpop.f32.mrb[0].mxu0
  %v815 = vadd.f32 0.0, %v814
  %v816 = vpop.f32.mrb[0].mxu0
  %817 = vmatprep.mubr.bf16.mxu0 %v472
  %818 = vmatmul.mubr.bf16.gmra.mrb[0].mxu0 %v471
  %v819 = vpop.f32.mrb[0].mxu0
  %v820 = vadd.f32 0.0, %v819
  %v821 = vpop.f32.mrb[0].mxu0
  %v822 = vpop.f32.mrb[0].mxu0
  %v823 = vadd.f32 0.0, %v822
  %v824 = vpop.f32.mrb[0].mxu0
  %825 = vmatprep.mubr.bf16.mxu0 %v474
  %826 = vmatmul.mubr.bf16.gmra.mrb[0].mxu0 %v473
  %v827 = vpop.f32.mrb[0].mxu0
  %v828 = vadd.f32 0.0, %v827
  %v829 = vpop.f32.mrb[0].mxu0
  %v830 = vpop.f32.mrb[0].mxu0
  %v831 = vadd.f32 0.0, %v830
  %v832 = vpop.f32.mrb[0].mxu0
  %833 = vmatprep.mubr.bf16.mxu0 %v476
  %834 = vmatmul.mubr.bf16.gmra.mrb[0].mxu0 %v475
  %v835 = vpop.f32.mrb[0].mxu0
  %v836 = vadd.f32 0.0, %v835
  %v837 = vpop.f32.mrb[0].mxu0
  %v838 = vpop.f32.mrb[0].mxu0
  %v839 = vadd.f32 0.0, %v838
  %v840 = vpop.f32.mrb[0].mxu0
  %841 = vmatprep.mubr.bf16.mxu0 %v478
  %842 = vmatmul.mubr.bf16.gmra.mrb[0].mxu0 %v477
  %v843 = vpop.f32.mrb[0].mxu0
  %v844 = vadd.f32 0.0, %v843
  %v845 = vpop.f32.mrb[0].mxu0
  %v846 = vpop.f32.mrb[0].mxu0
  %v847 = vadd.f32 0.0, %v846
  %v848 = vpop.f32.mrb[0].mxu0
  %849 = vmatprep.mubr.bf16.mxu0 %v480
  %850 = vmatmul.mubr.bf16.gmra.mrb[0].mxu0 %v479
  %v851 = vpop.f32.mrb[0].mxu0
  %v852 = vadd.f32 0.0, %v851
  %v853 = vpop.f32.mrb[0].mxu0
  %v854 = vpop.f32.mrb[0].mxu0
  %v855 = vadd.f32 0.0, %v854
  %v856 = vpop.f32.mrb[0].mxu0
  %857 = vmatprep.mubr.bf16.mxu0 %v482
  %858 = vmatmul.mubr.bf16.gmra.mrb[0].mxu0 %v481
  %v859 = vpop.f32.mrb[0].mxu0
  %v860 = vadd.f32 0.0, %v859
  %v861 = vpop.f32.mrb[0].mxu0
  %v862 = vpop.f32.mrb[0].mxu0
  %v863 = vadd.f32 0.0, %v862
  %v864 = vpop.f32.mrb[0].mxu0
  %865 = vmatprep.mubr.bf16.mxu0 %v484
  %866 = vmatmul.mubr.bf16.gmra.mrb[0].mxu0 %v483
  %v867 = vpop.f32.mrb[0].mxu0
  %v868 = vadd.f32 0.0, %v867
  %v869 = vpop.f32.mrb[0].mxu0
  %v870 = vpop.f32.mrb[0].mxu0
  %v871 = vadd.f32 0.0, %v870
  %v872 = vpop.f32.mrb[0].mxu0
  %873 = vmatprep.mubr.bf16.mxu0 %v486
  %874 = vmatmul.mubr.bf16.gmra.mrb[0].mxu0 %v485
  %v875 = vpop.f32.mrb[0].mxu0
  %v876 = vadd.f32 0.0, %v875
  %v877 = vpop.f32.mrb[0].mxu0
  %v878 = vpop.f32.mrb[0].mxu0
  %v879 = vadd.f32 0.0, %v878
  %v880 = vpop.f32.mrb[0].mxu0
  %881 = vmatprep.mubr.bf16.mxu0 %v488
  %882 = vmatmul.mubr.bf16.gmra.mrb[0].mxu0 %v487
  %v883 = vpop.f32.mrb[0].mxu0
  %v884 = vadd.f32 0.0, %v883
  %v885 = vpop.f32.mrb[0].mxu0
  %v886 = vpop.f32.mrb[0].mxu0
  %v887 = vadd.f32 0.0, %v886
  %v888 = vpop.f32.mrb[0].mxu0
  %889 = vmatprep.mubr.bf16.mxu0 %v490
  %890 = vmatmul.mubr.bf16.gmra.mrb[0].mxu0 %v489
  %v891 = vpop.f32.mrb[0].mxu0
  %v892 = vadd.f32 0.0, %v891
  %v893 = vpop.f32.mrb[0].mxu0
  %v894 = vpop.f32.mrb[0].mxu0
  %v895 = vadd.f32 0.0, %v894
  %v896 = vpop.f32.mrb[0].mxu0
  %897 = vmatprep.mubr.bf16.mxu0 %v492
  %898 = vmatmul.mubr.bf16.gmra.mrb[0].mxu0 %v491
  %v899 = vpop.f32.mrb[0].mxu0
  %v900 = vadd.f32 0.0, %v899
  %v901 = vpop.f32.mrb[0].mxu0
  %v902 = vpop.f32.mrb[0].mxu0
  %v903 = vadd.f32 0.0, %v902
  %v904 = vpop.f32.mrb[0].mxu0
  %905 = vmatprep.mubr.bf16.mxu0 %v494
  %906 = vmatmul.mubr.bf16.gmra.mrb[0].mxu0 %v493
  %v907 = vpop.f32.mrb[0].mxu0
  %v908 = vadd.f32 0.0, %v907
  %v909 = vpop.f32.mrb[0].mxu0
  %v910 = vpop.f32.mrb[0].mxu0
  %v911 = vadd.f32 0.0, %v910
  %v912 = vpop.f32.mrb[0].mxu0
  %913 = vmatprep.mubr.bf16.mxu0 %v496
  %914 = vmatmul.mubr.bf16.gmra.mrb[0].mxu0 %v495
  %v915 = vpop.f32.mrb[0].mxu0
  %v916 = vadd.f32 0.0, %v915
  %v917 = vpop.f32.mrb[0].mxu0
  %v918 = vpop.f32.mrb[0].mxu0
  %v919 = vadd.f32 0.0, %v918
  %v920 = vpop.f32.mrb[0].mxu0
  %921 = vmatprep.mubr.bf16.mxu0 %v498
  %922 = vmatmul.mubr.bf16.gmra.mrb[0].mxu0 %v497
  %v923 = vpop.f32.mrb[0].mxu0
  %v924 = vadd.f32 0.0, %v923
  %v925 = vpop.f32.mrb[0].mxu0
  %v926 = vpop.f32.mrb[0].mxu0
  %v927 = vadd.f32 0.0, %v926
  %v928 = vpop.f32.mrb[0].mxu0
  %929 = vmatprep.mubr.bf16.mxu0 %v500
  %930 = vmatmul.mubr.bf16.gmra.mrb[0].mxu0 %v499
  %v931 = vpop.f32.mrb[0].mxu0
  %v932 = vadd.f32 0.0, %v931
  %v933 = vpop.f32.mrb[0].mxu0
  %v934 = vpop.f32.mrb[0].mxu0
  %v935 = vadd.f32 0.0, %v934
  %v936 = vpop.f32.mrb[0].mxu0
  %937 = vmatprep.mubr.bf16.mxu0 %v502
  %938 = vmatmul.mubr.bf16.gmra.mrb[0].mxu0 %v501
  %v939 = vpop.f32.mrb[0].mxu0
  %v940 = vadd.f32 0.0, %v939
  %v941 = vpop.f32.mrb[0].mxu0
  %v942 = vpop.f32.mrb[0].mxu0
  %v943 = vadd.f32 0.0, %v942
  %v944 = vpop.f32.mrb[0].mxu0
  %945 = vmatprep.mubr.bf16.mxu0 %v504
  %946 = vmatmul.mubr.bf16.gmra.mrb[0].mxu0 %v503
  %v947 = vpop.f32.mrb[0].mxu0
  %v948 = vadd.f32 0.0, %v947
  %v949 = vpop.f32.mrb[0].mxu0
  %v950 = vpop.f32.mrb[0].mxu0
  %v951 = vadd.f32 0.0, %v950
  %v952 = vpop.f32.mrb[0].mxu0
  %953 = vmatprep.mubr.bf16.mxu0 %v506
  %954 = vmatmul.mubr.bf16.gmra.mrb[0].mxu0 %v505
  %v955 = vpop.f32.mrb[0].mxu0
  %v956 = vadd.f32 0.0, %v955
  %v957 = vpop.f32.mrb[0].mxu0
  %v958 = vpop.f32.mrb[0].mxu0
  %v959 = vadd.f32 0.0, %v958
  %v960 = vpop.f32.mrb[0].mxu0
  %961 = vmatprep.mubr.bf16.mxu0 %v508
  %962 = vmatmul.mubr.bf16.gmra.mrb[0].mxu0 %v507
  %v963 = vpop.f32.mrb[0].mxu0
  %v964 = vadd.f32 0.0, %v963
  %v965 = vpop.f32.mrb[0].mxu0
  %v966 = vpop.f32.mrb[0].mxu0
  %v967 = vadd.f32 0.0, %v966
  %v968 = vpop.f32.mrb[0].mxu0
  %969 = vmatprep.mubr.bf16.mxu0 %v510
  %970 = vmatmul.mubr.bf16.gmra.mrb[0].mxu0 %v509
  %v971 = vpop.f32.mrb[0].mxu0
  %v972 = vadd.f32 0.0, %v971
  %v973 = vpop.f32.mrb[0].mxu0
  %v974 = vpop.f32.mrb[0].mxu0
  %v975 = vadd.f32 0.0, %v974
  %v976 = vpop.f32.mrb[0].mxu0
  %977 = vmatprep.mubr.bf16.mxu0 %v512
  %978 = vmatmul.mubr.bf16.gmra.mrb[0].mxu0 %v511
  %v979 = vpop.f32.mrb[0].mxu0
  %v980 = vadd.f32 0.0, %v979
  %v981 = vpop.f32.mrb[0].mxu0
  %v982 = vpop.f32.mrb[0].mxu0
  %v983 = vadd.f32 0.0, %v982
  %v984 = vpop.f32.mrb[0].mxu0
  %985 = vmatprep.mubr.bf16.mxu0 %v514
  %986 = vmatmul.mubr.bf16.gmra.mrb[0].mxu0 %v513
  %v987 = vpop.f32.mrb[0].mxu0
  %v988 = vadd.f32 0.0, %v987
  %v989 = vpop.f32.mrb[0].mxu0
  %v990 = vpop.f32.mrb[0].mxu0
  %v991 = vadd.f32 0.0, %v990
  %v992 = vpop.f32.mrb[0].mxu0
  %993 = vmatprep.mubr.bf16.mxu0 %v516
  %994 = vmatmul.mubr.bf16.gmra.mrb[0].mxu0 %v515
  %v995 = vpop.f32.mrb[0].mxu0
  %v996 = vadd.f32 0.0, %v995
  %v997 = vpop.f32.mrb[0].mxu0
  %v998 = vpop.f32.mrb[0].mxu0
  %v999 = vadd.f32 0.0, %v998
  %v1000 = vpop.f32.mrb[0].mxu0
  %1001 = vmatprep.mubr.bf16.mxu0 %v518
  %1002 = vmatmul.mubr.bf16.gmra.mrb[0].mxu0 %v517
  %v1003 = vpop.f32.mrb[0].mxu0
  %v1004 = vadd.f32 0.0, %v1003
  %v1005 = vpop.f32.mrb[0].mxu0
  %v1006 = vpop.f32.mrb[0].mxu0
  %v1007 = vadd.f32 0.0, %v1006
  %v1008 = vpop.f32.mrb[0].mxu0
  %1009 = vmatprep.mubr.bf16.mxu0 %v520
  %1010 = vmatmul.mubr.bf16.gmra.mrb[0].mxu0 %v519
  %v1011 = vpop.f32.mrb[0].mxu0
  %v1012 = vadd.f32 0.0, %v1011
  %v1013 = vpop.f32.mrb[0].mxu0
  %v1014 = vpop.f32.mrb[0].mxu0
  %v1015 = vadd.f32 0.0, %v1014
  %v1016 = vpop.f32.mrb[0].mxu0
  %1017 = vmatprep.mubr.bf16.mxu0 %v522
  %1018 = vmatmul.mubr.bf16.gmra.mrb[0].mxu0 %v521
  %v1019 = vpop.f32.mrb[0].mxu0
  %v1020 = vadd.f32 0.0, %v1019
  %v1021 = vpop.f32.mrb[0].mxu0
  %v1022 = vpop.f32.mrb[0].mxu0
  %v1023 = vadd.f32 0.0, %v1022
  %v1024 = vpop.f32.mrb[0].mxu0
  %1025 = vmatprep.mubr.bf16.mxu0 %v524
  %1026 = vmatmul.mubr.bf16.gmra.mrb[0].mxu0 %v523
  %v1027 = vpop.f32.mrb[0].mxu0
  %v1028 = vadd.f32 0.0, %v1027
  %v1029 = vpop.f32.mrb[0].mxu0
  %v1030 = vpop.f32.mrb[0].mxu0
  %v1031 = vadd.f32 0.0, %v1030
  %v1032 = vpop.f32.mrb[0].mxu0
  %1033 = vmatprep.mubr.bf16.mxu0 %v526
  %1034 = vmatmul.mubr.bf16.gmra.mrb[0].mxu0 %v525
  %v1035 = vpop.f32.mrb[0].mxu0
  %v1036 = vadd.f32 0.0, %v1035
  %v1037 = vpop.f32.mrb[0].mxu0
  %v1038 = vpop.f32.mrb[0].mxu0
  %v1039 = vadd.f32 0.0, %v1038
  %v1040 = vpop.f32.mrb[0].mxu0
  %1041 = vmatprep.mubr.bf16.mxu0 %v528
  %1042 = vmatmul.mubr.bf16.gmra.mrb[0].mxu0 %v527
  %v1043 = vpop.f32.mrb[0].mxu0
  %v1044 = vadd.f32 0.0, %v1043
  %v1045 = vpop.f32.mrb[0].mxu0
  %v1046 = vpop.f32.mrb[0].mxu0
  %v1047 = vadd.f32 0.0, %v1046
  %v1048 = vpop.f32.mrb[0].mxu0
  %1049 = vmatprep.mubr.bf16.mxu0 %v530
  %1050 = vmatmul.mubr.bf16.gmra.mrb[0].mxu0 %v529
  %v1051 = vpop.f32.mrb[0].mxu0
  %v1052 = vadd.f32 0.0, %v1051
  %v1053 = vpop.f32.mrb[0].mxu0
  %v1054 = vpop.f32.mrb[0].mxu0
  %v1055 = vadd.f32 0.0, %v1054
  %v1056 = vpop.f32.mrb[0].mxu0
  %1057 = vmatprep.mubr.bf16.mxu0 %v532
  %1058 = vmatmul.mubr.bf16.gmra.mrb[0].mxu0 %v531
  %v1059 = vpop.f32.mrb[0].mxu0
  %v1060 = vadd.f32 0.0, %v1059
  %v1061 = vpop.f32.mrb[0].mxu0
  %v1062 = vpop.f32.mrb[0].mxu0
  %v1063 = vadd.f32 0.0, %v1062
  %v1064 = vpop.f32.mrb[0].mxu0
  %1065 = vmatprep.mubr.bf16.mxu0 %v534
  %1066 = vmatmul.mubr.bf16.gmra.mrb[0].mxu0 %v533
  %v1067 = vpop.f32.mrb[0].mxu0
  %v1068 = vadd.f32 0.0, %v1067
  %v1069 = vpop.f32.mrb[0].mxu0
  %v1070 = vpop.f32.mrb[0].mxu0
  %v1071 = vadd.f32 0.0, %v1070
  %v1072 = vpop.f32.mrb[0].mxu0
  %1073 = vmatprep.mubr.bf16.mxu0 %v536
  %1074 = vmatmul.mubr.bf16.gmra.mrb[0].mxu0 %v535
  %v1075 = vpop.f32.mrb[0].mxu0
  %v1076 = vadd.f32 0.0, %v1075
  %v1077 = vpop.f32.mrb[0].mxu0
  %v1078 = vpop.f32.mrb[0].mxu0
  %v1079 = vadd.f32 0.0, %v1078
  %v1080 = vpop.f32.mrb[0].mxu0
  %1081 = vmatprep.mubr.bf16.mxu0 %v538
  %1082 = vmatmul.mubr.bf16.gmra.mrb[0].mxu0 %v537
  %v1083 = vpop.f32.mrb[0].mxu0
  %v1084 = vadd.f32 0.0, %v1083
  %v1085 = vpop.f32.mrb[0].mxu0
  %v1086 = vpop.f32.mrb[0].mxu0
  %v1087 = vadd.f32 0.0, %v1086
  %v1088 = vpop.f32.mrb[0].mxu0
  %1089 = vmatprep.mubr.bf16.mxu0 %v540
  %1090 = vmatmul.mubr.bf16.gmra.mrb[0].mxu0 %v539
  %v1091 = vpop.f32.mrb[0].mxu0
  %v1092 = vadd.f32 0.0, %v1091
  %v1093 = vpop.f32.mrb[0].mxu0
  %v1094 = vpop.f32.mrb[0].mxu0
  %v1095 = vadd.f32 0.0, %v1094
  %v1096 = vpop.f32.mrb[0].mxu0
  %1097 = vmatprep.mubr.bf16.mxu0 %v542
  %1098 = vmatmul.mubr.bf16.gmra.mrb[0].mxu0 %v541
  %v1099 = vpop.f32.mrb[0].mxu0
  %v1100 = vadd.f32 0.0, %v1099
  %v1101 = vpop.f32.mrb[0].mxu0
  %v1102 = vpop.f32.mrb[0].mxu0
  %v1103 = vadd.f32 0.0, %v1102
  %v1104 = vpop.f32.mrb[0].mxu0
  %1105 = vmatprep.mubr.bf16.mxu0 %v544
  %1106 = vmatmul.mubr.bf16.gmra.mrb[0].mxu0 %v543
  %v1107 = vpop.f32.mrb[0].mxu0
  %v1108 = vadd.f32 0.0, %v1107
  %v1109 = vpop.f32.mrb[0].mxu0
  %v1110 = vpop.f32.mrb[0].mxu0
  %v1111 = vadd.f32 0.0, %v1110
  %v1112 = vpop.f32.mrb[0].mxu0
  %1113 = vmatprep.mubr.bf16.mxu0 %v546
  %1114 = vmatmul.mubr.bf16.gmra.mrb[0].mxu0 %v545
  %v1115 = vpop.f32.mrb[0].mxu0
  %v1116 = vadd.f32 0.0, %v1115
  %v1117 = vpop.f32.mrb[0].mxu0
  %v1118 = vpop.f32.mrb[0].mxu0
  %v1119 = vadd.f32 0.0, %v1118
  %v1120 = vpop.f32.mrb[0].mxu0
  %1121 = vmatprep.mubr.bf16.mxu0 %v548
  %1122 = vmatmul.mubr.bf16.gmra.mrb[0].mxu0 %v547
  %v1123 = vpop.f32.mrb[0].mxu0
  %v1124 = vadd.f32 0.0, %v1123
  %v1125 = vpop.f32.mrb[0].mxu0
  %v1126 = vpop.f32.mrb[0].mxu0
  %v1127 = vadd.f32 0.0, %v1126
  %v1128 = vpop.f32.mrb[0].mxu0
  %1129 = vmatprep.mubr.bf16.mxu0 %v550
  %1130 = vmatmul.mubr.bf16.gmra.mrb[0].mxu0 %v549
  %v1131 = vpop.f32.mrb[0].mxu0
  %v1132 = vadd.f32 0.0, %v1131
  %v1133 = vpop.f32.mrb[0].mxu0
  %v1134 = vpop.f32.mrb[0].mxu0
  %v1135 = vadd.f32 0.0, %v1134
  %v1136 = vpop.f32.mrb[0].mxu0
  %1137 = vmatprep.mubr.bf16.mxu0 %v552
  %1138 = vmatmul.mubr.bf16.gmra.mrb[0].mxu0 %v551
  %v1139 = vpop.f32.mrb[0].mxu0
  %v1140 = vadd.f32 0.0, %v1139
  %v1141 = vpop.f32.mrb[0].mxu0
  %v1142 = vpop.f32.mrb[0].mxu0
  %v1143 = vadd.f32 0.0, %v1142
  %v1144 = vpop.f32.mrb[0].mxu0
  %1145 = vmatprep.mubr.bf16.mxu0 %v554
  %1146 = vmatmul.mubr.bf16.gmra.mrb[0].mxu0 %v553
  %v1147 = vpop.f32.mrb[0].mxu0
  %v1148 = vadd.f32 0.0, %v1147
  %v1149 = vpop.f32.mrb[0].mxu0
  %v1150 = vpop.f32.mrb[0].mxu0
  %v1151 = vadd.f32 0.0, %v1150
  %v1152 = vpop.f32.mrb[0].mxu0
  %1153 = vmatprep.mubr.bf16.mxu0 %v556
  %1154 = vmatmul.mubr.bf16.gmra.mrb[0].mxu0 %v555
  %v1155 = vpop.f32.mrb[0].mxu0
  %v1156 = vadd.f32 0.0, %v1155
  %v1157 = vpop.f32.mrb[0].mxu0
  %v1158 = vpop.f32.mrb[0].mxu0
  %v1159 = vadd.f32 0.0, %v1158
  %v1160 = vpop.f32.mrb[0].mxu0
  %1161 = vmatprep.mubr.bf16.mxu0 %v558
  %1162 = vmatmul.mubr.bf16.gmra.mrb[0].mxu0 %v557
  %v1163 = vpop.f32.mrb[0].mxu0
  %v1164 = vadd.f32 0.0, %v1163
  %v1165 = vpop.f32.mrb[0].mxu0
  %v1166 = vpop.f32.mrb[0].mxu0
  %v1167 = vadd.f32 0.0, %v1166
  %v1168 = vpop.f32.mrb[0].mxu0
  %1169 = vmatprep.mubr.bf16.mxu0 %v560
  %1170 = vmatmul.mubr.bf16.gmra.mrb[0].mxu0 %v559
  %v1171 = vpop.f32.mrb[0].mxu0
  %v1172 = vadd.f32 0.0, %v1171
  %v1173 = vpop.f32.mrb[0].mxu0
  %v1174 = vpop.f32.mrb[0].mxu0
  %v1175 = vadd.f32 0.0, %v1174
  %v1176 = vpop.f32.mrb[0].mxu0
  %1177 = vmatprep.mubr.bf16.mxu0 %v562
  %1178 = vmatmul.mubr.bf16.gmra.mrb[0].mxu0 %v561
  %v1179 = vpop.f32.mrb[0].mxu0
  %v1180 = vadd.f32 0.0, %v1179
  %v1181 = vpop.f32.mrb[0].mxu0
  %v1182 = vpop.f32.mrb[0].mxu0
  %v1183 = vadd.f32 0.0, %v1182
  %v1184 = vpop.f32.mrb[0].mxu0
  %1185 = vmatprep.mubr.bf16.mxu0 %v564
  %1186 = vmatmul.mubr.bf16.gmra.mrb[0].mxu0 %v563
  %v1187 = vpop.f32.mrb[0].mxu0
  %v1188 = vadd.f32 0.0, %v1187
  %v1189 = vpop.f32.mrb[0].mxu0
  %v1190 = vpop.f32.mrb[0].mxu0
  %v1191 = vadd.f32 0.0, %v1190
  %v1192 = vpop.f32.mrb[0].mxu0
  %1193 = vdwg.mxu0
  %v1194 = vmax.f32 %v796, %v895
  %v1195 = vmax.f32 %v799, %v900
  %v1196 = vmax.f32 %v804, %v903
  %v1197 = vmax.f32 %v807, %v908
  %v1198 = vmax.f32 %v812, %v911
  %v1199 = vmax.f32 %v815, %v916
  %v1200 = vmax.f32 %v820, %v919
  %v1201 = vmax.f32 %v823, %v924
  %v1202 = vmax.f32 %v828, %v927
  %v1203 = vmax.f32 %v831, %v932
  %v1204 = vmax.f32 %v836, %v935
  %v1205 = vmax.f32 %v839, %v940
  %v1206 = vmax.f32 %v844, %v943
  %v1207 = vmax.f32 %v847, %v948
  %v1208 = vmax.f32 %v852, %v951
  %v1209 = vmax.f32 %v855, %v956
  %v1210 = vmax.f32 %v860, %v959
  %v1211 = vmax.f32 %v863, %v964
  %v1212 = vmax.f32 %v868, %v967
  %v1213 = vmax.f32 %v871, %v972
  %v1214 = vmax.f32 %v876, %v975
  %v1215 = vmax.f32 %v879, %v980
  %v1216 = vmax.f32 %v884, %v983
  %v1217 = vmax.f32 %v887, %v988
  %v1218 = vmax.f32 %v892, %v991
  %v1219 = vmax.f32 %v996, %v1095
  %v1220 = vmax.f32 %v999, %v1100
  %v1221 = vmax.f32 %v1004, %v1103
  %v1222 = vmax.f32 %v1007, %v1108
  %v1223 = vmax.f32 %v1012, %v1111
  %v1224 = vmax.f32 %v1015, %v1116
  %v1225 = vmax.f32 %v1020, %v1119
  %v1226 = vmax.f32 %v1023, %v1124
  %v1227 = vmax.f32 %v1028, %v1127
  %v1228 = vmax.f32 %v1031, %v1132
  %v1229 = vmax.f32 %v1036, %v1135
  %v1230 = vmax.f32 %v1039, %v1140
  %v1231 = vmax.f32 %v1044, %v1143
  %v1232 = vmax.f32 %v1047, %v1148
  %v1233 = vmax.f32 %v1052, %v1151
  %v1234 = vmax.f32 %v1055, %v1156
  %v1235 = vmax.f32 %v1060, %v1159
  %v1236 = vmax.f32 %v1063, %v1164
  %v1237 = vmax.f32 %v1068, %v1167
  %v1238 = vmax.f32 %v1071, %v1172
  %v1239 = vmax.f32 %v1076, %v1175
  %v1240 = vmax.f32 %v1079, %v1180
  %v1241 = vmax.f32 %v1084, %v1183
  %v1242 = vmax.f32 %v1087, %v1188
  %v1243 = vmax.f32 %v1092, %v1191
  %v1244 = vmax.f32 %v1194, %v1219
  %v1245 = vmax.f32 %v1195, %v1220
  %v1246 = vmax.f32 %v1196, %v1221
  %v1247 = vmax.f32 %v1197, %v1222
  %v1248 = vmax.f32 %v1198, %v1223
  %v1249 = vmax.f32 %v1199, %v1224
  %v1250 = vmax.f32 %v1200, %v1225
  %v1251 = vmax.f32 %v1201, %v1226
  %v1252 = vmax.f32 %v1202, %v1227
  %v1253 = vmax.f32 %v1203, %v1228
  %v1254 = vmax.f32 %v1204, %v1229
  %v1255 = vmax.f32 %v1205, %v1230
  %v1256 = vmax.f32 %v1206, %v1231
  %v1257 = vmax.f32 %v1207, %v1232
  %v1258 = vmax.f32 %v1208, %v1233
  %v1259 = vmax.f32 %v1209, %v1234
  %v1260 = vmax.f32 %v1210, %v1235
  %v1261 = vmax.f32 %v1211, %v1236
  %v1262 = vmax.f32 %v1212, %v1237
  %v1263 = vmax.f32 %v1213, %v1238
  %v1264 = vmax.f32 %v1214, %v1239
  %v1265 = vmax.f32 %v1215, %v1240
  %v1266 = vmax.f32 %v1216, %v1241
  %v1267 = vmax.f32 %v1217, %v1242
  %v1268 = vmax.f32 %v1218, %v1243
  %v1269 = vld [vmem:[%s2] sm:$0x1]
  %v1271 = vlaneseq
  %v1272 = vshrl.u32 %v1271, 7
  %v1273 = vsub.s32 0, %v1272
  %v1274 = vrot.slane %v1269, %v1273
  %v1276 = vadd.f32 %v1244, %v1274
  %v1277 = vadd.f32 %v1245, %v1274
  %v1278 = vadd.f32 %v1246, %v1274
  %v1279 = vadd.f32 %v1247, %v1274
  %v1280 = vadd.f32 %v1248, %v1274
  %v1281 = vadd.f32 %v1249, %v1274
  %v1282 = vadd.f32 %v1250, %v1274
  %v1283 = vadd.f32 %v1251, %v1274
  %v1284 = vadd.f32 %v1252, %v1274
  %v1285 = vadd.f32 %v1253, %v1274
  %v1286 = vadd.f32 %v1254, %v1274
  %v1287 = vadd.f32 %v1255, %v1274
  %v1288 = vadd.f32 %v1256, %v1274
  %v1289 = vadd.f32 %v1257, %v1274
  %v1290 = vadd.f32 %v1258, %v1274
  %v1291 = vadd.f32 %v1259, %v1274
  %v1292 = vadd.f32 %v1260, %v1274
  %v1293 = vadd.f32 %v1261, %v1274
  %v1294 = vadd.f32 %v1262, %v1274
  %v1295 = vadd.f32 %v1263, %v1274
  %v1296 = vadd.f32 %v1264, %v1274
  %v1297 = vadd.f32 %v1265, %v1274
  %v1298 = vadd.f32 %v1266, %v1274
  %v1299 = vadd.f32 %v1267, %v1274
  %v1300 = vadd.f32 %v1268, %v1274
  %v1301 = vmax.f32 %v1276, 0.0
  %v1302 = vmax.f32 %v1277, 0.0
  %v1303 = vmax.f32 %v1278, 0.0
  %v1304 = vmax.f32 %v1279, 0.0
  %v1305 = vmax.f32 %v1280, 0.0
  %v1306 = vmax.f32 %v1281, 0.0
  %v1307 = vmax.f32 %v1282, 0.0
  %v1308 = vmax.f32 %v1283, 0.0
  %v1309 = vmax.f32 %v1284, 0.0
  %v1310 = vmax.f32 %v1285, 0.0
  %v1311 = vmax.f32 %v1286, 0.0
  %v1312 = vmax.f32 %v1287, 0.0
  %v1313 = vmax.f32 %v1288, 0.0
  %v1314 = vmax.f32 %v1289, 0.0
  %v1315 = vmax.f32 %v1290, 0.0
  %v1316 = vmax.f32 %v1291, 0.0
  %v1317 = vmax.f32 %v1292, 0.0
  %v1318 = vmax.f32 %v1293, 0.0
  %v1319 = vmax.f32 %v1294, 0.0
  %v1320 = vmax.f32 %v1295, 0.0
  %v1321 = vmax.f32 %v1296, 0.0
  %v1322 = vmax.f32 %v1297, 0.0
  %v1323 = vmax.f32 %v1298, 0.0
  %v1324 = vmax.f32 %v1299, 0.0
  %v1325 = vmax.f32 %v1300, 0.0
  %v1326 = vpack.c.bf16 %v1301, %v1301
  %v1327 = vpack.c.bf16 %v1302, %v1302
  %v1328 = vpack.c.bf16 %v1303, %v1303
  %v1329 = vpack.c.bf16 %v1304, %v1304
  %v1330 = vpack.c.bf16 %v1305, %v1305
  %v1331 = vpack.c.bf16 %v1306, %v1306
  %v1332 = vpack.c.bf16 %v1307, %v1307
  %v1333 = vpack.c.bf16 %v1308, %v1308
  %v1334 = vpack.c.bf16 %v1309, %v1309
  %v1335 = vpack.c.bf16 %v1310, %v1310
  %v1336 = vpack.c.bf16 %v1311, %v1311
  %v1337 = vpack.c.bf16 %v1312, %v1312
  %v1338 = vpack.c.bf16 %v1313, %v1313
  %v1339 = vpack.c.bf16 %v1314, %v1314
  %v1340 = vpack.c.bf16 %v1315, %v1315
  %v1341 = vpack.c.bf16 %v1316, %v1316
  %v1342 = vpack.c.bf16 %v1317, %v1317
  %v1343 = vpack.c.bf16 %v1318, %v1318
  %v1344 = vpack.c.bf16 %v1319, %v1319
  %v1345 = vpack.c.bf16 %v1320, %v1320
  %v1346 = vpack.c.bf16 %v1321, %v1321
  %v1347 = vpack.c.bf16 %v1322, %v1322
  %v1348 = vpack.c.bf16 %v1323, %v1323
  %v1349 = vpack.c.bf16 %v1324, %v1324
  %v1350 = vpack.c.bf16 %v1325, %v1325
  %v1351 = vld [vmem:[%s3] sm:$0xf]
  %v1352 = vld [vmem:[%s3 + $0x4] sm:$0xf]
  %v1353 = vld [vmem:[%s3 + $0x8] sm:$0xf]
  %v1354 = vld [vmem:[%s3 + $0xc] sm:$0xf]
  %v1355 = vld [vmem:[%s3 + $0x10] sm:$0xf]
  %v1356 = vld [vmem:[%s3 + $0x14] sm:$0xf]
  %v1357 = vld [vmem:[%s3 + $0x18] sm:$0xf]
  %v1358 = vld [vmem:[%s3 + $0x1c] sm:$0xf]
  %v1359 = vld [vmem:[%s3 + $0x20] sm:$0xf]
  %v1360 = vld [vmem:[%s3 + $0x24] sm:$0xf]
  %v1361 = vld [vmem:[%s3 + $0x28] sm:$0xf]
  %v1362 = vld [vmem:[%s3 + $0x2c] sm:$0xf]
  %v1363 = vld [vmem:[%s3 + $0x30] sm:$0xf]
  %v1364 = vld [vmem:[%s3 + $0x34] sm:$0xf]
  %v1365 = vld [vmem:[%s3 + $0x38] sm:$0xf]
  %v1366 = vld [vmem:[%s3 + $0x3c] sm:$0xf]
  %v1367 = vld [vmem:[%s3 + $0x40] sm:$0xf]
  %v1368 = vld [vmem:[%s3 + $0x44] sm:$0xf]
  %v1369 = vld [vmem:[%s3 + $0x48] sm:$0xf]
  %v1370 = vld [vmem:[%s3 + $0x4c] sm:$0xf]
  %v1371 = vld [vmem:[%s3 + $0x50] sm:$0xf]
  %v1372 = vld [vmem:[%s3 + $0x54] sm:$0xf]
  %v1373 = vld [vmem:[%s3 + $0x58] sm:$0xf]
  %v1374 = vld [vmem:[%s3 + $0x5c] sm:$0xf]
  %v1375 = vld [vmem:[%s3 + $0x60] sm:$0xf]
  %v1376 = vld [vmem:[%s3 + $0x64] sm:$0xf]
  %v1377 = vld [vmem:[%s3 + $0x68] sm:$0xf]
  %v1378 = vld [vmem:[%s3 + $0x6c] sm:$0xf]
  %v1379 = vld [vmem:[%s3 + $0x70] sm:$0xf]
  %v1380 = vld [vmem:[%s3 + $0x74] sm:$0xf]
  %v1381 = vld [vmem:[%s3 + $0x78] sm:$0xf]
  %v1382 = vld [vmem:[%s3 + $0x7c] sm:$0xf]
  %v1383 = vld [vmem:[%s3 + $0x80] sm:$0xf]
  %v1384 = vld [vmem:[%s3 + $0x84] sm:$0xf]
  %v1385 = vld [vmem:[%s3 + $0x88] sm:$0xf]
  %v1386 = vld [vmem:[%s3 + $0x8c] sm:$0xf]
  %v1387 = vld [vmem:[%s3 + $0x90] sm:$0xf]
  %v1388 = vld [vmem:[%s3 + $0x94] sm:$0xf]
  %v1389 = vld [vmem:[%s3 + $0x98] sm:$0xf]
  %v1390 = vld [vmem:[%s3 + $0x9c] sm:$0xf]
  %v1391 = vld [vmem:[%s3 + $0xa0] sm:$0xf]
  %v1392 = vld [vmem:[%s3 + $0xa4] sm:$0xf]
  %v1393 = vld [vmem:[%s3 + $0xa8] sm:$0xf]
  %v1394 = vld [vmem:[%s3 + $0xac] sm:$0xf]
  %v1395 = vld [vmem:[%s3 + $0xb0] sm:$0xf]
  %v1396 = vld [vmem:[%s3 + $0xb4] sm:$0xf]
  %v1397 = vld [vmem:[%s3 + $0xb8] sm:$0xf]
  %v1398 = vld [vmem:[%s3 + $0xbc] sm:$0xf]
  %v1399 = vld [vmem:[%s3 + $0xc0] sm:$0xf]
  %v1400 = vld [vmem:[%s3 + $0xc4] sm:$0xf]
  %v1401 = vld [vmem:[%s3 + $0xc8] sm:$0xf]
  %v1402 = vld [vmem:[%s3 + $0xcc] sm:$0xf]
  %v1403 = vld [vmem:[%s3 + $0xd0] sm:$0xf]
  %v1404 = vld [vmem:[%s3 + $0xd4] sm:$0xf]
  %v1405 = vld [vmem:[%s3 + $0xd8] sm:$0xf]
  %v1406 = vld [vmem:[%s3 + $0xdc] sm:$0xf]
  %v1407 = vld [vmem:[%s3 + $0xe0] sm:$0xf]
  %v1408 = vld [vmem:[%s3 + $0xe4] sm:$0xf]
  %v1409 = vld [vmem:[%s3 + $0xe8] sm:$0xf]
  %v1410 = vld [vmem:[%s3 + $0xec] sm:$0xf]
  %v1411 = vld [vmem:[%s3 + $0xf0] sm:$0xf]
  %v1412 = vld [vmem:[%s3 + $0xf4] sm:$0xf]
  %v1413 = vld [vmem:[%s3 + $0xf8] sm:$0xf]
  %v1414 = vld [vmem:[%s3 + $0xfc] sm:$0xf]
  %v1415 = vld [vmem:[%s3 + $0x100] sm:$0xf]
  %v1416 = vld [vmem:[%s3 + $0x104] sm:$0xf]
  %v1417 = vld [vmem:[%s3 + $0x108] sm:$0xf]
  %v1418 = vld [vmem:[%s3 + $0x10c] sm:$0xf]
  %v1419 = vld [vmem:[%s3 + $0x110] sm:$0xf]
  %v1420 = vld [vmem:[%s3 + $0x114] sm:$0xf]
  %v1421 = vld [vmem:[%s3 + $0x118] sm:$0xf]
  %v1422 = vld [vmem:[%s3 + $0x11c] sm:$0xf]
  %v1423 = vld [vmem:[%s3 + $0x120] sm:$0xf]
  %v1424 = vld [vmem:[%s3 + $0x124] sm:$0xf]
  %v1425 = vld [vmem:[%s3 + $0x128] sm:$0xf]
  %v1426 = vld [vmem:[%s3 + $0x12c] sm:$0xf]
  %v1427 = vld [vmem:[%s3 + $0x130] sm:$0xf]
  %v1428 = vld [vmem:[%s3 + $0x134] sm:$0xf]
  %v1429 = vld [vmem:[%s3 + $0x138] sm:$0xf]
  %v1430 = vld [vmem:[%s3 + $0x13c] sm:$0xf]
  %v1431 = vld [vmem:[%s3 + $0x140] sm:$0xf]
  %v1432 = vld [vmem:[%s3 + $0x144] sm:$0xf]
  %v1433 = vld [vmem:[%s3 + $0x148] sm:$0xf]
  %v1434 = vld [vmem:[%s3 + $0x14c] sm:$0xf]
  %v1435 = vld [vmem:[%s3 + $0x150] sm:$0xf]
  %v1436 = vld [vmem:[%s3 + $0x154] sm:$0xf]
  %v1437 = vld [vmem:[%s3 + $0x158] sm:$0xf]
  %v1438 = vld [vmem:[%s3 + $0x15c] sm:$0xf]
  %v1439 = vld [vmem:[%s3 + $0x160] sm:$0xf]
  %v1440 = vld [vmem:[%s3 + $0x164] sm:$0xf]
  %v1441 = vld [vmem:[%s3 + $0x168] sm:$0xf]
  %v1442 = vld [vmem:[%s3 + $0x16c] sm:$0xf]
  %v1443 = vld [vmem:[%s3 + $0x170] sm:$0xf]
  %v1444 = vld [vmem:[%s3 + $0x174] sm:$0xf]
  %v1445 = vld [vmem:[%s3 + $0x178] sm:$0xf]
  %v1446 = vld [vmem:[%s3 + $0x17c] sm:$0xf]
  %v1447 = vld [vmem:[%s3 + $0x180] sm:$0xf]
  %v1448 = vld [vmem:[%s3 + $0x184] sm:$0xf]
  %v1449 = vld [vmem:[%s3 + $0x188] sm:$0xf]
  %v1450 = vld [vmem:[%s3 + $0x18c] sm:$0xf]
  %v1451 = vld [vmem:[%s3 + $0x190] sm:$0xf]
  %v1452 = vld [vmem:[%s3 + $0x194] sm:$0xf]
  %v1453 = vld [vmem:[%s3 + $0x198] sm:$0xf]
  %v1454 = vld [vmem:[%s3 + $0x19c] sm:$0xf]
  %v1455 = vld [vmem:[%s3 + $0x1a0] sm:$0xf]
  %v1456 = vld [vmem:[%s3 + $0x1a4] sm:$0xf]
  %v1457 = vld [vmem:[%s3 + $0x1a8] sm:$0xf]
  %v1458 = vld [vmem:[%s3 + $0x1ac] sm:$0xf]
  %v1459 = vld [vmem:[%s3 + $0x1b0] sm:$0xf]
  %v1460 = vld [vmem:[%s3 + $0x1b4] sm:$0xf]
  %v1461 = vld [vmem:[%s3 + $0x1b8] sm:$0xf]
  %v1462 = vld [vmem:[%s3 + $0x1bc] sm:$0xf]
  %v1463 = vld [vmem:[%s3 + $0x1c0] sm:$0xf]
  %v1464 = vld [vmem:[%s3 + $0x1c4] sm:$0xf]
  %v1465 = vld [vmem:[%s3 + $0x1c8] sm:$0xf]
  %v1466 = vld [vmem:[%s3 + $0x1cc] sm:$0xf]
  %v1467 = vld [vmem:[%s3 + $0x1d0] sm:$0xf]
  %v1468 = vld [vmem:[%s3 + $0x1d4] sm:$0xf]
  %v1469 = vld [vmem:[%s3 + $0x1d8] sm:$0xf]
  %v1470 = vld [vmem:[%s3 + $0x1dc] sm:$0xf]
  %v1471 = vld [vmem:[%s3 + $0x1e0] sm:$0xf]
  %v1472 = vld [vmem:[%s3 + $0x1e4] sm:$0xf]
  %v1473 = vld [vmem:[%s3 + $0x1e8] sm:$0xf]
  %v1474 = vld [vmem:[%s3 + $0x1ec] sm:$0xf]
  %v1475 = vld [vmem:[%s3 + $0x1f0] sm:$0xf]
  %v1476 = vld [vmem:[%s3 + $0x1f4] sm:$0xf]
  %v1477 = vld [vmem:[%s3 + $0x1f8] sm:$0xf]
  %v1478 = vld [vmem:[%s3 + $0x1fc] sm:$0xf]
  %v1479 = vld [vmem:[%s3 + $0x200] sm:$0xf]
  %v1480 = vld [vmem:[%s3 + $0x204] sm:$0xf]
  %v1481 = vld [vmem:[%s3 + $0x208] sm:$0xf]
  %v1482 = vld [vmem:[%s3 + $0x20c] sm:$0xf]
  %v1483 = vld [vmem:[%s3 + $0x210] sm:$0xf]
  %v1484 = vld [vmem:[%s3 + $0x214] sm:$0xf]
  %v1485 = vld [vmem:[%s3 + $0x218] sm:$0xf]
  %v1486 = vld [vmem:[%s3 + $0x21c] sm:$0xf]
  %v1487 = vld [vmem:[%s3 + $0x220] sm:$0xf]
  %v1488 = vld [vmem:[%s3 + $0x224] sm:$0xf]
  %v1489 = vld [vmem:[%s3 + $0x228] sm:$0xf]
  %v1490 = vld [vmem:[%s3 + $0x22c] sm:$0xf]
  %v1491 = vld [vmem:[%s3 + $0x230] sm:$0xf]
  %v1492 = vld [vmem:[%s3 + $0x234] sm:$0xf]
  %v1493 = vld [vmem:[%s3 + $0x238] sm:$0xf]
  %v1494 = vld [vmem:[%s3 + $0x23c] sm:$0xf]
  %v1495 = vld [vmem:[%s3 + $0x240] sm:$0xf]
  %v1496 = vld [vmem:[%s3 + $0x244] sm:$0xf]
  %v1497 = vld [vmem:[%s3 + $0x248] sm:$0xf]
  %v1498 = vld [vmem:[%s3 + $0x24c] sm:$0xf]
  %v1499 = vld [vmem:[%s3 + $0x250] sm:$0xf]
  %v1500 = vld [vmem:[%s3 + $0x254] sm:$0xf]
  %v1501 = vld [vmem:[%s3 + $0x258] sm:$0xf]
  %v1502 = vld [vmem:[%s3 + $0x25c] sm:$0xf]
  %v1503 = vld [vmem:[%s3 + $0x260] sm:$0xf]
  %v1504 = vld [vmem:[%s3 + $0x264] sm:$0xf]
  %v1505 = vld [vmem:[%s3 + $0x268] sm:$0xf]
  %v1506 = vld [vmem:[%s3 + $0x26c] sm:$0xf]
  %v1507 = vld [vmem:[%s3 + $0x270] sm:$0xf]
  %v1508 = vld [vmem:[%s3 + $0x274] sm:$0xf]
  %v1509 = vld [vmem:[%s3 + $0x278] sm:$0xf]
  %v1510 = vld [vmem:[%s3 + $0x27c] sm:$0xf]
  %v1511 = vld [vmem:[%s3 + $0x280] sm:$0xf]
  %v1512 = vld [vmem:[%s3 + $0x284] sm:$0xf]
  %v1513 = vld [vmem:[%s3 + $0x288] sm:$0xf]
  %v1514 = vld [vmem:[%s3 + $0x28c] sm:$0xf]
  %v1515 = vld [vmem:[%s3 + $0x290] sm:$0xf]
  %v1516 = vld [vmem:[%s3 + $0x294] sm:$0xf]
  %v1517 = vld [vmem:[%s3 + $0x298] sm:$0xf]
  %v1518 = vld [vmem:[%s3 + $0x29c] sm:$0xf]
  %v1519 = vld [vmem:[%s3 + $0x2a0] sm:$0xf]
  %v1520 = vld [vmem:[%s3 + $0x2a4] sm:$0xf]
  %v1521 = vld [vmem:[%s3 + $0x2a8] sm:$0xf]
  %v1522 = vld [vmem:[%s3 + $0x2ac] sm:$0xf]
  %v1523 = vld [vmem:[%s3 + $0x2b0] sm:$0xf]
  %v1524 = vld [vmem:[%s3 + $0x2b4] sm:$0xf]
  %v1525 = vld [vmem:[%s3 + $0x2b8] sm:$0xf]
  %v1526 = vld [vmem:[%s3 + $0x2bc] sm:$0xf]
  %v1527 = vld [vmem:[%s3 + $0x2c0] sm:$0xf]
  %v1528 = vld [vmem:[%s3 + $0x2c4] sm:$0xf]
  %v1529 = vld [vmem:[%s3 + $0x2c8] sm:$0xf]
  %v1530 = vld [vmem:[%s3 + $0x2cc] sm:$0xf]
  %v1531 = vld [vmem:[%s3 + $0x2d0] sm:$0xf]
  %v1532 = vld [vmem:[%s3 + $0x2d4] sm:$0xf]
  %v1533 = vld [vmem:[%s3 + $0x2d8] sm:$0xf]
  %v1534 = vld [vmem:[%s3 + $0x2dc] sm:$0xf]
  %v1535 = vld [vmem:[%s3 + $0x2e0] sm:$0xf]
  %v1536 = vld [vmem:[%s3 + $0x2e4] sm:$0xf]
  %v1537 = vld [vmem:[%s3 + $0x2e8] sm:$0xf]
  %v1538 = vld [vmem:[%s3 + $0x2ec] sm:$0xf]
  %v1539 = vld [vmem:[%s3 + $0x2f0] sm:$0xf]
  %v1540 = vld [vmem:[%s3 + $0x2f4] sm:$0xf]
  %v1541 = vld [vmem:[%s3 + $0x2f8] sm:$0xf]
  %v1542 = vld [vmem:[%s3 + $0x2fc] sm:$0xf]
  %v1543 = vld [vmem:[%s3 + $0x300] sm:$0xf]
  %v1544 = vld [vmem:[%s3 + $0x304] sm:$0xf]
  %v1545 = vld [vmem:[%s3 + $0x308] sm:$0xf]
  %v1546 = vld [vmem:[%s3 + $0x30c] sm:$0xf]
  %v1547 = vld [vmem:[%s3 + $0x310] sm:$0xf]
  %v1548 = vld [vmem:[%s3 + $0x314] sm:$0xf]
  %v1549 = vld [vmem:[%s3 + $0x318] sm:$0xf]
  %v1550 = vld [vmem:[%s3 + $0x31c] sm:$0xf]
  %v1551 = vld [vmem:[%s3 + $0x320] sm:$0xf]
  %v1552 = vld [vmem:[%s3 + $0x324] sm:$0xf]
  %v1553 = vld [vmem:[%s3 + $0x328] sm:$0xf]
  %v1554 = vld [vmem:[%s3 + $0x32c] sm:$0xf]
  %v1555 = vld [vmem:[%s3 + $0x330] sm:$0xf]
  %v1556 = vld [vmem:[%s3 + $0x334] sm:$0xf]
  %v1557 = vld [vmem:[%s3 + $0x338] sm:$0xf]
  %v1558 = vld [vmem:[%s3 + $0x33c] sm:$0xf]
  %v1559 = vld [vmem:[%s3 + $0x340] sm:$0xf]
  %v1560 = vld [vmem:[%s3 + $0x344] sm:$0xf]
  %v1561 = vld [vmem:[%s3 + $0x348] sm:$0xf]
  %v1562 = vld [vmem:[%s3 + $0x34c] sm:$0xf]
  %v1563 = vld [vmem:[%s3 + $0x350] sm:$0xf]
  %v1564 = vld [vmem:[%s3 + $0x354] sm:$0xf]
  %v1565 = vld [vmem:[%s3 + $0x358] sm:$0xf]
  %v1566 = vld [vmem:[%s3 + $0x35c] sm:$0xf]
  %v1567 = vld [vmem:[%s3 + $0x360] sm:$0xf]
  %v1568 = vld [vmem:[%s3 + $0x364] sm:$0xf]
  %v1569 = vld [vmem:[%s3 + $0x368] sm:$0xf]
  %v1570 = vld [vmem:[%s3 + $0x36c] sm:$0xf]
  %v1571 = vld [vmem:[%s3 + $0x370] sm:$0xf]
  %v1572 = vld [vmem:[%s3 + $0x374] sm:$0xf]
  %v1573 = vld [vmem:[%s3 + $0x378] sm:$0xf]
  %v1574 = vld [vmem:[%s3 + $0x37c] sm:$0xf]
  %v1575 = vld [vmem:[%s3 + $0x380] sm:$0xf]
  %v1576 = vld [vmem:[%s3 + $0x384] sm:$0xf]
  %v1577 = vld [vmem:[%s3 + $0x388] sm:$0xf]
  %v1578 = vld [vmem:[%s3 + $0x38c] sm:$0xf]
  %v1579 = vld [vmem:[%s3 + $0x390] sm:$0xf]
  %v1580 = vld [vmem:[%s3 + $0x394] sm:$0xf]
  %v1581 = vld [vmem:[%s3 + $0x398] sm:$0xf]
  %v1582 = vld [vmem:[%s3 + $0x39c] sm:$0xf]
  %v1583 = vld [vmem:[%s3 + $0x3a0] sm:$0xf]
  %v1584 = vld [vmem:[%s3 + $0x3a4] sm:$0xf]
  %v1585 = vld [vmem:[%s3 + $0x3a8] sm:$0xf]
  %v1586 = vld [vmem:[%s3 + $0x3ac] sm:$0xf]
  %v1587 = vld [vmem:[%s3 + $0x3b0] sm:$0xf]
  %v1588 = vld [vmem:[%s3 + $0x3b4] sm:$0xf]
  %v1589 = vld [vmem:[%s3 + $0x3b8] sm:$0xf]
  %v1590 = vld [vmem:[%s3 + $0x3bc] sm:$0xf]
  %v1591 = vld [vmem:[%s3 + $0x3c0] sm:$0xf]
  %v1592 = vld [vmem:[%s3 + $0x3c4] sm:$0xf]
  %v1593 = vld [vmem:[%s3 + $0x3c8] sm:$0xf]
  %v1594 = vld [vmem:[%s3 + $0x3cc] sm:$0xf]
  %v1595 = vld [vmem:[%s3 + $0x3d0] sm:$0xf]
  %v1596 = vld [vmem:[%s3 + $0x3d4] sm:$0xf]
  %v1597 = vld [vmem:[%s3 + $0x3d8] sm:$0xf]
  %v1598 = vld [vmem:[%s3 + $0x3dc] sm:$0xf]
  %v1599 = vld [vmem:[%s3 + $0x3e0] sm:$0xf]
  %v1600 = vld [vmem:[%s3 + $0x3e4] sm:$0xf]
  %v1601 = vld [vmem:[%s3 + $0x3e8] sm:$0xf]
  %v1602 = vld [vmem:[%s3 + $0x3ec] sm:$0xf]
  %v1603 = vld [vmem:[%s3 + $0x3f0] sm:$0xf]
  %v1604 = vld [vmem:[%s3 + $0x3f4] sm:$0xf]
  %v1605 = vld [vmem:[%s3 + $0x3f8] sm:$0xf]
  %v1606 = vld [vmem:[%s3 + $0x3fc] sm:$0xf]
  %v1607 = vld [vmem:[%s3 + $0x400] sm:$0xf]
  %v1608 = vld [vmem:[%s3 + $0x404] sm:$0xf]
  %v1609 = vld [vmem:[%s3 + $0x408] sm:$0xf]
  %v1610 = vld [vmem:[%s3 + $0x40c] sm:$0xf]
  %v1611 = vld [vmem:[%s3 + $0x410] sm:$0xf]
  %v1612 = vld [vmem:[%s3 + $0x414] sm:$0xf]
  %v1613 = vld [vmem:[%s3 + $0x418] sm:$0xf]
  %v1614 = vld [vmem:[%s3 + $0x41c] sm:$0xf]
  %v1615 = vld [vmem:[%s3 + $0x420] sm:$0xf]
  %v1616 = vld [vmem:[%s3 + $0x424] sm:$0xf]
  %v1617 = vld [vmem:[%s3 + $0x428] sm:$0xf]
  %v1618 = vld [vmem:[%s3 + $0x42c] sm:$0xf]
  %v1619 = vld [vmem:[%s3 + $0x430] sm:$0xf]
  %v1620 = vld [vmem:[%s3 + $0x434] sm:$0xf]
  %v1621 = vld [vmem:[%s3 + $0x438] sm:$0xf]
  %v1622 = vld [vmem:[%s3 + $0x43c] sm:$0xf]
  %v1623 = vld [vmem:[%s3 + $0x440] sm:$0xf]
  %v1624 = vld [vmem:[%s3 + $0x444] sm:$0xf]
  %v1625 = vld [vmem:[%s3 + $0x448] sm:$0xf]
  %v1626 = vld [vmem:[%s3 + $0x44c] sm:$0xf]
  %v1627 = vld [vmem:[%s3 + $0x450] sm:$0xf]
  %v1628 = vld [vmem:[%s3 + $0x454] sm:$0xf]
  %v1629 = vld [vmem:[%s3 + $0x458] sm:$0xf]
  %v1630 = vld [vmem:[%s3 + $0x45c] sm:$0xf]
  %v1631 = vld [vmem:[%s3 + $0x460] sm:$0xf]
  %v1632 = vld [vmem:[%s3 + $0x464] sm:$0xf]
  %v1633 = vld [vmem:[%s3 + $0x468] sm:$0xf]
  %v1634 = vld [vmem:[%s3 + $0x46c] sm:$0xf]
  %v1635 = vld [vmem:[%s3 + $0x470] sm:$0xf]
  %v1636 = vld [vmem:[%s3 + $0x474] sm:$0xf]
  %v1637 = vld [vmem:[%s3 + $0x478] sm:$0xf]
  %v1638 = vld [vmem:[%s3 + $0x47c] sm:$0xf]
  %v1639 = vld [vmem:[%s3 + $0x480] sm:$0xf]
  %v1640 = vld [vmem:[%s3 + $0x484] sm:$0xf]
  %v1641 = vld [vmem:[%s3 + $0x488] sm:$0xf]
  %v1642 = vld [vmem:[%s3 + $0x48c] sm:$0xf]
  %v1643 = vld [vmem:[%s3 + $0x490] sm:$0xf]
  %v1644 = vld [vmem:[%s3 + $0x494] sm:$0xf]
  %v1645 = vld [vmem:[%s3 + $0x498] sm:$0xf]
  %v1646 = vld [vmem:[%s3 + $0x49c] sm:$0xf]
  %v1647 = vld [vmem:[%s3 + $0x4a0] sm:$0xf]
  %v1648 = vld [vmem:[%s3 + $0x4a4] sm:$0xf]
  %v1649 = vld [vmem:[%s3 + $0x4a8] sm:$0xf]
  %v1650 = vld [vmem:[%s3 + $0x4ac] sm:$0xf]
  %v1651 = vld [vmem:[%s3 + $0x4b0] sm:$0xf]
  %v1652 = vld [vmem:[%s3 + $0x4b4] sm:$0xf]
  %v1653 = vld [vmem:[%s3 + $0x4b8] sm:$0xf]
  %v1654 = vld [vmem:[%s3 + $0x4bc] sm:$0xf]
  %v1655 = vld [vmem:[%s3 + $0x4c0] sm:$0xf]
  %v1656 = vld [vmem:[%s3 + $0x4c4] sm:$0xf]
  %v1657 = vld [vmem:[%s3 + $0x4c8] sm:$0xf]
  %v1658 = vld [vmem:[%s3 + $0x4cc] sm:$0xf]
  %v1659 = vld [vmem:[%s3 + $0x4d0] sm:$0xf]
  %v1660 = vld [vmem:[%s3 + $0x4d4] sm:$0xf]
  %v1661 = vld [vmem:[%s3 + $0x4d8] sm:$0xf]
  %v1662 = vld [vmem:[%s3 + $0x4dc] sm:$0xf]
  %v1663 = vld [vmem:[%s3 + $0x4e0] sm:$0xf]
  %v1664 = vld [vmem:[%s3 + $0x4e4] sm:$0xf]
  %v1665 = vld [vmem:[%s3 + $0x4e8] sm:$0xf]
  %v1666 = vld [vmem:[%s3 + $0x4ec] sm:$0xf]
  %v1667 = vld [vmem:[%s3 + $0x4f0] sm:$0xf]
  %v1668 = vld [vmem:[%s3 + $0x4f4] sm:$0xf]
  %v1669 = vld [vmem:[%s3 + $0x4f8] sm:$0xf]
  %v1670 = vld [vmem:[%s3 + $0x4fc] sm:$0xf]
  %v1671 = vld [vmem:[%s3 + $0x500] sm:$0xf]
  %v1672 = vld [vmem:[%s3 + $0x504] sm:$0xf]
  %v1673 = vld [vmem:[%s3 + $0x508] sm:$0xf]
  %v1674 = vld [vmem:[%s3 + $0x50c] sm:$0xf]
  %v1675 = vld [vmem:[%s3 + $0x510] sm:$0xf]
  %v1676 = vld [vmem:[%s3 + $0x514] sm:$0xf]
  %v1677 = vld [vmem:[%s3 + $0x518] sm:$0xf]
  %v1678 = vld [vmem:[%s3 + $0x51c] sm:$0xf]
  %v1679 = vld [vmem:[%s3 + $0x520] sm:$0xf]
  %v1680 = vld [vmem:[%s3 + $0x524] sm:$0xf]
  %v1681 = vld [vmem:[%s3 + $0x528] sm:$0xf]
  %v1682 = vld [vmem:[%s3 + $0x52c] sm:$0xf]
  %v1683 = vld [vmem:[%s3 + $0x530] sm:$0xf]
  %v1684 = vld [vmem:[%s3 + $0x534] sm:$0xf]
  %v1685 = vld [vmem:[%s3 + $0x538] sm:$0xf]
  %v1686 = vld [vmem:[%s3 + $0x53c] sm:$0xf]
  %v1687 = vld [vmem:[%s3 + $0x540] sm:$0xf]
  %v1688 = vld [vmem:[%s3 + $0x544] sm:$0xf]
  %v1689 = vld [vmem:[%s3 + $0x548] sm:$0xf]
  %v1690 = vld [vmem:[%s3 + $0x54c] sm:$0xf]
  %v1691 = vld [vmem:[%s3 + $0x550] sm:$0xf]
  %v1692 = vld [vmem:[%s3 + $0x554] sm:$0xf]
  %v1693 = vld [vmem:[%s3 + $0x558] sm:$0xf]
  %v1694 = vld [vmem:[%s3 + $0x55c] sm:$0xf]
  %v1695 = vld [vmem:[%s3 + $0x560] sm:$0xf]
  %v1696 = vld [vmem:[%s3 + $0x564] sm:$0xf]
  %v1697 = vld [vmem:[%s3 + $0x568] sm:$0xf]
  %v1698 = vld [vmem:[%s3 + $0x56c] sm:$0xf]
  %v1699 = vld [vmem:[%s3 + $0x570] sm:$0xf]
  %v1700 = vld [vmem:[%s3 + $0x574] sm:$0xf]
  %v1701 = vld [vmem:[%s3 + $0x578] sm:$0xf]
  %v1702 = vld [vmem:[%s3 + $0x57c] sm:$0xf]
  %v1703 = vld [vmem:[%s3 + $0x580] sm:$0xf]
  %v1704 = vld [vmem:[%s3 + $0x584] sm:$0xf]
  %v1705 = vld [vmem:[%s3 + $0x588] sm:$0xf]
  %v1706 = vld [vmem:[%s3 + $0x58c] sm:$0xf]
  %v1707 = vld [vmem:[%s3 + $0x590] sm:$0xf]
  %v1708 = vld [vmem:[%s3 + $0x594] sm:$0xf]
  %v1709 = vld [vmem:[%s3 + $0x598] sm:$0xf]
  %v1710 = vld [vmem:[%s3 + $0x59c] sm:$0xf]
  %v1711 = vld [vmem:[%s3 + $0x5a0] sm:$0xf]
  %v1712 = vld [vmem:[%s3 + $0x5a4] sm:$0xf]
  %v1713 = vld [vmem:[%s3 + $0x5a8] sm:$0xf]
  %v1714 = vld [vmem:[%s3 + $0x5ac] sm:$0xf]
  %v1715 = vld [vmem:[%s3 + $0x5b0] sm:$0xf]
  %v1716 = vld [vmem:[%s3 + $0x5b4] sm:$0xf]
  %v1717 = vld [vmem:[%s3 + $0x5b8] sm:$0xf]
  %v1718 = vld [vmem:[%s3 + $0x5bc] sm:$0xf]
  %v1719 = vld [vmem:[%s3 + $0x5c0] sm:$0xf]
  %v1720 = vld [vmem:[%s3 + $0x5c4] sm:$0xf]
  %v1721 = vld [vmem:[%s3 + $0x5c8] sm:$0xf]
  %v1722 = vld [vmem:[%s3 + $0x5cc] sm:$0xf]
  %v1723 = vld [vmem:[%s3 + $0x5d0] sm:$0xf]
  %v1724 = vld [vmem:[%s3 + $0x5d4] sm:$0xf]
  %v1725 = vld [vmem:[%s3 + $0x5d8] sm:$0xf]
  %v1726 = vld [vmem:[%s3 + $0x5dc] sm:$0xf]
  %v1727 = vld [vmem:[%s3 + $0x5e0] sm:$0xf]
  %v1728 = vld [vmem:[%s3 + $0x5e4] sm:$0xf]
  %v1729 = vld [vmem:[%s3 + $0x5e8] sm:$0xf]
  %v1730 = vld [vmem:[%s3 + $0x5ec] sm:$0xf]
  %v1731 = vld [vmem:[%s3 + $0x5f0] sm:$0xf]
  %v1732 = vld [vmem:[%s3 + $0x5f4] sm:$0xf]
  %v1733 = vld [vmem:[%s3 + $0x5f8] sm:$0xf]
  %v1734 = vld [vmem:[%s3 + $0x5fc] sm:$0xf]
  %v1735 = vld [vmem:[%s3 + $0x600] sm:$0xf]
  %v1736 = vld [vmem:[%s3 + $0x604] sm:$0xf]
  %v1737 = vld [vmem:[%s3 + $0x608] sm:$0xf]
  %v1738 = vld [vmem:[%s3 + $0x60c] sm:$0xf]
  %v1739 = vld [vmem:[%s3 + $0x610] sm:$0xf]
  %v1740 = vld [vmem:[%s3 + $0x614] sm:$0xf]
  %v1741 = vld [vmem:[%s3 + $0x618] sm:$0xf]
  %v1742 = vld [vmem:[%s3 + $0x61c] sm:$0xf]
  %v1743 = vld [vmem:[%s3 + $0x620] sm:$0xf]
  %v1744 = vld [vmem:[%s3 + $0x624] sm:$0xf]
  %v1745 = vld [vmem:[%s3 + $0x628] sm:$0xf]
  %v1746 = vld [vmem:[%s3 + $0x62c] sm:$0xf]
  %v1747 = vld [vmem:[%s3 + $0x630] sm:$0xf]
  %v1748 = vld [vmem:[%s3 + $0x634] sm:$0xf]
  %v1749 = vld [vmem:[%s3 + $0x638] sm:$0xf]
  %v1750 = vld [vmem:[%s3 + $0x63c] sm:$0xf]
  %v1767 = vunpack.c.l.b16 %v1351
  %v1768 = vunpack.c.l.b16 %v1352
  %v1769 = vunpack.c.l.b16 %v1353
  %v1770 = vunpack.c.l.b16 %v1354
  %v1771 = vunpack.c.l.b16 %v1355
  %v1772 = vunpack.c.l.b16 %v1356
  %v1773 = vunpack.c.l.b16 %v1357
  %v1774 = vunpack.c.l.b16 %v1358
  %v1775 = vunpack.c.l.b16 %v1359
  %v1776 = vunpack.c.l.b16 %v1360
  %v1777 = vunpack.c.l.b16 %v1361
  %v1778 = vunpack.c.l.b16 %v1362
  %v1779 = vunpack.c.l.b16 %v1363
  %v1780 = vunpack.c.l.b16 %v1364
  %v1781 = vunpack.c.l.b16 %v1365
  %v1782 = vunpack.c.l.b16 %v1366
  %v1783 = vpack.c.b16 %v1768, %v1767
  %v1784 = vpack.c.b16 %v1770, %v1769
  %v1785 = vpack.c.b16 %v1772, %v1771
  %v1786 = vpack.c.b16 %v1774, %v1773
  %v1787 = vpack.c.b16 %v1776, %v1775
  %v1788 = vpack.c.b16 %v1778, %v1777
  %v1789 = vpack.c.b16 %v1780, %v1779
  %v1790 = vpack.c.b16 %v1782, %v1781
  %1799 = vmatprep.subr.bf16.mxu0 0
  %1800 = vmatpush1.bf16.msra.mxu0 %v1783
  %1801 = vmatprep.subr.bf16.mxu0 0
  %1802 = vmatpush1.bf16.msra.mxu0 %v1784
  %1803 = vmatprep.subr.bf16.mxu0 0
  %1804 = vmatpush1.bf16.msra.mxu0 %v1785
  %1805 = vmatprep.subr.bf16.mxu0 0
  %1806 = vmatpush1.bf16.msra.mxu0 %v1786
  %1807 = vmatprep.subr.bf16.mxu0 0
  %1808 = vmatpush1.bf16.msra.mxu0 %v1787
  %1809 = vmatprep.subr.bf16.mxu0 0
  %1810 = vmatpush1.bf16.msra.mxu0 %v1788
  %1811 = vmatprep.subr.bf16.mxu0 0
  %1812 = vmatpush1.bf16.msra.mxu0 %v1789
  %1813 = vmatprep.subr.bf16.mxu0 0
  %1814 = vmatpush1.bf16.msra.mxu0 %v1790
  %1815 = vmatprep.subr.bf16.mxu0 0
  %1816 = vmatpush1.bf16.msra.mxu0 0
  %1817 = vmatprep.subr.bf16.mxu0 0
  %1818 = vmatpush1.bf16.msra.mxu0 0
  %1819 = vmatprep.subr.bf16.mxu0 0
  %1820 = vmatpush1.bf16.msra.mxu0 0
  %1821 = vmatprep.subr.bf16.mxu0 0
  %1822 = vmatpush1.bf16.msra.mxu0 0
  %1823 = vmatprep.subr.bf16.mxu0 0
  %1824 = vmatpush1.bf16.msra.mxu0 0
  %1825 = vmatprep.subr.bf16.mxu0 0
  %1826 = vmatpush1.bf16.msra.mxu0 0
  %1827 = vmatprep.subr.bf16.mxu0 0
  %1828 = vmatpush1.bf16.msra.mxu0 0
  %1829 = vmatprep.subr.bf16.mxu0 0
  %1830 = vmatpush1.bf16.msra.mxu0 0
  %1831 = vmatprep.mubr.bf16.mxu0 0
  %1832 = vmatmul.mubr.bf16.gmra.mrb[0].mxu0 %v1326
  %v1833 = vpop.f32.mrb[0].mxu0
  %v1834 = vadd.f32 0.0, %v1833
  %v1835 = vpop.f32.mrb[0].mxu0
  %v1836 = vpop.f32.mrb[0].mxu0
  %v1837 = vpop.f32.mrb[0].mxu0
  %1838 = vdwg.mxu0
  %v1855 = vunpack.c.l.b16 %v1367
  %v1856 = vunpack.c.l.b16 %v1368
  %v1857 = vunpack.c.l.b16 %v1369
  %v1858 = vunpack.c.l.b16 %v1370
  %v1859 = vunpack.c.l.b16 %v1371
  %v1860 = vunpack.c.l.b16 %v1372
  %v1861 = vunpack.c.l.b16 %v1373
  %v1862 = vunpack.c.l.b16 %v1374
  %v1863 = vunpack.c.l.b16 %v1375
  %v1864 = vunpack.c.l.b16 %v1376
  %v1865 = vunpack.c.l.b16 %v1377
  %v1866 = vunpack.c.l.b16 %v1378
  %v1867 = vunpack.c.l.b16 %v1379
  %v1868 = vunpack.c.l.b16 %v1380
  %v1869 = vunpack.c.l.b16 %v1381
  %v1870 = vunpack.c.l.b16 %v1382
  %v1871 = vpack.c.b16 %v1856, %v1855
  %v1872 = vpack.c.b16 %v1858, %v1857
  %v1873 = vpack.c.b16 %v1860, %v1859
  %v1874 = vpack.c.b16 %v1862, %v1861
  %v1875 = vpack.c.b16 %v1864, %v1863
  %v1876 = vpack.c.b16 %v1866, %v1865
  %v1877 = vpack.c.b16 %v1868, %v1867
  %v1878 = vpack.c.b16 %v1870, %v1869
  %1887 = vmatprep.subr.bf16.mxu0 0
  %1888 = vmatpush1.bf16.msra.mxu0 %v1871
  %1889 = vmatprep.subr.bf16.mxu0 0
  %1890 = vmatpush1.bf16.msra.mxu0 %v1872
  %1891 = vmatprep.subr.bf16.mxu0 0
  %1892 = vmatpush1.bf16.msra.mxu0 %v1873
  %1893 = vmatprep.subr.bf16.mxu0 0
  %1894 = vmatpush1.bf16.msra.mxu0 %v1874
  %1895 = vmatprep.subr.bf16.mxu0 0
  %1896 = vmatpush1.bf16.msra.mxu0 %v1875
  %1897 = vmatprep.subr.bf16.mxu0 0
  %1898 = vmatpush1.bf16.msra.mxu0 %v1876
  %1899 = vmatprep.subr.bf16.mxu0 0
  %1900 = vmatpush1.bf16.msra.mxu0 %v1877
  %1901 = vmatprep.subr.bf16.mxu0 0
  %1902 = vmatpush1.bf16.msra.mxu0 %v1878
  %1903 = vmatprep.subr.bf16.mxu0 0
  %1904 = vmatpush1.bf16.msra.mxu0 0
  %1905 = vmatprep.subr.bf16.mxu0 0
  %1906 = vmatpush1.bf16.msra.mxu0 0
  %1907 = vmatprep.subr.bf16.mxu0 0
  %1908 = vmatpush1.bf16.msra.mxu0 0
  %1909 = vmatprep.subr.bf16.mxu0 0
  %1910 = vmatpush1.bf16.msra.mxu0 0
  %1911 = vmatprep.subr.bf16.mxu0 0
  %1912 = vmatpush1.bf16.msra.mxu0 0
  %1913 = vmatprep.subr.bf16.mxu0 0
  %1914 = vmatpush1.bf16.msra.mxu0 0
  %1915 = vmatprep.subr.bf16.mxu0 0
  %1916 = vmatpush1.bf16.msra.mxu0 0
  %1917 = vmatprep.subr.bf16.mxu0 0
  %1918 = vmatpush1.bf16.msra.mxu0 0
  %1919 = vmatprep.mubr.bf16.mxu0 0
  %1920 = vmatmul.mubr.bf16.gmra.mrb[0].mxu0 %v1327
  %v1921 = vpop.f32.mrb[0].mxu0
  %v1922 = vadd.f32 0.0, %v1921
  %v1923 = vpop.f32.mrb[0].mxu0
  %v1924 = vpop.f32.mrb[0].mxu0
  %v1925 = vpop.f32.mrb[0].mxu0
  %1926 = vdwg.mxu0
  %v1943 = vunpack.c.l.b16 %v1383
  %v1944 = vunpack.c.l.b16 %v1384
  %v1945 = vunpack.c.l.b16 %v1385
  %v1946 = vunpack.c.l.b16 %v1386
  %v1947 = vunpack.c.l.b16 %v1387
  %v1948 = vunpack.c.l.b16 %v1388
  %v1949 = vunpack.c.l.b16 %v1389
  %v1950 = vunpack.c.l.b16 %v1390
  %v1951 = vunpack.c.l.b16 %v1391
  %v1952 = vunpack.c.l.b16 %v1392
  %v1953 = vunpack.c.l.b16 %v1393
  %v1954 = vunpack.c.l.b16 %v1394
  %v1955 = vunpack.c.l.b16 %v1395
  %v1956 = vunpack.c.l.b16 %v1396
  %v1957 = vunpack.c.l.b16 %v1397
  %v1958 = vunpack.c.l.b16 %v1398
  %v1959 = vpack.c.b16 %v1944, %v1943
  %v1960 = vpack.c.b16 %v1946, %v1945
  %v1961 = vpack.c.b16 %v1948, %v1947
  %v1962 = vpack.c.b16 %v1950, %v1949
  %v1963 = vpack.c.b16 %v1952, %v1951
  %v1964 = vpack.c.b16 %v1954, %v1953
  %v1965 = vpack.c.b16 %v1956, %v1955
  %v1966 = vpack.c.b16 %v1958, %v1957
  %1975 = vmatprep.subr.bf16.mxu0 0
  %1976 = vmatpush1.bf16.msra.mxu0 %v1959
  %1977 = vmatprep.subr.bf16.mxu0 0
  %1978 = vmatpush1.bf16.msra.mxu0 %v1960
  %1979 = vmatprep.subr.bf16.mxu0 0
  %1980 = vmatpush1.bf16.msra.mxu0 %v1961
  %1981 = vmatprep.subr.bf16.mxu0 0
  %1982 = vmatpush1.bf16.msra.mxu0 %v1962
  %1983 = vmatprep.subr.bf16.mxu0 0
  %1984 = vmatpush1.bf16.msra.mxu0 %v1963
  %1985 = vmatprep.subr.bf16.mxu0 0
  %1986 = vmatpush1.bf16.msra.mxu0 %v1964
  %1987 = vmatprep.subr.bf16.mxu0 0
  %1988 = vmatpush1.bf16.msra.mxu0 %v1965
  %1989 = vmatprep.subr.bf16.mxu0 0
  %1990 = vmatpush1.bf16.msra.mxu0 %v1966
  %1991 = vmatprep.subr.bf16.mxu0 0
  %1992 = vmatpush1.bf16.msra.mxu0 0
  %1993 = vmatprep.subr.bf16.mxu0 0
  %1994 = vmatpush1.bf16.msra.mxu0 0
  %1995 = vmatprep.subr.bf16.mxu0 0
  %1996 = vmatpush1.bf16.msra.mxu0 0
  %1997 = vmatprep.subr.bf16.mxu0 0
  %1998 = vmatpush1.bf16.msra.mxu0 0
  %1999 = vmatprep.subr.bf16.mxu0 0
  %2000 = vmatpush1.bf16.msra.mxu0 0
  %2001 = vmatprep.subr.bf16.mxu0 0
  %2002 = vmatpush1.bf16.msra.mxu0 0
  %2003 = vmatprep.subr.bf16.mxu0 0
  %2004 = vmatpush1.bf16.msra.mxu0 0
  %2005 = vmatprep.subr.bf16.mxu0 0
  %2006 = vmatpush1.bf16.msra.mxu0 0
  %2007 = vmatprep.mubr.bf16.mxu0 0
  %2008 = vmatmul.mubr.bf16.gmra.mrb[0].mxu0 %v1328
  %v2009 = vpop.f32.mrb[0].mxu0
  %v2010 = vadd.f32 0.0, %v2009
  %v2011 = vpop.f32.mrb[0].mxu0
  %v2012 = vpop.f32.mrb[0].mxu0
  %v2013 = vpop.f32.mrb[0].mxu0
  %2014 = vdwg.mxu0
  %v2031 = vunpack.c.l.b16 %v1399
  %v2032 = vunpack.c.l.b16 %v1400
  %v2033 = vunpack.c.l.b16 %v1401
  %v2034 = vunpack.c.l.b16 %v1402
  %v2035 = vunpack.c.l.b16 %v1403
  %v2036 = vunpack.c.l.b16 %v1404
  %v2037 = vunpack.c.l.b16 %v1405
  %v2038 = vunpack.c.l.b16 %v1406
  %v2039 = vunpack.c.l.b16 %v1407
  %v2040 = vunpack.c.l.b16 %v1408
  %v2041 = vunpack.c.l.b16 %v1409
  %v2042 = vunpack.c.l.b16 %v1410
  %v2043 = vunpack.c.l.b16 %v1411
  %v2044 = vunpack.c.l.b16 %v1412
  %v2045 = vunpack.c.l.b16 %v1413
  %v2046 = vunpack.c.l.b16 %v1414
  %v2047 = vpack.c.b16 %v2032, %v2031
  %v2048 = vpack.c.b16 %v2034, %v2033
  %v2049 = vpack.c.b16 %v2036, %v2035
  %v2050 = vpack.c.b16 %v2038, %v2037
  %v2051 = vpack.c.b16 %v2040, %v2039
  %v2052 = vpack.c.b16 %v2042, %v2041
  %v2053 = vpack.c.b16 %v2044, %v2043
  %v2054 = vpack.c.b16 %v2046, %v2045
  %2063 = vmatprep.subr.bf16.mxu0 0
  %2064 = vmatpush1.bf16.msra.mxu0 %v2047
  %2065 = vmatprep.subr.bf16.mxu0 0
  %2066 = vmatpush1.bf16.msra.mxu0 %v2048
  %2067 = vmatprep.subr.bf16.mxu0 0
  %2068 = vmatpush1.bf16.msra.mxu0 %v2049
  %2069 = vmatprep.subr.bf16.mxu0 0
  %2070 = vmatpush1.bf16.msra.mxu0 %v2050
  %2071 = vmatprep.subr.bf16.mxu0 0
  %2072 = vmatpush1.bf16.msra.mxu0 %v2051
  %2073 = vmatprep.subr.bf16.mxu0 0
  %2074 = vmatpush1.bf16.msra.mxu0 %v2052
  %2075 = vmatprep.subr.bf16.mxu0 0
  %2076 = vmatpush1.bf16.msra.mxu0 %v2053
  %2077 = vmatprep.subr.bf16.mxu0 0
  %2078 = vmatpush1.bf16.msra.mxu0 %v2054
  %2079 = vmatprep.subr.bf16.mxu0 0
  %2080 = vmatpush1.bf16.msra.mxu0 0
  %2081 = vmatprep.subr.bf16.mxu0 0
  %2082 = vmatpush1.bf16.msra.mxu0 0
  %2083 = vmatprep.subr.bf16.mxu0 0
  %2084 = vmatpush1.bf16.msra.mxu0 0
  %2085 = vmatprep.subr.bf16.mxu0 0
  %2086 = vmatpush1.bf16.msra.mxu0 0
  %2087 = vmatprep.subr.bf16.mxu0 0
  %2088 = vmatpush1.bf16.msra.mxu0 0
  %2089 = vmatprep.subr.bf16.mxu0 0
  %2090 = vmatpush1.bf16.msra.mxu0 0
  %2091 = vmatprep.subr.bf16.mxu0 0
  %2092 = vmatpush1.bf16.msra.mxu0 0
  %2093 = vmatprep.subr.bf16.mxu0 0
  %2094 = vmatpush1.bf16.msra.mxu0 0
  %2095 = vmatprep.mubr.bf16.mxu0 0
  %2096 = vmatmul.mubr.bf16.gmra.mrb[0].mxu0 %v1329
  %v2097 = vpop.f32.mrb[0].mxu0
  %v2098 = vadd.f32 0.0, %v2097
  %v2099 = vpop.f32.mrb[0].mxu0
  %v2100 = vpop.f32.mrb[0].mxu0
  %v2101 = vpop.f32.mrb[0].mxu0
  %2102 = vdwg.mxu0
  %v2119 = vunpack.c.l.b16 %v1415
  %v2120 = vunpack.c.l.b16 %v1416
  %v2121 = vunpack.c.l.b16 %v1417
  %v2122 = vunpack.c.l.b16 %v1418
  %v2123 = vunpack.c.l.b16 %v1419
  %v2124 = vunpack.c.l.b16 %v1420
  %v2125 = vunpack.c.l.b16 %v1421
  %v2126 = vunpack.c.l.b16 %v1422
  %v2127 = vunpack.c.l.b16 %v1423
  %v2128 = vunpack.c.l.b16 %v1424
  %v2129 = vunpack.c.l.b16 %v1425
  %v2130 = vunpack.c.l.b16 %v1426
  %v2131 = vunpack.c.l.b16 %v1427
  %v2132 = vunpack.c.l.b16 %v1428
  %v2133 = vunpack.c.l.b16 %v1429
  %v2134 = vunpack.c.l.b16 %v1430
  %v2135 = vpack.c.b16 %v2120, %v2119
  %v2136 = vpack.c.b16 %v2122, %v2121
  %v2137 = vpack.c.b16 %v2124, %v2123
  %v2138 = vpack.c.b16 %v2126, %v2125
  %v2139 = vpack.c.b16 %v2128, %v2127
  %v2140 = vpack.c.b16 %v2130, %v2129
  %v2141 = vpack.c.b16 %v2132, %v2131
  %v2142 = vpack.c.b16 %v2134, %v2133
  %2151 = vmatprep.subr.bf16.mxu0 0
  %2152 = vmatpush1.bf16.msra.mxu0 %v2135
  %2153 = vmatprep.subr.bf16.mxu0 0
  %2154 = vmatpush1.bf16.msra.mxu0 %v2136
  %2155 = vmatprep.subr.bf16.mxu0 0
  %2156 = vmatpush1.bf16.msra.mxu0 %v2137
  %2157 = vmatprep.subr.bf16.mxu0 0
  %2158 = vmatpush1.bf16.msra.mxu0 %v2138
  %2159 = vmatprep.subr.bf16.mxu0 0
  %2160 = vmatpush1.bf16.msra.mxu0 %v2139
  %2161 = vmatprep.subr.bf16.mxu0 0
  %2162 = vmatpush1.bf16.msra.mxu0 %v2140
  %2163 = vmatprep.subr.bf16.mxu0 0
  %2164 = vmatpush1.bf16.msra.mxu0 %v2141
  %2165 = vmatprep.subr.bf16.mxu0 0
  %2166 = vmatpush1.bf16.msra.mxu0 %v2142
  %2167 = vmatprep.subr.bf16.mxu0 0
  %2168 = vmatpush1.bf16.msra.mxu0 0
  %2169 = vmatprep.subr.bf16.mxu0 0
  %2170 = vmatpush1.bf16.msra.mxu0 0
  %2171 = vmatprep.subr.bf16.mxu0 0
  %2172 = vmatpush1.bf16.msra.mxu0 0
  %2173 = vmatprep.subr.bf16.mxu0 0
  %2174 = vmatpush1.bf16.msra.mxu0 0
  %2175 = vmatprep.subr.bf16.mxu0 0
  %2176 = vmatpush1.bf16.msra.mxu0 0
  %2177 = vmatprep.subr.bf16.mxu0 0
  %2178 = vmatpush1.bf16.msra.mxu0 0
  %2179 = vmatprep.subr.bf16.mxu0 0
  %2180 = vmatpush1.bf16.msra.mxu0 0
  %2181 = vmatprep.subr.bf16.mxu0 0
  %2182 = vmatpush1.bf16.msra.mxu0 0
  %2183 = vmatprep.mubr.bf16.mxu0 0
  %2184 = vmatmul.mubr.bf16.gmra.mrb[0].mxu0 %v1330
  %v2185 = vpop.f32.mrb[0].mxu0
  %v2186 = vadd.f32 0.0, %v2185
  %v2187 = vpop.f32.mrb[0].mxu0
  %v2188 = vpop.f32.mrb[0].mxu0
  %v2189 = vpop.f32.mrb[0].mxu0
  %2190 = vdwg.mxu0
  %v2207 = vunpack.c.l.b16 %v1431
  %v2208 = vunpack.c.l.b16 %v1432
  %v2209 = vunpack.c.l.b16 %v1433
  %v2210 = vunpack.c.l.b16 %v1434
  %v2211 = vunpack.c.l.b16 %v1435
  %v2212 = vunpack.c.l.b16 %v1436
  %v2213 = vunpack.c.l.b16 %v1437
  %v2214 = vunpack.c.l.b16 %v1438
  %v2215 = vunpack.c.l.b16 %v1439
  %v2216 = vunpack.c.l.b16 %v1440
  %v2217 = vunpack.c.l.b16 %v1441
  %v2218 = vunpack.c.l.b16 %v1442
  %v2219 = vunpack.c.l.b16 %v1443
  %v2220 = vunpack.c.l.b16 %v1444
  %v2221 = vunpack.c.l.b16 %v1445
  %v2222 = vunpack.c.l.b16 %v1446
  %v2223 = vpack.c.b16 %v2208, %v2207
  %v2224 = vpack.c.b16 %v2210, %v2209
  %v2225 = vpack.c.b16 %v2212, %v2211
  %v2226 = vpack.c.b16 %v2214, %v2213
  %v2227 = vpack.c.b16 %v2216, %v2215
  %v2228 = vpack.c.b16 %v2218, %v2217
  %v2229 = vpack.c.b16 %v2220, %v2219
  %v2230 = vpack.c.b16 %v2222, %v2221
  %2239 = vmatprep.subr.bf16.mxu0 0
  %2240 = vmatpush1.bf16.msra.mxu0 %v2223
  %2241 = vmatprep.subr.bf16.mxu0 0
  %2242 = vmatpush1.bf16.msra.mxu0 %v2224
  %2243 = vmatprep.subr.bf16.mxu0 0
  %2244 = vmatpush1.bf16.msra.mxu0 %v2225
  %2245 = vmatprep.subr.bf16.mxu0 0
  %2246 = vmatpush1.bf16.msra.mxu0 %v2226
  %2247 = vmatprep.subr.bf16.mxu0 0
  %2248 = vmatpush1.bf16.msra.mxu0 %v2227
  %2249 = vmatprep.subr.bf16.mxu0 0
  %2250 = vmatpush1.bf16.msra.mxu0 %v2228
  %2251 = vmatprep.subr.bf16.mxu0 0
  %2252 = vmatpush1.bf16.msra.mxu0 %v2229
  %2253 = vmatprep.subr.bf16.mxu0 0
  %2254 = vmatpush1.bf16.msra.mxu0 %v2230
  %2255 = vmatprep.subr.bf16.mxu0 0
  %2256 = vmatpush1.bf16.msra.mxu0 0
  %2257 = vmatprep.subr.bf16.mxu0 0
  %2258 = vmatpush1.bf16.msra.mxu0 0
  %2259 = vmatprep.subr.bf16.mxu0 0
  %2260 = vmatpush1.bf16.msra.mxu0 0
  %2261 = vmatprep.subr.bf16.mxu0 0
  %2262 = vmatpush1.bf16.msra.mxu0 0
  %2263 = vmatprep.subr.bf16.mxu0 0
  %2264 = vmatpush1.bf16.msra.mxu0 0
  %2265 = vmatprep.subr.bf16.mxu0 0
  %2266 = vmatpush1.bf16.msra.mxu0 0
  %2267 = vmatprep.subr.bf16.mxu0 0
  %2268 = vmatpush1.bf16.msra.mxu0 0
  %2269 = vmatprep.subr.bf16.mxu0 0
  %2270 = vmatpush1.bf16.msra.mxu0 0
  %2271 = vmatprep.mubr.bf16.mxu0 0
  %2272 = vmatmul.mubr.bf16.gmra.mrb[0].mxu0 %v1331
  %v2273 = vpop.f32.mrb[0].mxu0
  %v2274 = vadd.f32 0.0, %v2273
  %v2275 = vpop.f32.mrb[0].mxu0
  %v2276 = vpop.f32.mrb[0].mxu0
  %v2277 = vpop.f32.mrb[0].mxu0
  %2278 = vdwg.mxu0
  %v2295 = vunpack.c.l.b16 %v1447
  %v2296 = vunpack.c.l.b16 %v1448
  %v2297 = vunpack.c.l.b16 %v1449
  %v2298 = vunpack.c.l.b16 %v1450
  %v2299 = vunpack.c.l.b16 %v1451
  %v2300 = vunpack.c.l.b16 %v1452
  %v2301 = vunpack.c.l.b16 %v1453
  %v2302 = vunpack.c.l.b16 %v1454
  %v2303 = vunpack.c.l.b16 %v1455
  %v2304 = vunpack.c.l.b16 %v1456
  %v2305 = vunpack.c.l.b16 %v1457
  %v2306 = vunpack.c.l.b16 %v1458
  %v2307 = vunpack.c.l.b16 %v1459
  %v2308 = vunpack.c.l.b16 %v1460
  %v2309 = vunpack.c.l.b16 %v1461
  %v2310 = vunpack.c.l.b16 %v1462
  %v2311 = vpack.c.b16 %v2296, %v2295
  %v2312 = vpack.c.b16 %v2298, %v2297
  %v2313 = vpack.c.b16 %v2300, %v2299
  %v2314 = vpack.c.b16 %v2302, %v2301
  %v2315 = vpack.c.b16 %v2304, %v2303
  %v2316 = vpack.c.b16 %v2306, %v2305
  %v2317 = vpack.c.b16 %v2308, %v2307
  %v2318 = vpack.c.b16 %v2310, %v2309
  %2327 = vmatprep.subr.bf16.mxu0 0
  %2328 = vmatpush1.bf16.msra.mxu0 %v2311
  %2329 = vmatprep.subr.bf16.mxu0 0
  %2330 = vmatpush1.bf16.msra.mxu0 %v2312
  %2331 = vmatprep.subr.bf16.mxu0 0
  %2332 = vmatpush1.bf16.msra.mxu0 %v2313
  %2333 = vmatprep.subr.bf16.mxu0 0
  %2334 = vmatpush1.bf16.msra.mxu0 %v2314
  %2335 = vmatprep.subr.bf16.mxu0 0
  %2336 = vmatpush1.bf16.msra.mxu0 %v2315
  %2337 = vmatprep.subr.bf16.mxu0 0
  %2338 = vmatpush1.bf16.msra.mxu0 %v2316
  %2339 = vmatprep.subr.bf16.mxu0 0
  %2340 = vmatpush1.bf16.msra.mxu0 %v2317
  %2341 = vmatprep.subr.bf16.mxu0 0
  %2342 = vmatpush1.bf16.msra.mxu0 %v2318
  %2343 = vmatprep.subr.bf16.mxu0 0
  %2344 = vmatpush1.bf16.msra.mxu0 0
  %2345 = vmatprep.subr.bf16.mxu0 0
  %2346 = vmatpush1.bf16.msra.mxu0 0
  %2347 = vmatprep.subr.bf16.mxu0 0
  %2348 = vmatpush1.bf16.msra.mxu0 0
  %2349 = vmatprep.subr.bf16.mxu0 0
  %2350 = vmatpush1.bf16.msra.mxu0 0
  %2351 = vmatprep.subr.bf16.mxu0 0
  %2352 = vmatpush1.bf16.msra.mxu0 0
  %2353 = vmatprep.subr.bf16.mxu0 0
  %2354 = vmatpush1.bf16.msra.mxu0 0
  %2355 = vmatprep.subr.bf16.mxu0 0
  %2356 = vmatpush1.bf16.msra.mxu0 0
  %2357 = vmatprep.subr.bf16.mxu0 0
  %2358 = vmatpush1.bf16.msra.mxu0 0
  %2359 = vmatprep.mubr.bf16.mxu0 0
  %2360 = vmatmul.mubr.bf16.gmra.mrb[0].mxu0 %v1332
  %v2361 = vpop.f32.mrb[0].mxu0
  %v2362 = vadd.f32 0.0, %v2361
  %v2363 = vpop.f32.mrb[0].mxu0
  %v2364 = vpop.f32.mrb[0].mxu0
  %v2365 = vpop.f32.mrb[0].mxu0
  %2366 = vdwg.mxu0
  %v2383 = vunpack.c.l.b16 %v1463
  %v2384 = vunpack.c.l.b16 %v1464
  %v2385 = vunpack.c.l.b16 %v1465
  %v2386 = vunpack.c.l.b16 %v1466
  %v2387 = vunpack.c.l.b16 %v1467
  %v2388 = vunpack.c.l.b16 %v1468
  %v2389 = vunpack.c.l.b16 %v1469
  %v2390 = vunpack.c.l.b16 %v1470
  %v2391 = vunpack.c.l.b16 %v1471
  %v2392 = vunpack.c.l.b16 %v1472
  %v2393 = vunpack.c.l.b16 %v1473
  %v2394 = vunpack.c.l.b16 %v1474
  %v2395 = vunpack.c.l.b16 %v1475
  %v2396 = vunpack.c.l.b16 %v1476
  %v2397 = vunpack.c.l.b16 %v1477
  %v2398 = vunpack.c.l.b16 %v1478
  %v2399 = vpack.c.b16 %v2384, %v2383
  %v2400 = vpack.c.b16 %v2386, %v2385
  %v2401 = vpack.c.b16 %v2388, %v2387
  %v2402 = vpack.c.b16 %v2390, %v2389
  %v2403 = vpack.c.b16 %v2392, %v2391
  %v2404 = vpack.c.b16 %v2394, %v2393
  %v2405 = vpack.c.b16 %v2396, %v2395
  %v2406 = vpack.c.b16 %v2398, %v2397
  %2415 = vmatprep.subr.bf16.mxu0 0
  %2416 = vmatpush1.bf16.msra.mxu0 %v2399
  %2417 = vmatprep.subr.bf16.mxu0 0
  %2418 = vmatpush1.bf16.msra.mxu0 %v2400
  %2419 = vmatprep.subr.bf16.mxu0 0
  %2420 = vmatpush1.bf16.msra.mxu0 %v2401
  %2421 = vmatprep.subr.bf16.mxu0 0
  %2422 = vmatpush1.bf16.msra.mxu0 %v2402
  %2423 = vmatprep.subr.bf16.mxu0 0
  %2424 = vmatpush1.bf16.msra.mxu0 %v2403
  %2425 = vmatprep.subr.bf16.mxu0 0
  %2426 = vmatpush1.bf16.msra.mxu0 %v2404
  %2427 = vmatprep.subr.bf16.mxu0 0
  %2428 = vmatpush1.bf16.msra.mxu0 %v2405
  %2429 = vmatprep.subr.bf16.mxu0 0
  %2430 = vmatpush1.bf16.msra.mxu0 %v2406
  %2431 = vmatprep.subr.bf16.mxu0 0
  %2432 = vmatpush1.bf16.msra.mxu0 0
  %2433 = vmatprep.subr.bf16.mxu0 0
  %2434 = vmatpush1.bf16.msra.mxu0 0
  %2435 = vmatprep.subr.bf16.mxu0 0
  %2436 = vmatpush1.bf16.msra.mxu0 0
  %2437 = vmatprep.subr.bf16.mxu0 0
  %2438 = vmatpush1.bf16.msra.mxu0 0
  %2439 = vmatprep.subr.bf16.mxu0 0
  %2440 = vmatpush1.bf16.msra.mxu0 0
  %2441 = vmatprep.subr.bf16.mxu0 0
  %2442 = vmatpush1.bf16.msra.mxu0 0
  %2443 = vmatprep.subr.bf16.mxu0 0
  %2444 = vmatpush1.bf16.msra.mxu0 0
  %2445 = vmatprep.subr.bf16.mxu0 0
  %2446 = vmatpush1.bf16.msra.mxu0 0
  %2447 = vmatprep.mubr.bf16.mxu0 0
  %2448 = vmatmul.mubr.bf16.gmra.mrb[0].mxu0 %v1333
  %v2449 = vpop.f32.mrb[0].mxu0
  %v2450 = vadd.f32 0.0, %v2449
  %v2451 = vpop.f32.mrb[0].mxu0
  %v2452 = vpop.f32.mrb[0].mxu0
  %v2453 = vpop.f32.mrb[0].mxu0
  %2454 = vdwg.mxu0
  %v2471 = vunpack.c.l.b16 %v1479
  %v2472 = vunpack.c.l.b16 %v1480
  %v2473 = vunpack.c.l.b16 %v1481
  %v2474 = vunpack.c.l.b16 %v1482
  %v2475 = vunpack.c.l.b16 %v1483
  %v2476 = vunpack.c.l.b16 %v1484
  %v2477 = vunpack.c.l.b16 %v1485
  %v2478 = vunpack.c.l.b16 %v1486
  %v2479 = vunpack.c.l.b16 %v1487
  %v2480 = vunpack.c.l.b16 %v1488
  %v2481 = vunpack.c.l.b16 %v1489
  %v2482 = vunpack.c.l.b16 %v1490
  %v2483 = vunpack.c.l.b16 %v1491
  %v2484 = vunpack.c.l.b16 %v1492
  %v2485 = vunpack.c.l.b16 %v1493
  %v2486 = vunpack.c.l.b16 %v1494
  %v2487 = vpack.c.b16 %v2472, %v2471
  %v2488 = vpack.c.b16 %v2474, %v2473
  %v2489 = vpack.c.b16 %v2476, %v2475
  %v2490 = vpack.c.b16 %v2478, %v2477
  %v2491 = vpack.c.b16 %v2480, %v2479
  %v2492 = vpack.c.b16 %v2482, %v2481
  %v2493 = vpack.c.b16 %v2484, %v2483
  %v2494 = vpack.c.b16 %v2486, %v2485
  %2503 = vmatprep.subr.bf16.mxu0 0
  %2504 = vmatpush1.bf16.msra.mxu0 %v2487
  %2505 = vmatprep.subr.bf16.mxu0 0
  %2506 = vmatpush1.bf16.msra.mxu0 %v2488
  %2507 = vmatprep.subr.bf16.mxu0 0
  %2508 = vmatpush1.bf16.msra.mxu0 %v2489
  %2509 = vmatprep.subr.bf16.mxu0 0
  %2510 = vmatpush1.bf16.msra.mxu0 %v2490
  %2511 = vmatprep.subr.bf16.mxu0 0
  %2512 = vmatpush1.bf16.msra.mxu0 %v2491
  %2513 = vmatprep.subr.bf16.mxu0 0
  %2514 = vmatpush1.bf16.msra.mxu0 %v2492
  %2515 = vmatprep.subr.bf16.mxu0 0
  %2516 = vmatpush1.bf16.msra.mxu0 %v2493
  %2517 = vmatprep.subr.bf16.mxu0 0
  %2518 = vmatpush1.bf16.msra.mxu0 %v2494
  %2519 = vmatprep.subr.bf16.mxu0 0
  %2520 = vmatpush1.bf16.msra.mxu0 0
  %2521 = vmatprep.subr.bf16.mxu0 0
  %2522 = vmatpush1.bf16.msra.mxu0 0
  %2523 = vmatprep.subr.bf16.mxu0 0
  %2524 = vmatpush1.bf16.msra.mxu0 0
  %2525 = vmatprep.subr.bf16.mxu0 0
  %2526 = vmatpush1.bf16.msra.mxu0 0
  %2527 = vmatprep.subr.bf16.mxu0 0
  %2528 = vmatpush1.bf16.msra.mxu0 0
  %2529 = vmatprep.subr.bf16.mxu0 0
  %2530 = vmatpush1.bf16.msra.mxu0 0
  %2531 = vmatprep.subr.bf16.mxu0 0
  %2532 = vmatpush1.bf16.msra.mxu0 0
  %2533 = vmatprep.subr.bf16.mxu0 0
  %2534 = vmatpush1.bf16.msra.mxu0 0
  %2535 = vmatprep.mubr.bf16.mxu0 0
  %2536 = vmatmul.mubr.bf16.gmra.mrb[0].mxu0 %v1334
  %v2537 = vpop.f32.mrb[0].mxu0
  %v2538 = vadd.f32 0.0, %v2537
  %v2539 = vpop.f32.mrb[0].mxu0
  %v2540 = vpop.f32.mrb[0].mxu0
  %v2541 = vpop.f32.mrb[0].mxu0
  %2542 = vdwg.mxu0
  %v2559 = vunpack.c.l.b16 %v1495
  %v2560 = vunpack.c.l.b16 %v1496
  %v2561 = vunpack.c.l.b16 %v1497
  %v2562 = vunpack.c.l.b16 %v1498
  %v2563 = vunpack.c.l.b16 %v1499
  %v2564 = vunpack.c.l.b16 %v1500
  %v2565 = vunpack.c.l.b16 %v1501
  %v2566 = vunpack.c.l.b16 %v1502
  %v2567 = vunpack.c.l.b16 %v1503
  %v2568 = vunpack.c.l.b16 %v1504
  %v2569 = vunpack.c.l.b16 %v1505
  %v2570 = vunpack.c.l.b16 %v1506
  %v2571 = vunpack.c.l.b16 %v1507
  %v2572 = vunpack.c.l.b16 %v1508
  %v2573 = vunpack.c.l.b16 %v1509
  %v2574 = vunpack.c.l.b16 %v1510
  %v2575 = vpack.c.b16 %v2560, %v2559
  %v2576 = vpack.c.b16 %v2562, %v2561
  %v2577 = vpack.c.b16 %v2564, %v2563
  %v2578 = vpack.c.b16 %v2566, %v2565
  %v2579 = vpack.c.b16 %v2568, %v2567
  %v2580 = vpack.c.b16 %v2570, %v2569
  %v2581 = vpack.c.b16 %v2572, %v2571
  %v2582 = vpack.c.b16 %v2574, %v2573
  %2591 = vmatprep.subr.bf16.mxu0 0
  %2592 = vmatpush1.bf16.msra.mxu0 %v2575
  %2593 = vmatprep.subr.bf16.mxu0 0
  %2594 = vmatpush1.bf16.msra.mxu0 %v2576
  %2595 = vmatprep.subr.bf16.mxu0 0
  %2596 = vmatpush1.bf16.msra.mxu0 %v2577
  %2597 = vmatprep.subr.bf16.mxu0 0
  %2598 = vmatpush1.bf16.msra.mxu0 %v2578
  %2599 = vmatprep.subr.bf16.mxu0 0
  %2600 = vmatpush1.bf16.msra.mxu0 %v2579
  %2601 = vmatprep.subr.bf16.mxu0 0
  %2602 = vmatpush1.bf16.msra.mxu0 %v2580
  %2603 = vmatprep.subr.bf16.mxu0 0
  %2604 = vmatpush1.bf16.msra.mxu0 %v2581
  %2605 = vmatprep.subr.bf16.mxu0 0
  %2606 = vmatpush1.bf16.msra.mxu0 %v2582
  %2607 = vmatprep.subr.bf16.mxu0 0
  %2608 = vmatpush1.bf16.msra.mxu0 0
  %2609 = vmatprep.subr.bf16.mxu0 0
  %2610 = vmatpush1.bf16.msra.mxu0 0
  %2611 = vmatprep.subr.bf16.mxu0 0
  %2612 = vmatpush1.bf16.msra.mxu0 0
  %2613 = vmatprep.subr.bf16.mxu0 0
  %2614 = vmatpush1.bf16.msra.mxu0 0
  %2615 = vmatprep.subr.bf16.mxu0 0
  %2616 = vmatpush1.bf16.msra.mxu0 0
  %2617 = vmatprep.subr.bf16.mxu0 0
  %2618 = vmatpush1.bf16.msra.mxu0 0
  %2619 = vmatprep.subr.bf16.mxu0 0
  %2620 = vmatpush1.bf16.msra.mxu0 0
  %2621 = vmatprep.subr.bf16.mxu0 0
  %2622 = vmatpush1.bf16.msra.mxu0 0
  %2623 = vmatprep.mubr.bf16.mxu0 0
  %2624 = vmatmul.mubr.bf16.gmra.mrb[0].mxu0 %v1335
  %v2625 = vpop.f32.mrb[0].mxu0
  %v2626 = vadd.f32 0.0, %v2625
  %v2627 = vpop.f32.mrb[0].mxu0
  %v2628 = vpop.f32.mrb[0].mxu0
  %v2629 = vpop.f32.mrb[0].mxu0
  %2630 = vdwg.mxu0
  %v2647 = vunpack.c.l.b16 %v1511
  %v2648 = vunpack.c.l.b16 %v1512
  %v2649 = vunpack.c.l.b16 %v1513
  %v2650 = vunpack.c.l.b16 %v1514
  %v2651 = vunpack.c.l.b16 %v1515
  %v2652 = vunpack.c.l.b16 %v1516
  %v2653 = vunpack.c.l.b16 %v1517
  %v2654 = vunpack.c.l.b16 %v1518
  %v2655 = vunpack.c.l.b16 %v1519
  %v2656 = vunpack.c.l.b16 %v1520
  %v2657 = vunpack.c.l.b16 %v1521
  %v2658 = vunpack.c.l.b16 %v1522
  %v2659 = vunpack.c.l.b16 %v1523
  %v2660 = vunpack.c.l.b16 %v1524
  %v2661 = vunpack.c.l.b16 %v1525
  %v2662 = vunpack.c.l.b16 %v1526
  %v2663 = vpack.c.b16 %v2648, %v2647
  %v2664 = vpack.c.b16 %v2650, %v2649
  %v2665 = vpack.c.b16 %v2652, %v2651
  %v2666 = vpack.c.b16 %v2654, %v2653
  %v2667 = vpack.c.b16 %v2656, %v2655
  %v2668 = vpack.c.b16 %v2658, %v2657
  %v2669 = vpack.c.b16 %v2660, %v2659
  %v2670 = vpack.c.b16 %v2662, %v2661
  %2679 = vmatprep.subr.bf16.mxu0 0
  %2680 = vmatpush1.bf16.msra.mxu0 %v2663
  %2681 = vmatprep.subr.bf16.mxu0 0
  %2682 = vmatpush1.bf16.msra.mxu0 %v2664
  %2683 = vmatprep.subr.bf16.mxu0 0
  %2684 = vmatpush1.bf16.msra.mxu0 %v2665
  %2685 = vmatprep.subr.bf16.mxu0 0
  %2686 = vmatpush1.bf16.msra.mxu0 %v2666
  %2687 = vmatprep.subr.bf16.mxu0 0
  %2688 = vmatpush1.bf16.msra.mxu0 %v2667
  %2689 = vmatprep.subr.bf16.mxu0 0
  %2690 = vmatpush1.bf16.msra.mxu0 %v2668
  %2691 = vmatprep.subr.bf16.mxu0 0
  %2692 = vmatpush1.bf16.msra.mxu0 %v2669
  %2693 = vmatprep.subr.bf16.mxu0 0
  %2694 = vmatpush1.bf16.msra.mxu0 %v2670
  %2695 = vmatprep.subr.bf16.mxu0 0
  %2696 = vmatpush1.bf16.msra.mxu0 0
  %2697 = vmatprep.subr.bf16.mxu0 0
  %2698 = vmatpush1.bf16.msra.mxu0 0
  %2699 = vmatprep.subr.bf16.mxu0 0
  %2700 = vmatpush1.bf16.msra.mxu0 0
  %2701 = vmatprep.subr.bf16.mxu0 0
  %2702 = vmatpush1.bf16.msra.mxu0 0
  %2703 = vmatprep.subr.bf16.mxu0 0
  %2704 = vmatpush1.bf16.msra.mxu0 0
  %2705 = vmatprep.subr.bf16.mxu0 0
  %2706 = vmatpush1.bf16.msra.mxu0 0
  %2707 = vmatprep.subr.bf16.mxu0 0
  %2708 = vmatpush1.bf16.msra.mxu0 0
  %2709 = vmatprep.subr.bf16.mxu0 0
  %2710 = vmatpush1.bf16.msra.mxu0 0
  %2711 = vmatprep.mubr.bf16.mxu0 0
  %2712 = vmatmul.mubr.bf16.gmra.mrb[0].mxu0 %v1336
  %v2713 = vpop.f32.mrb[0].mxu0
  %v2714 = vadd.f32 0.0, %v2713
  %v2715 = vpop.f32.mrb[0].mxu0
  %v2716 = vpop.f32.mrb[0].mxu0
  %v2717 = vpop.f32.mrb[0].mxu0
  %2718 = vdwg.mxu0
  %v2735 = vunpack.c.l.b16 %v1527
  %v2736 = vunpack.c.l.b16 %v1528
  %v2737 = vunpack.c.l.b16 %v1529
  %v2738 = vunpack.c.l.b16 %v1530
  %v2739 = vunpack.c.l.b16 %v1531
  %v2740 = vunpack.c.l.b16 %v1532
  %v2741 = vunpack.c.l.b16 %v1533
  %v2742 = vunpack.c.l.b16 %v1534
  %v2743 = vunpack.c.l.b16 %v1535
  %v2744 = vunpack.c.l.b16 %v1536
  %v2745 = vunpack.c.l.b16 %v1537
  %v2746 = vunpack.c.l.b16 %v1538
  %v2747 = vunpack.c.l.b16 %v1539
  %v2748 = vunpack.c.l.b16 %v1540
  %v2749 = vunpack.c.l.b16 %v1541
  %v2750 = vunpack.c.l.b16 %v1542
  %v2751 = vpack.c.b16 %v2736, %v2735
  %v2752 = vpack.c.b16 %v2738, %v2737
  %v2753 = vpack.c.b16 %v2740, %v2739
  %v2754 = vpack.c.b16 %v2742, %v2741
  %v2755 = vpack.c.b16 %v2744, %v2743
  %v2756 = vpack.c.b16 %v2746, %v2745
  %v2757 = vpack.c.b16 %v2748, %v2747
  %v2758 = vpack.c.b16 %v2750, %v2749
  %2767 = vmatprep.subr.bf16.mxu0 0
  %2768 = vmatpush1.bf16.msra.mxu0 %v2751
  %2769 = vmatprep.subr.bf16.mxu0 0
  %2770 = vmatpush1.bf16.msra.mxu0 %v2752
  %2771 = vmatprep.subr.bf16.mxu0 0
  %2772 = vmatpush1.bf16.msra.mxu0 %v2753
  %2773 = vmatprep.subr.bf16.mxu0 0
  %2774 = vmatpush1.bf16.msra.mxu0 %v2754
  %2775 = vmatprep.subr.bf16.mxu0 0
  %2776 = vmatpush1.bf16.msra.mxu0 %v2755
  %2777 = vmatprep.subr.bf16.mxu0 0
  %2778 = vmatpush1.bf16.msra.mxu0 %v2756
  %2779 = vmatprep.subr.bf16.mxu0 0
  %2780 = vmatpush1.bf16.msra.mxu0 %v2757
  %2781 = vmatprep.subr.bf16.mxu0 0
  %2782 = vmatpush1.bf16.msra.mxu0 %v2758
  %2783 = vmatprep.subr.bf16.mxu0 0
  %2784 = vmatpush1.bf16.msra.mxu0 0
  %2785 = vmatprep.subr.bf16.mxu0 0
  %2786 = vmatpush1.bf16.msra.mxu0 0
  %2787 = vmatprep.subr.bf16.mxu0 0
  %2788 = vmatpush1.bf16.msra.mxu0 0
  %2789 = vmatprep.subr.bf16.mxu0 0
  %2790 = vmatpush1.bf16.msra.mxu0 0
  %2791 = vmatprep.subr.bf16.mxu0 0
  %2792 = vmatpush1.bf16.msra.mxu0 0
  %2793 = vmatprep.subr.bf16.mxu0 0
  %2794 = vmatpush1.bf16.msra.mxu0 0
  %2795 = vmatprep.subr.bf16.mxu0 0
  %2796 = vmatpush1.bf16.msra.mxu0 0
  %2797 = vmatprep.subr.bf16.mxu0 0
  %2798 = vmatpush1.bf16.msra.mxu0 0
  %2799 = vmatprep.mubr.bf16.mxu0 0
  %2800 = vmatmul.mubr.bf16.gmra.mrb[0].mxu0 %v1337
  %v2801 = vpop.f32.mrb[0].mxu0
  %v2802 = vadd.f32 0.0, %v2801
  %v2803 = vpop.f32.mrb[0].mxu0
  %v2804 = vpop.f32.mrb[0].mxu0
  %v2805 = vpop.f32.mrb[0].mxu0
  %2806 = vdwg.mxu0
  %v2823 = vunpack.c.l.b16 %v1543
  %v2824 = vunpack.c.l.b16 %v1544
  %v2825 = vunpack.c.l.b16 %v1545
  %v2826 = vunpack.c.l.b16 %v1546
  %v2827 = vunpack.c.l.b16 %v1547
  %v2828 = vunpack.c.l.b16 %v1548
  %v2829 = vunpack.c.l.b16 %v1549
  %v2830 = vunpack.c.l.b16 %v1550
  %v2831 = vunpack.c.l.b16 %v1551
  %v2832 = vunpack.c.l.b16 %v1552
  %v2833 = vunpack.c.l.b16 %v1553
  %v2834 = vunpack.c.l.b16 %v1554
  %v2835 = vunpack.c.l.b16 %v1555
  %v2836 = vunpack.c.l.b16 %v1556
  %v2837 = vunpack.c.l.b16 %v1557
  %v2838 = vunpack.c.l.b16 %v1558
  %v2839 = vpack.c.b16 %v2824, %v2823
  %v2840 = vpack.c.b16 %v2826, %v2825
  %v2841 = vpack.c.b16 %v2828, %v2827
  %v2842 = vpack.c.b16 %v2830, %v2829
  %v2843 = vpack.c.b16 %v2832, %v2831
  %v2844 = vpack.c.b16 %v2834, %v2833
  %v2845 = vpack.c.b16 %v2836, %v2835
  %v2846 = vpack.c.b16 %v2838, %v2837
  %2855 = vmatprep.subr.bf16.mxu0 0
  %2856 = vmatpush1.bf16.msra.mxu0 %v2839
  %2857 = vmatprep.subr.bf16.mxu0 0
  %2858 = vmatpush1.bf16.msra.mxu0 %v2840
  %2859 = vmatprep.subr.bf16.mxu0 0
  %2860 = vmatpush1.bf16.msra.mxu0 %v2841
  %2861 = vmatprep.subr.bf16.mxu0 0
  %2862 = vmatpush1.bf16.msra.mxu0 %v2842
  %2863 = vmatprep.subr.bf16.mxu0 0
  %2864 = vmatpush1.bf16.msra.mxu0 %v2843
  %2865 = vmatprep.subr.bf16.mxu0 0
  %2866 = vmatpush1.bf16.msra.mxu0 %v2844
  %2867 = vmatprep.subr.bf16.mxu0 0
  %2868 = vmatpush1.bf16.msra.mxu0 %v2845
  %2869 = vmatprep.subr.bf16.mxu0 0
  %2870 = vmatpush1.bf16.msra.mxu0 %v2846
  %2871 = vmatprep.subr.bf16.mxu0 0
  %2872 = vmatpush1.bf16.msra.mxu0 0
  %2873 = vmatprep.subr.bf16.mxu0 0
  %2874 = vmatpush1.bf16.msra.mxu0 0
  %2875 = vmatprep.subr.bf16.mxu0 0
  %2876 = vmatpush1.bf16.msra.mxu0 0
  %2877 = vmatprep.subr.bf16.mxu0 0
  %2878 = vmatpush1.bf16.msra.mxu0 0
  %2879 = vmatprep.subr.bf16.mxu0 0
  %2880 = vmatpush1.bf16.msra.mxu0 0
  %2881 = vmatprep.subr.bf16.mxu0 0
  %2882 = vmatpush1.bf16.msra.mxu0 0
  %2883 = vmatprep.subr.bf16.mxu0 0
  %2884 = vmatpush1.bf16.msra.mxu0 0
  %2885 = vmatprep.subr.bf16.mxu0 0
  %2886 = vmatpush1.bf16.msra.mxu0 0
  %2887 = vmatprep.mubr.bf16.mxu0 0
  %2888 = vmatmul.mubr.bf16.gmra.mrb[0].mxu0 %v1338
  %v2889 = vpop.f32.mrb[0].mxu0
  %v2890 = vadd.f32 0.0, %v2889
  %v2891 = vpop.f32.mrb[0].mxu0
  %v2892 = vpop.f32.mrb[0].mxu0
  %v2893 = vpop.f32.mrb[0].mxu0
  %2894 = vdwg.mxu0
  %v2911 = vunpack.c.l.b16 %v1559
  %v2912 = vunpack.c.l.b16 %v1560
  %v2913 = vunpack.c.l.b16 %v1561
  %v2914 = vunpack.c.l.b16 %v1562
  %v2915 = vunpack.c.l.b16 %v1563
  %v2916 = vunpack.c.l.b16 %v1564
  %v2917 = vunpack.c.l.b16 %v1565
  %v2918 = vunpack.c.l.b16 %v1566
  %v2919 = vunpack.c.l.b16 %v1567
  %v2920 = vunpack.c.l.b16 %v1568
  %v2921 = vunpack.c.l.b16 %v1569
  %v2922 = vunpack.c.l.b16 %v1570
  %v2923 = vunpack.c.l.b16 %v1571
  %v2924 = vunpack.c.l.b16 %v1572
  %v2925 = vunpack.c.l.b16 %v1573
  %v2926 = vunpack.c.l.b16 %v1574
  %v2927 = vpack.c.b16 %v2912, %v2911
  %v2928 = vpack.c.b16 %v2914, %v2913
  %v2929 = vpack.c.b16 %v2916, %v2915
  %v2930 = vpack.c.b16 %v2918, %v2917
  %v2931 = vpack.c.b16 %v2920, %v2919
  %v2932 = vpack.c.b16 %v2922, %v2921
  %v2933 = vpack.c.b16 %v2924, %v2923
  %v2934 = vpack.c.b16 %v2926, %v2925
  %2943 = vmatprep.subr.bf16.mxu0 0
  %2944 = vmatpush1.bf16.msra.mxu0 %v2927
  %2945 = vmatprep.subr.bf16.mxu0 0
  %2946 = vmatpush1.bf16.msra.mxu0 %v2928
  %2947 = vmatprep.subr.bf16.mxu0 0
  %2948 = vmatpush1.bf16.msra.mxu0 %v2929
  %2949 = vmatprep.subr.bf16.mxu0 0
  %2950 = vmatpush1.bf16.msra.mxu0 %v2930
  %2951 = vmatprep.subr.bf16.mxu0 0
  %2952 = vmatpush1.bf16.msra.mxu0 %v2931
  %2953 = vmatprep.subr.bf16.mxu0 0
  %2954 = vmatpush1.bf16.msra.mxu0 %v2932
  %2955 = vmatprep.subr.bf16.mxu0 0
  %2956 = vmatpush1.bf16.msra.mxu0 %v2933
  %2957 = vmatprep.subr.bf16.mxu0 0
  %2958 = vmatpush1.bf16.msra.mxu0 %v2934
  %2959 = vmatprep.subr.bf16.mxu0 0
  %2960 = vmatpush1.bf16.msra.mxu0 0
  %2961 = vmatprep.subr.bf16.mxu0 0
  %2962 = vmatpush1.bf16.msra.mxu0 0
  %2963 = vmatprep.subr.bf16.mxu0 0
  %2964 = vmatpush1.bf16.msra.mxu0 0
  %2965 = vmatprep.subr.bf16.mxu0 0
  %2966 = vmatpush1.bf16.msra.mxu0 0
  %2967 = vmatprep.subr.bf16.mxu0 0
  %2968 = vmatpush1.bf16.msra.mxu0 0
  %2969 = vmatprep.subr.bf16.mxu0 0
  %2970 = vmatpush1.bf16.msra.mxu0 0
  %2971 = vmatprep.subr.bf16.mxu0 0
  %2972 = vmatpush1.bf16.msra.mxu0 0
  %2973 = vmatprep.subr.bf16.mxu0 0
  %2974 = vmatpush1.bf16.msra.mxu0 0
  %2975 = vmatprep.mubr.bf16.mxu0 0
  %2976 = vmatmul.mubr.bf16.gmra.mrb[0].mxu0 %v1339
  %v2977 = vpop.f32.mrb[0].mxu0
  %v2978 = vadd.f32 0.0, %v2977
  %v2979 = vpop.f32.mrb[0].mxu0
  %v2980 = vpop.f32.mrb[0].mxu0
  %v2981 = vpop.f32.mrb[0].mxu0
  %2982 = vdwg.mxu0
  %v2999 = vunpack.c.l.b16 %v1575
  %v3000 = vunpack.c.l.b16 %v1576
  %v3001 = vunpack.c.l.b16 %v1577
  %v3002 = vunpack.c.l.b16 %v1578
  %v3003 = vunpack.c.l.b16 %v1579
  %v3004 = vunpack.c.l.b16 %v1580
  %v3005 = vunpack.c.l.b16 %v1581
  %v3006 = vunpack.c.l.b16 %v1582
  %v3007 = vunpack.c.l.b16 %v1583
  %v3008 = vunpack.c.l.b16 %v1584
  %v3009 = vunpack.c.l.b16 %v1585
  %v3010 = vunpack.c.l.b16 %v1586
  %v3011 = vunpack.c.l.b16 %v1587
  %v3012 = vunpack.c.l.b16 %v1588
  %v3013 = vunpack.c.l.b16 %v1589
  %v3014 = vunpack.c.l.b16 %v1590
  %v3015 = vpack.c.b16 %v3000, %v2999
  %v3016 = vpack.c.b16 %v3002, %v3001
  %v3017 = vpack.c.b16 %v3004, %v3003
  %v3018 = vpack.c.b16 %v3006, %v3005
  %v3019 = vpack.c.b16 %v3008, %v3007
  %v3020 = vpack.c.b16 %v3010, %v3009
  %v3021 = vpack.c.b16 %v3012, %v3011
  %v3022 = vpack.c.b16 %v3014, %v3013
  %3031 = vmatprep.subr.bf16.mxu0 0
  %3032 = vmatpush1.bf16.msra.mxu0 %v3015
  %3033 = vmatprep.subr.bf16.mxu0 0
  %3034 = vmatpush1.bf16.msra.mxu0 %v3016
  %3035 = vmatprep.subr.bf16.mxu0 0
  %3036 = vmatpush1.bf16.msra.mxu0 %v3017
  %3037 = vmatprep.subr.bf16.mxu0 0
  %3038 = vmatpush1.bf16.msra.mxu0 %v3018
  %3039 = vmatprep.subr.bf16.mxu0 0
  %3040 = vmatpush1.bf16.msra.mxu0 %v3019
  %3041 = vmatprep.subr.bf16.mxu0 0
  %3042 = vmatpush1.bf16.msra.mxu0 %v3020
  %3043 = vmatprep.subr.bf16.mxu0 0
  %3044 = vmatpush1.bf16.msra.mxu0 %v3021
  %3045 = vmatprep.subr.bf16.mxu0 0
  %3046 = vmatpush1.bf16.msra.mxu0 %v3022
  %3047 = vmatprep.subr.bf16.mxu0 0
  %3048 = vmatpush1.bf16.msra.mxu0 0
  %3049 = vmatprep.subr.bf16.mxu0 0
  %3050 = vmatpush1.bf16.msra.mxu0 0
  %3051 = vmatprep.subr.bf16.mxu0 0
  %3052 = vmatpush1.bf16.msra.mxu0 0
  %3053 = vmatprep.subr.bf16.mxu0 0
  %3054 = vmatpush1.bf16.msra.mxu0 0
  %3055 = vmatprep.subr.bf16.mxu0 0
  %3056 = vmatpush1.bf16.msra.mxu0 0
  %3057 = vmatprep.subr.bf16.mxu0 0
  %3058 = vmatpush1.bf16.msra.mxu0 0
  %3059 = vmatprep.subr.bf16.mxu0 0
  %3060 = vmatpush1.bf16.msra.mxu0 0
  %3061 = vmatprep.subr.bf16.mxu0 0
  %3062 = vmatpush1.bf16.msra.mxu0 0
  %3063 = vmatprep.mubr.bf16.mxu0 0
  %3064 = vmatmul.mubr.bf16.gmra.mrb[0].mxu0 %v1340
  %v3065 = vpop.f32.mrb[0].mxu0
  %v3066 = vadd.f32 0.0, %v3065
  %v3067 = vpop.f32.mrb[0].mxu0
  %v3068 = vpop.f32.mrb[0].mxu0
  %v3069 = vpop.f32.mrb[0].mxu0
  %3070 = vdwg.mxu0
  %v3087 = vunpack.c.l.b16 %v1591
  %v3088 = vunpack.c.l.b16 %v1592
  %v3089 = vunpack.c.l.b16 %v1593
  %v3090 = vunpack.c.l.b16 %v1594
  %v3091 = vunpack.c.l.b16 %v1595
  %v3092 = vunpack.c.l.b16 %v1596
  %v3093 = vunpack.c.l.b16 %v1597
  %v3094 = vunpack.c.l.b16 %v1598
  %v3095 = vunpack.c.l.b16 %v1599
  %v3096 = vunpack.c.l.b16 %v1600
  %v3097 = vunpack.c.l.b16 %v1601
  %v3098 = vunpack.c.l.b16 %v1602
  %v3099 = vunpack.c.l.b16 %v1603
  %v3100 = vunpack.c.l.b16 %v1604
  %v3101 = vunpack.c.l.b16 %v1605
  %v3102 = vunpack.c.l.b16 %v1606
  %v3103 = vpack.c.b16 %v3088, %v3087
  %v3104 = vpack.c.b16 %v3090, %v3089
  %v3105 = vpack.c.b16 %v3092, %v3091
  %v3106 = vpack.c.b16 %v3094, %v3093
  %v3107 = vpack.c.b16 %v3096, %v3095
  %v3108 = vpack.c.b16 %v3098, %v3097
  %v3109 = vpack.c.b16 %v3100, %v3099
  %v3110 = vpack.c.b16 %v3102, %v3101
  %3119 = vmatprep.subr.bf16.mxu0 0
  %3120 = vmatpush1.bf16.msra.mxu0 %v3103
  %3121 = vmatprep.subr.bf16.mxu0 0
  %3122 = vmatpush1.bf16.msra.mxu0 %v3104
  %3123 = vmatprep.subr.bf16.mxu0 0
  %3124 = vmatpush1.bf16.msra.mxu0 %v3105
  %3125 = vmatprep.subr.bf16.mxu0 0
  %3126 = vmatpush1.bf16.msra.mxu0 %v3106
  %3127 = vmatprep.subr.bf16.mxu0 0
  %3128 = vmatpush1.bf16.msra.mxu0 %v3107
  %3129 = vmatprep.subr.bf16.mxu0 0
  %3130 = vmatpush1.bf16.msra.mxu0 %v3108
  %3131 = vmatprep.subr.bf16.mxu0 0
  %3132 = vmatpush1.bf16.msra.mxu0 %v3109
  %3133 = vmatprep.subr.bf16.mxu0 0
  %3134 = vmatpush1.bf16.msra.mxu0 %v3110
  %3135 = vmatprep.subr.bf16.mxu0 0
  %3136 = vmatpush1.bf16.msra.mxu0 0
  %3137 = vmatprep.subr.bf16.mxu0 0
  %3138 = vmatpush1.bf16.msra.mxu0 0
  %3139 = vmatprep.subr.bf16.mxu0 0
  %3140 = vmatpush1.bf16.msra.mxu0 0
  %3141 = vmatprep.subr.bf16.mxu0 0
  %3142 = vmatpush1.bf16.msra.mxu0 0
  %3143 = vmatprep.subr.bf16.mxu0 0
  %3144 = vmatpush1.bf16.msra.mxu0 0
  %3145 = vmatprep.subr.bf16.mxu0 0
  %3146 = vmatpush1.bf16.msra.mxu0 0
  %3147 = vmatprep.subr.bf16.mxu0 0
  %3148 = vmatpush1.bf16.msra.mxu0 0
  %3149 = vmatprep.subr.bf16.mxu0 0
  %3150 = vmatpush1.bf16.msra.mxu0 0
  %3151 = vmatprep.mubr.bf16.mxu0 0
  %3152 = vmatmul.mubr.bf16.gmra.mrb[0].mxu0 %v1341
  %v3153 = vpop.f32.mrb[0].mxu0
  %v3154 = vadd.f32 0.0, %v3153
  %v3155 = vpop.f32.mrb[0].mxu0
  %v3156 = vpop.f32.mrb[0].mxu0
  %v3157 = vpop.f32.mrb[0].mxu0
  %3158 = vdwg.mxu0
  %v3175 = vunpack.c.l.b16 %v1607
  %v3176 = vunpack.c.l.b16 %v1608
  %v3177 = vunpack.c.l.b16 %v1609
  %v3178 = vunpack.c.l.b16 %v1610
  %v3179 = vunpack.c.l.b16 %v1611
  %v3180 = vunpack.c.l.b16 %v1612
  %v3181 = vunpack.c.l.b16 %v1613
  %v3182 = vunpack.c.l.b16 %v1614
  %v3183 = vunpack.c.l.b16 %v1615
  %v3184 = vunpack.c.l.b16 %v1616
  %v3185 = vunpack.c.l.b16 %v1617
  %v3186 = vunpack.c.l.b16 %v1618
  %v3187 = vunpack.c.l.b16 %v1619
  %v3188 = vunpack.c.l.b16 %v1620
  %v3189 = vunpack.c.l.b16 %v1621
  %v3190 = vunpack.c.l.b16 %v1622
  %v3191 = vpack.c.b16 %v3176, %v3175
  %v3192 = vpack.c.b16 %v3178, %v3177
  %v3193 = vpack.c.b16 %v3180, %v3179
  %v3194 = vpack.c.b16 %v3182, %v3181
  %v3195 = vpack.c.b16 %v3184, %v3183
  %v3196 = vpack.c.b16 %v3186, %v3185
  %v3197 = vpack.c.b16 %v3188, %v3187
  %v3198 = vpack.c.b16 %v3190, %v3189
  %3207 = vmatprep.subr.bf16.mxu0 0
  %3208 = vmatpush1.bf16.msra.mxu0 %v3191
  %3209 = vmatprep.subr.bf16.mxu0 0
  %3210 = vmatpush1.bf16.msra.mxu0 %v3192
  %3211 = vmatprep.subr.bf16.mxu0 0
  %3212 = vmatpush1.bf16.msra.mxu0 %v3193
  %3213 = vmatprep.subr.bf16.mxu0 0
  %3214 = vmatpush1.bf16.msra.mxu0 %v3194
  %3215 = vmatprep.subr.bf16.mxu0 0
  %3216 = vmatpush1.bf16.msra.mxu0 %v3195
  %3217 = vmatprep.subr.bf16.mxu0 0
  %3218 = vmatpush1.bf16.msra.mxu0 %v3196
  %3219 = vmatprep.subr.bf16.mxu0 0
  %3220 = vmatpush1.bf16.msra.mxu0 %v3197
  %3221 = vmatprep.subr.bf16.mxu0 0
  %3222 = vmatpush1.bf16.msra.mxu0 %v3198
  %3223 = vmatprep.subr.bf16.mxu0 0
  %3224 = vmatpush1.bf16.msra.mxu0 0
  %3225 = vmatprep.subr.bf16.mxu0 0
  %3226 = vmatpush1.bf16.msra.mxu0 0
  %3227 = vmatprep.subr.bf16.mxu0 0
  %3228 = vmatpush1.bf16.msra.mxu0 0
  %3229 = vmatprep.subr.bf16.mxu0 0
  %3230 = vmatpush1.bf16.msra.mxu0 0
  %3231 = vmatprep.subr.bf16.mxu0 0
  %3232 = vmatpush1.bf16.msra.mxu0 0
  %3233 = vmatprep.subr.bf16.mxu0 0
  %3234 = vmatpush1.bf16.msra.mxu0 0
  %3235 = vmatprep.subr.bf16.mxu0 0
  %3236 = vmatpush1.bf16.msra.mxu0 0
  %3237 = vmatprep.subr.bf16.mxu0 0
  %3238 = vmatpush1.bf16.msra.mxu0 0
  %3239 = vmatprep.mubr.bf16.mxu0 0
  %3240 = vmatmul.mubr.bf16.gmra.mrb[0].mxu0 %v1342
  %v3241 = vpop.f32.mrb[0].mxu0
  %v3242 = vadd.f32 0.0, %v3241
  %v3243 = vpop.f32.mrb[0].mxu0
  %v3244 = vpop.f32.mrb[0].mxu0
  %v3245 = vpop.f32.mrb[0].mxu0
  %3246 = vdwg.mxu0
  %v3263 = vunpack.c.l.b16 %v1623
  %v3264 = vunpack.c.l.b16 %v1624
  %v3265 = vunpack.c.l.b16 %v1625
  %v3266 = vunpack.c.l.b16 %v1626
  %v3267 = vunpack.c.l.b16 %v1627
  %v3268 = vunpack.c.l.b16 %v1628
  %v3269 = vunpack.c.l.b16 %v1629
  %v3270 = vunpack.c.l.b16 %v1630
  %v3271 = vunpack.c.l.b16 %v1631
  %v3272 = vunpack.c.l.b16 %v1632
  %v3273 = vunpack.c.l.b16 %v1633
  %v3274 = vunpack.c.l.b16 %v1634
  %v3275 = vunpack.c.l.b16 %v1635
  %v3276 = vunpack.c.l.b16 %v1636
  %v3277 = vunpack.c.l.b16 %v1637
  %v3278 = vunpack.c.l.b16 %v1638
  %v3279 = vpack.c.b16 %v3264, %v3263
  %v3280 = vpack.c.b16 %v3266, %v3265
  %v3281 = vpack.c.b16 %v3268, %v3267
  %v3282 = vpack.c.b16 %v3270, %v3269
  %v3283 = vpack.c.b16 %v3272, %v3271
  %v3284 = vpack.c.b16 %v3274, %v3273
  %v3285 = vpack.c.b16 %v3276, %v3275
  %v3286 = vpack.c.b16 %v3278, %v3277
  %3295 = vmatprep.subr.bf16.mxu0 0
  %3296 = vmatpush1.bf16.msra.mxu0 %v3279
  %3297 = vmatprep.subr.bf16.mxu0 0
  %3298 = vmatpush1.bf16.msra.mxu0 %v3280
  %3299 = vmatprep.subr.bf16.mxu0 0
  %3300 = vmatpush1.bf16.msra.mxu0 %v3281
  %3301 = vmatprep.subr.bf16.mxu0 0
  %3302 = vmatpush1.bf16.msra.mxu0 %v3282
  %3303 = vmatprep.subr.bf16.mxu0 0
  %3304 = vmatpush1.bf16.msra.mxu0 %v3283
  %3305 = vmatprep.subr.bf16.mxu0 0
  %3306 = vmatpush1.bf16.msra.mxu0 %v3284
  %3307 = vmatprep.subr.bf16.mxu0 0
  %3308 = vmatpush1.bf16.msra.mxu0 %v3285
  %3309 = vmatprep.subr.bf16.mxu0 0
  %3310 = vmatpush1.bf16.msra.mxu0 %v3286
  %3311 = vmatprep.subr.bf16.mxu0 0
  %3312 = vmatpush1.bf16.msra.mxu0 0
  %3313 = vmatprep.subr.bf16.mxu0 0
  %3314 = vmatpush1.bf16.msra.mxu0 0
  %3315 = vmatprep.subr.bf16.mxu0 0
  %3316 = vmatpush1.bf16.msra.mxu0 0
  %3317 = vmatprep.subr.bf16.mxu0 0
  %3318 = vmatpush1.bf16.msra.mxu0 0
  %3319 = vmatprep.subr.bf16.mxu0 0
  %3320 = vmatpush1.bf16.msra.mxu0 0
  %3321 = vmatprep.subr.bf16.mxu0 0
  %3322 = vmatpush1.bf16.msra.mxu0 0
  %3323 = vmatprep.subr.bf16.mxu0 0
  %3324 = vmatpush1.bf16.msra.mxu0 0
  %3325 = vmatprep.subr.bf16.mxu0 0
  %3326 = vmatpush1.bf16.msra.mxu0 0
  %3327 = vmatprep.mubr.bf16.mxu0 0
  %3328 = vmatmul.mubr.bf16.gmra.mrb[0].mxu0 %v1343
  %v3329 = vpop.f32.mrb[0].mxu0
  %v3330 = vadd.f32 0.0, %v3329
  %v3331 = vpop.f32.mrb[0].mxu0
  %v3332 = vpop.f32.mrb[0].mxu0
  %v3333 = vpop.f32.mrb[0].mxu0
  %3334 = vdwg.mxu0
  %v3351 = vunpack.c.l.b16 %v1639
  %v3352 = vunpack.c.l.b16 %v1640
  %v3353 = vunpack.c.l.b16 %v1641
  %v3354 = vunpack.c.l.b16 %v1642
  %v3355 = vunpack.c.l.b16 %v1643
  %v3356 = vunpack.c.l.b16 %v1644
  %v3357 = vunpack.c.l.b16 %v1645
  %v3358 = vunpack.c.l.b16 %v1646
  %v3359 = vunpack.c.l.b16 %v1647
  %v3360 = vunpack.c.l.b16 %v1648
  %v3361 = vunpack.c.l.b16 %v1649
  %v3362 = vunpack.c.l.b16 %v1650
  %v3363 = vunpack.c.l.b16 %v1651
  %v3364 = vunpack.c.l.b16 %v1652
  %v3365 = vunpack.c.l.b16 %v1653
  %v3366 = vunpack.c.l.b16 %v1654
  %v3367 = vpack.c.b16 %v3352, %v3351
  %v3368 = vpack.c.b16 %v3354, %v3353
  %v3369 = vpack.c.b16 %v3356, %v3355
  %v3370 = vpack.c.b16 %v3358, %v3357
  %v3371 = vpack.c.b16 %v3360, %v3359
  %v3372 = vpack.c.b16 %v3362, %v3361
  %v3373 = vpack.c.b16 %v3364, %v3363
  %v3374 = vpack.c.b16 %v3366, %v3365
  %3383 = vmatprep.subr.bf16.mxu0 0
  %3384 = vmatpush1.bf16.msra.mxu0 %v3367
  %3385 = vmatprep.subr.bf16.mxu0 0
  %3386 = vmatpush1.bf16.msra.mxu0 %v3368
  %3387 = vmatprep.subr.bf16.mxu0 0
  %3388 = vmatpush1.bf16.msra.mxu0 %v3369
  %3389 = vmatprep.subr.bf16.mxu0 0
  %3390 = vmatpush1.bf16.msra.mxu0 %v3370
  %3391 = vmatprep.subr.bf16.mxu0 0
  %3392 = vmatpush1.bf16.msra.mxu0 %v3371
  %3393 = vmatprep.subr.bf16.mxu0 0
  %3394 = vmatpush1.bf16.msra.mxu0 %v3372
  %3395 = vmatprep.subr.bf16.mxu0 0
  %3396 = vmatpush1.bf16.msra.mxu0 %v3373
  %3397 = vmatprep.subr.bf16.mxu0 0
  %3398 = vmatpush1.bf16.msra.mxu0 %v3374
  %3399 = vmatprep.subr.bf16.mxu0 0
  %3400 = vmatpush1.bf16.msra.mxu0 0
  %3401 = vmatprep.subr.bf16.mxu0 0
  %3402 = vmatpush1.bf16.msra.mxu0 0
  %3403 = vmatprep.subr.bf16.mxu0 0
  %3404 = vmatpush1.bf16.msra.mxu0 0
  %3405 = vmatprep.subr.bf16.mxu0 0
  %3406 = vmatpush1.bf16.msra.mxu0 0
  %3407 = vmatprep.subr.bf16.mxu0 0
  %3408 = vmatpush1.bf16.msra.mxu0 0
  %3409 = vmatprep.subr.bf16.mxu0 0
  %3410 = vmatpush1.bf16.msra.mxu0 0
  %3411 = vmatprep.subr.bf16.mxu0 0
  %3412 = vmatpush1.bf16.msra.mxu0 0
  %3413 = vmatprep.subr.bf16.mxu0 0
  %3414 = vmatpush1.bf16.msra.mxu0 0
  %3415 = vmatprep.mubr.bf16.mxu0 0
  %3416 = vmatmul.mubr.bf16.gmra.mrb[0].mxu0 %v1344
  %v3417 = vpop.f32.mrb[0].mxu0
  %v3418 = vadd.f32 0.0, %v3417
  %v3419 = vpop.f32.mrb[0].mxu0
  %v3420 = vpop.f32.mrb[0].mxu0
  %v3421 = vpop.f32.mrb[0].mxu0
  %3422 = vdwg.mxu0
  %v3439 = vunpack.c.l.b16 %v1655
  %v3440 = vunpack.c.l.b16 %v1656
  %v3441 = vunpack.c.l.b16 %v1657
  %v3442 = vunpack.c.l.b16 %v1658
  %v3443 = vunpack.c.l.b16 %v1659
  %v3444 = vunpack.c.l.b16 %v1660
  %v3445 = vunpack.c.l.b16 %v1661
  %v3446 = vunpack.c.l.b16 %v1662
  %v3447 = vunpack.c.l.b16 %v1663
  %v3448 = vunpack.c.l.b16 %v1664
  %v3449 = vunpack.c.l.b16 %v1665
  %v3450 = vunpack.c.l.b16 %v1666
  %v3451 = vunpack.c.l.b16 %v1667
  %v3452 = vunpack.c.l.b16 %v1668
  %v3453 = vunpack.c.l.b16 %v1669
  %v3454 = vunpack.c.l.b16 %v1670
  %v3455 = vpack.c.b16 %v3440, %v3439
  %v3456 = vpack.c.b16 %v3442, %v3441
  %v3457 = vpack.c.b16 %v3444, %v3443
  %v3458 = vpack.c.b16 %v3446, %v3445
  %v3459 = vpack.c.b16 %v3448, %v3447
  %v3460 = vpack.c.b16 %v3450, %v3449
  %v3461 = vpack.c.b16 %v3452, %v3451
  %v3462 = vpack.c.b16 %v3454, %v3453
  %3471 = vmatprep.subr.bf16.mxu0 0
  %3472 = vmatpush1.bf16.msra.mxu0 %v3455
  %3473 = vmatprep.subr.bf16.mxu0 0
  %3474 = vmatpush1.bf16.msra.mxu0 %v3456
  %3475 = vmatprep.subr.bf16.mxu0 0
  %3476 = vmatpush1.bf16.msra.mxu0 %v3457
  %3477 = vmatprep.subr.bf16.mxu0 0
  %3478 = vmatpush1.bf16.msra.mxu0 %v3458
  %3479 = vmatprep.subr.bf16.mxu0 0
  %3480 = vmatpush1.bf16.msra.mxu0 %v3459
  %3481 = vmatprep.subr.bf16.mxu0 0
  %3482 = vmatpush1.bf16.msra.mxu0 %v3460
  %3483 = vmatprep.subr.bf16.mxu0 0
  %3484 = vmatpush1.bf16.msra.mxu0 %v3461
  %3485 = vmatprep.subr.bf16.mxu0 0
  %3486 = vmatpush1.bf16.msra.mxu0 %v3462
  %3487 = vmatprep.subr.bf16.mxu0 0
  %3488 = vmatpush1.bf16.msra.mxu0 0
  %3489 = vmatprep.subr.bf16.mxu0 0
  %3490 = vmatpush1.bf16.msra.mxu0 0
  %3491 = vmatprep.subr.bf16.mxu0 0
  %3492 = vmatpush1.bf16.msra.mxu0 0
  %3493 = vmatprep.subr.bf16.mxu0 0
  %3494 = vmatpush1.bf16.msra.mxu0 0
  %3495 = vmatprep.subr.bf16.mxu0 0
  %3496 = vmatpush1.bf16.msra.mxu0 0
  %3497 = vmatprep.subr.bf16.mxu0 0
  %3498 = vmatpush1.bf16.msra.mxu0 0
  %3499 = vmatprep.subr.bf16.mxu0 0
  %3500 = vmatpush1.bf16.msra.mxu0 0
  %3501 = vmatprep.subr.bf16.mxu0 0
  %3502 = vmatpush1.bf16.msra.mxu0 0
  %3503 = vmatprep.mubr.bf16.mxu0 0
  %3504 = vmatmul.mubr.bf16.gmra.mrb[0].mxu0 %v1345
  %v3505 = vpop.f32.mrb[0].mxu0
  %v3506 = vadd.f32 0.0, %v3505
  %v3507 = vpop.f32.mrb[0].mxu0
  %v3508 = vpop.f32.mrb[0].mxu0
  %v3509 = vpop.f32.mrb[0].mxu0
  %3510 = vdwg.mxu0
  %v3527 = vunpack.c.l.b16 %v1671
  %v3528 = vunpack.c.l.b16 %v1672
  %v3529 = vunpack.c.l.b16 %v1673
  %v3530 = vunpack.c.l.b16 %v1674
  %v3531 = vunpack.c.l.b16 %v1675
  %v3532 = vunpack.c.l.b16 %v1676
  %v3533 = vunpack.c.l.b16 %v1677
  %v3534 = vunpack.c.l.b16 %v1678
  %v3535 = vunpack.c.l.b16 %v1679
  %v3536 = vunpack.c.l.b16 %v1680
  %v3537 = vunpack.c.l.b16 %v1681
  %v3538 = vunpack.c.l.b16 %v1682
  %v3539 = vunpack.c.l.b16 %v1683
  %v3540 = vunpack.c.l.b16 %v1684
  %v3541 = vunpack.c.l.b16 %v1685
  %v3542 = vunpack.c.l.b16 %v1686
  %v3543 = vpack.c.b16 %v3528, %v3527
  %v3544 = vpack.c.b16 %v3530, %v3529
  %v3545 = vpack.c.b16 %v3532, %v3531
  %v3546 = vpack.c.b16 %v3534, %v3533
  %v3547 = vpack.c.b16 %v3536, %v3535
  %v3548 = vpack.c.b16 %v3538, %v3537
  %v3549 = vpack.c.b16 %v3540, %v3539
  %v3550 = vpack.c.b16 %v3542, %v3541
  %3559 = vmatprep.subr.bf16.mxu0 0
  %3560 = vmatpush1.bf16.msra.mxu0 %v3543
  %3561 = vmatprep.subr.bf16.mxu0 0
  %3562 = vmatpush1.bf16.msra.mxu0 %v3544
  %3563 = vmatprep.subr.bf16.mxu0 0
  %3564 = vmatpush1.bf16.msra.mxu0 %v3545
  %3565 = vmatprep.subr.bf16.mxu0 0
  %3566 = vmatpush1.bf16.msra.mxu0 %v3546
  %3567 = vmatprep.subr.bf16.mxu0 0
  %3568 = vmatpush1.bf16.msra.mxu0 %v3547
  %3569 = vmatprep.subr.bf16.mxu0 0
  %3570 = vmatpush1.bf16.msra.mxu0 %v3548
  %3571 = vmatprep.subr.bf16.mxu0 0
  %3572 = vmatpush1.bf16.msra.mxu0 %v3549
  %3573 = vmatprep.subr.bf16.mxu0 0
  %3574 = vmatpush1.bf16.msra.mxu0 %v3550
  %3575 = vmatprep.subr.bf16.mxu0 0
  %3576 = vmatpush1.bf16.msra.mxu0 0
  %3577 = vmatprep.subr.bf16.mxu0 0
  %3578 = vmatpush1.bf16.msra.mxu0 0
  %3579 = vmatprep.subr.bf16.mxu0 0
  %3580 = vmatpush1.bf16.msra.mxu0 0
  %3581 = vmatprep.subr.bf16.mxu0 0
  %3582 = vmatpush1.bf16.msra.mxu0 0
  %3583 = vmatprep.subr.bf16.mxu0 0
  %3584 = vmatpush1.bf16.msra.mxu0 0
  %3585 = vmatprep.subr.bf16.mxu0 0
  %3586 = vmatpush1.bf16.msra.mxu0 0
  %3587 = vmatprep.subr.bf16.mxu0 0
  %3588 = vmatpush1.bf16.msra.mxu0 0
  %3589 = vmatprep.subr.bf16.mxu0 0
  %3590 = vmatpush1.bf16.msra.mxu0 0
  %3591 = vmatprep.mubr.bf16.mxu0 0
  %3592 = vmatmul.mubr.bf16.gmra.mrb[0].mxu0 %v1346
  %v3593 = vpop.f32.mrb[0].mxu0
  %v3594 = vadd.f32 0.0, %v3593
  %v3595 = vpop.f32.mrb[0].mxu0
  %v3596 = vpop.f32.mrb[0].mxu0
  %v3597 = vpop.f32.mrb[0].mxu0
  %3598 = vdwg.mxu0
  %v3615 = vunpack.c.l.b16 %v1687
  %v3616 = vunpack.c.l.b16 %v1688
  %v3617 = vunpack.c.l.b16 %v1689
  %v3618 = vunpack.c.l.b16 %v1690
  %v3619 = vunpack.c.l.b16 %v1691
  %v3620 = vunpack.c.l.b16 %v1692
  %v3621 = vunpack.c.l.b16 %v1693
  %v3622 = vunpack.c.l.b16 %v1694
  %v3623 = vunpack.c.l.b16 %v1695
  %v3624 = vunpack.c.l.b16 %v1696
  %v3625 = vunpack.c.l.b16 %v1697
  %v3626 = vunpack.c.l.b16 %v1698
  %v3627 = vunpack.c.l.b16 %v1699
  %v3628 = vunpack.c.l.b16 %v1700
  %v3629 = vunpack.c.l.b16 %v1701
  %v3630 = vunpack.c.l.b16 %v1702
  %v3631 = vpack.c.b16 %v3616, %v3615
  %v3632 = vpack.c.b16 %v3618, %v3617
  %v3633 = vpack.c.b16 %v3620, %v3619
  %v3634 = vpack.c.b16 %v3622, %v3621
  %v3635 = vpack.c.b16 %v3624, %v3623
  %v3636 = vpack.c.b16 %v3626, %v3625
  %v3637 = vpack.c.b16 %v3628, %v3627
  %v3638 = vpack.c.b16 %v3630, %v3629
  %3647 = vmatprep.subr.bf16.mxu0 0
  %3648 = vmatpush1.bf16.msra.mxu0 %v3631
  %3649 = vmatprep.subr.bf16.mxu0 0
  %3650 = vmatpush1.bf16.msra.mxu0 %v3632
  %3651 = vmatprep.subr.bf16.mxu0 0
  %3652 = vmatpush1.bf16.msra.mxu0 %v3633
  %3653 = vmatprep.subr.bf16.mxu0 0
  %3654 = vmatpush1.bf16.msra.mxu0 %v3634
  %3655 = vmatprep.subr.bf16.mxu0 0
  %3656 = vmatpush1.bf16.msra.mxu0 %v3635
  %3657 = vmatprep.subr.bf16.mxu0 0
  %3658 = vmatpush1.bf16.msra.mxu0 %v3636
  %3659 = vmatprep.subr.bf16.mxu0 0
  %3660 = vmatpush1.bf16.msra.mxu0 %v3637
  %3661 = vmatprep.subr.bf16.mxu0 0
  %3662 = vmatpush1.bf16.msra.mxu0 %v3638
  %3663 = vmatprep.subr.bf16.mxu0 0
  %3664 = vmatpush1.bf16.msra.mxu0 0
  %3665 = vmatprep.subr.bf16.mxu0 0
  %3666 = vmatpush1.bf16.msra.mxu0 0
  %3667 = vmatprep.subr.bf16.mxu0 0
  %3668 = vmatpush1.bf16.msra.mxu0 0
  %3669 = vmatprep.subr.bf16.mxu0 0
  %3670 = vmatpush1.bf16.msra.mxu0 0
  %3671 = vmatprep.subr.bf16.mxu0 0
  %3672 = vmatpush1.bf16.msra.mxu0 0
  %3673 = vmatprep.subr.bf16.mxu0 0
  %3674 = vmatpush1.bf16.msra.mxu0 0
  %3675 = vmatprep.subr.bf16.mxu0 0
  %3676 = vmatpush1.bf16.msra.mxu0 0
  %3677 = vmatprep.subr.bf16.mxu0 0
  %3678 = vmatpush1.bf16.msra.mxu0 0
  %3679 = vmatprep.mubr.bf16.mxu0 0
  %3680 = vmatmul.mubr.bf16.gmra.mrb[0].mxu0 %v1347
  %v3681 = vpop.f32.mrb[0].mxu0
  %v3682 = vadd.f32 0.0, %v3681
  %v3683 = vpop.f32.mrb[0].mxu0
  %v3684 = vpop.f32.mrb[0].mxu0
  %v3685 = vpop.f32.mrb[0].mxu0
  %3686 = vdwg.mxu0
  %v3703 = vunpack.c.l.b16 %v1703
  %v3704 = vunpack.c.l.b16 %v1704
  %v3705 = vunpack.c.l.b16 %v1705
  %v3706 = vunpack.c.l.b16 %v1706
  %v3707 = vunpack.c.l.b16 %v1707
  %v3708 = vunpack.c.l.b16 %v1708
  %v3709 = vunpack.c.l.b16 %v1709
  %v3710 = vunpack.c.l.b16 %v1710
  %v3711 = vunpack.c.l.b16 %v1711
  %v3712 = vunpack.c.l.b16 %v1712
  %v3713 = vunpack.c.l.b16 %v1713
  %v3714 = vunpack.c.l.b16 %v1714
  %v3715 = vunpack.c.l.b16 %v1715
  %v3716 = vunpack.c.l.b16 %v1716
  %v3717 = vunpack.c.l.b16 %v1717
  %v3718 = vunpack.c.l.b16 %v1718
  %v3719 = vpack.c.b16 %v3704, %v3703
  %v3720 = vpack.c.b16 %v3706, %v3705
  %v3721 = vpack.c.b16 %v3708, %v3707
  %v3722 = vpack.c.b16 %v3710, %v3709
  %v3723 = vpack.c.b16 %v3712, %v3711
  %v3724 = vpack.c.b16 %v3714, %v3713
  %v3725 = vpack.c.b16 %v3716, %v3715
  %v3726 = vpack.c.b16 %v3718, %v3717
  %3735 = vmatprep.subr.bf16.mxu0 0
  %3736 = vmatpush1.bf16.msra.mxu0 %v3719
  %3737 = vmatprep.subr.bf16.mxu0 0
  %3738 = vmatpush1.bf16.msra.mxu0 %v3720
  %3739 = vmatprep.subr.bf16.mxu0 0
  %3740 = vmatpush1.bf16.msra.mxu0 %v3721
  %3741 = vmatprep.subr.bf16.mxu0 0
  %3742 = vmatpush1.bf16.msra.mxu0 %v3722
  %3743 = vmatprep.subr.bf16.mxu0 0
  %3744 = vmatpush1.bf16.msra.mxu0 %v3723
  %3745 = vmatprep.subr.bf16.mxu0 0
  %3746 = vmatpush1.bf16.msra.mxu0 %v3724
  %3747 = vmatprep.subr.bf16.mxu0 0
  %3748 = vmatpush1.bf16.msra.mxu0 %v3725
  %3749 = vmatprep.subr.bf16.mxu0 0
  %3750 = vmatpush1.bf16.msra.mxu0 %v3726
  %3751 = vmatprep.subr.bf16.mxu0 0
  %3752 = vmatpush1.bf16.msra.mxu0 0
  %3753 = vmatprep.subr.bf16.mxu0 0
  %3754 = vmatpush1.bf16.msra.mxu0 0
  %3755 = vmatprep.subr.bf16.mxu0 0
  %3756 = vmatpush1.bf16.msra.mxu0 0
  %3757 = vmatprep.subr.bf16.mxu0 0
  %3758 = vmatpush1.bf16.msra.mxu0 0
  %3759 = vmatprep.subr.bf16.mxu0 0
  %3760 = vmatpush1.bf16.msra.mxu0 0
  %3761 = vmatprep.subr.bf16.mxu0 0
  %3762 = vmatpush1.bf16.msra.mxu0 0
  %3763 = vmatprep.subr.bf16.mxu0 0
  %3764 = vmatpush1.bf16.msra.mxu0 0
  %3765 = vmatprep.subr.bf16.mxu0 0
  %3766 = vmatpush1.bf16.msra.mxu0 0
  %3767 = vmatprep.mubr.bf16.mxu0 0
  %3768 = vmatmul.mubr.bf16.gmra.mrb[0].mxu0 %v1348
  %v3769 = vpop.f32.mrb[0].mxu0
  %v3770 = vadd.f32 0.0, %v3769
  %v3771 = vpop.f32.mrb[0].mxu0
  %v3772 = vpop.f32.mrb[0].mxu0
  %v3773 = vpop.f32.mrb[0].mxu0
  %3774 = vdwg.mxu0
  %v3791 = vunpack.c.l.b16 %v1719
  %v3792 = vunpack.c.l.b16 %v1720
  %v3793 = vunpack.c.l.b16 %v1721
  %v3794 = vunpack.c.l.b16 %v1722
  %v3795 = vunpack.c.l.b16 %v1723
  %v3796 = vunpack.c.l.b16 %v1724
  %v3797 = vunpack.c.l.b16 %v1725
  %v3798 = vunpack.c.l.b16 %v1726
  %v3799 = vunpack.c.l.b16 %v1727
  %v3800 = vunpack.c.l.b16 %v1728
  %v3801 = vunpack.c.l.b16 %v1729
  %v3802 = vunpack.c.l.b16 %v1730
  %v3803 = vunpack.c.l.b16 %v1731
  %v3804 = vunpack.c.l.b16 %v1732
  %v3805 = vunpack.c.l.b16 %v1733
  %v3806 = vunpack.c.l.b16 %v1734
  %v3807 = vpack.c.b16 %v3792, %v3791
  %v3808 = vpack.c.b16 %v3794, %v3793
  %v3809 = vpack.c.b16 %v3796, %v3795
  %v3810 = vpack.c.b16 %v3798, %v3797
  %v3811 = vpack.c.b16 %v3800, %v3799
  %v3812 = vpack.c.b16 %v3802, %v3801
  %v3813 = vpack.c.b16 %v3804, %v3803
  %v3814 = vpack.c.b16 %v3806, %v3805
  %3823 = vmatprep.subr.bf16.mxu0 0
  %3824 = vmatpush1.bf16.msra.mxu0 %v3807
  %3825 = vmatprep.subr.bf16.mxu0 0
  %3826 = vmatpush1.bf16.msra.mxu0 %v3808
  %3827 = vmatprep.subr.bf16.mxu0 0
  %3828 = vmatpush1.bf16.msra.mxu0 %v3809
  %3829 = vmatprep.subr.bf16.mxu0 0
  %3830 = vmatpush1.bf16.msra.mxu0 %v3810
  %3831 = vmatprep.subr.bf16.mxu0 0
  %3832 = vmatpush1.bf16.msra.mxu0 %v3811
  %3833 = vmatprep.subr.bf16.mxu0 0
  %3834 = vmatpush1.bf16.msra.mxu0 %v3812
  %3835 = vmatprep.subr.bf16.mxu0 0
  %3836 = vmatpush1.bf16.msra.mxu0 %v3813
  %3837 = vmatprep.subr.bf16.mxu0 0
  %3838 = vmatpush1.bf16.msra.mxu0 %v3814
  %3839 = vmatprep.subr.bf16.mxu0 0
  %3840 = vmatpush1.bf16.msra.mxu0 0
  %3841 = vmatprep.subr.bf16.mxu0 0
  %3842 = vmatpush1.bf16.msra.mxu0 0
  %3843 = vmatprep.subr.bf16.mxu0 0
  %3844 = vmatpush1.bf16.msra.mxu0 0
  %3845 = vmatprep.subr.bf16.mxu0 0
  %3846 = vmatpush1.bf16.msra.mxu0 0
  %3847 = vmatprep.subr.bf16.mxu0 0
  %3848 = vmatpush1.bf16.msra.mxu0 0
  %3849 = vmatprep.subr.bf16.mxu0 0
  %3850 = vmatpush1.bf16.msra.mxu0 0
  %3851 = vmatprep.subr.bf16.mxu0 0
  %3852 = vmatpush1.bf16.msra.mxu0 0
  %3853 = vmatprep.subr.bf16.mxu0 0
  %3854 = vmatpush1.bf16.msra.mxu0 0
  %3855 = vmatprep.mubr.bf16.mxu0 0
  %3856 = vmatmul.mubr.bf16.gmra.mrb[0].mxu0 %v1349
  %v3857 = vpop.f32.mrb[0].mxu0
  %v3858 = vadd.f32 0.0, %v3857
  %v3859 = vpop.f32.mrb[0].mxu0
  %v3860 = vpop.f32.mrb[0].mxu0
  %v3861 = vpop.f32.mrb[0].mxu0
  %3862 = vdwg.mxu0
  %v3879 = vunpack.c.l.b16 %v1735
  %v3880 = vunpack.c.l.b16 %v1736
  %v3881 = vunpack.c.l.b16 %v1737
  %v3882 = vunpack.c.l.b16 %v1738
  %v3883 = vunpack.c.l.b16 %v1739
  %v3884 = vunpack.c.l.b16 %v1740
  %v3885 = vunpack.c.l.b16 %v1741
  %v3886 = vunpack.c.l.b16 %v1742
  %v3887 = vunpack.c.l.b16 %v1743
  %v3888 = vunpack.c.l.b16 %v1744
  %v3889 = vunpack.c.l.b16 %v1745
  %v3890 = vunpack.c.l.b16 %v1746
  %v3891 = vunpack.c.l.b16 %v1747
  %v3892 = vunpack.c.l.b16 %v1748
  %v3893 = vunpack.c.l.b16 %v1749
  %v3894 = vunpack.c.l.b16 %v1750
  %v3895 = vpack.c.b16 %v3880, %v3879
  %v3896 = vpack.c.b16 %v3882, %v3881
  %v3897 = vpack.c.b16 %v3884, %v3883
  %v3898 = vpack.c.b16 %v3886, %v3885
  %v3899 = vpack.c.b16 %v3888, %v3887
  %v3900 = vpack.c.b16 %v3890, %v3889
  %v3901 = vpack.c.b16 %v3892, %v3891
  %v3902 = vpack.c.b16 %v3894, %v3893
  %3911 = vmatprep.subr.bf16.mxu0 0
  %3912 = vmatpush1.bf16.msra.mxu0 %v3895
  %3913 = vmatprep.subr.bf16.mxu0 0
  %3914 = vmatpush1.bf16.msra.mxu0 %v3896
  %3915 = vmatprep.subr.bf16.mxu0 0
  %3916 = vmatpush1.bf16.msra.mxu0 %v3897
  %3917 = vmatprep.subr.bf16.mxu0 0
  %3918 = vmatpush1.bf16.msra.mxu0 %v3898
  %3919 = vmatprep.subr.bf16.mxu0 0
  %3920 = vmatpush1.bf16.msra.mxu0 %v3899
  %3921 = vmatprep.subr.bf16.mxu0 0
  %3922 = vmatpush1.bf16.msra.mxu0 %v3900
  %3923 = vmatprep.subr.bf16.mxu0 0
  %3924 = vmatpush1.bf16.msra.mxu0 %v3901
  %3925 = vmatprep.subr.bf16.mxu0 0
  %3926 = vmatpush1.bf16.msra.mxu0 %v3902
  %3927 = vmatprep.subr.bf16.mxu0 0
  %3928 = vmatpush1.bf16.msra.mxu0 0
  %3929 = vmatprep.subr.bf16.mxu0 0
  %3930 = vmatpush1.bf16.msra.mxu0 0
  %3931 = vmatprep.subr.bf16.mxu0 0
  %3932 = vmatpush1.bf16.msra.mxu0 0
  %3933 = vmatprep.subr.bf16.mxu0 0
  %3934 = vmatpush1.bf16.msra.mxu0 0
  %3935 = vmatprep.subr.bf16.mxu0 0
  %3936 = vmatpush1.bf16.msra.mxu0 0
  %3937 = vmatprep.subr.bf16.mxu0 0
  %3938 = vmatpush1.bf16.msra.mxu0 0
  %3939 = vmatprep.subr.bf16.mxu0 0
  %3940 = vmatpush1.bf16.msra.mxu0 0
  %3941 = vmatprep.subr.bf16.mxu0 0
  %3942 = vmatpush1.bf16.msra.mxu0 0
  %3943 = vmatprep.mubr.bf16.mxu0 0
  %3944 = vmatmul.mubr.bf16.gmra.mrb[0].mxu0 %v1350
  %v3945 = vpop.f32.mrb[0].mxu0
  %v3946 = vadd.f32 0.0, %v3945
  %v3947 = vpop.f32.mrb[0].mxu0
  %v3948 = vpop.f32.mrb[0].mxu0
  %v3949 = vpop.f32.mrb[0].mxu0
  %3950 = vdwg.mxu0
  %v3951 = vadd.f32 %v1834, %v1922
  %v3952 = vadd.f32 %v3951, %v2010
  %v3953 = vadd.f32 %v3952, %v2098
  %v3954 = vadd.f32 %v3953, %v2186
  %v3955 = vadd.f32 %v3954, %v2274
  %v3956 = vadd.f32 %v3955, %v2362
  %v3957 = vadd.f32 %v3956, %v2450
  %v3958 = vadd.f32 %v3957, %v2538
  %v3959 = vadd.f32 %v3958, %v2626
  %v3960 = vadd.f32 %v3959, %v2714
  %v3961 = vadd.f32 %v3960, %v2802
  %v3962 = vadd.f32 %v3961, %v2890
  %v3963 = vadd.f32 %v3962, %v2978
  %v3964 = vadd.f32 %v3963, %v3066
  %v3965 = vadd.f32 %v3964, %v3154
  %v3966 = vadd.f32 %v3965, %v3242
  %v3967 = vadd.f32 %v3966, %v3330
  %v3968 = vadd.f32 %v3967, %v3418
  %v3969 = vadd.f32 %v3968, %v3506
  %v3970 = vadd.f32 %v3969, %v3594
  %v3971 = vadd.f32 %v3970, %v3682
  %v3972 = vadd.f32 %v3971, %v3770
  %v3973 = vadd.f32 %v3972, %v3858
  %v3974 = vadd.f32 %v3973, %v3946
  %v3975 = vld [vmem:[%s4] sm:$0x1]
  %v3977 = vlaneseq
  %v3978 = vshrl.u32 %v3977, 7
  %v3979 = vsub.s32 0, %v3978
  %v3980 = vrot.slane %v3975, %v3979
  %v3982 = vadd.f32 %v3974, %v3980
  %v3983 = vmax.f32 %v3982, 0.0
  %v3984 = vpack.c.bf16 %v3983, %v3983
  %v3985 = vld [vmem:[%s5] sm:$0xf]
  %v3986 = vld [vmem:[%s5 + $0x4] sm:$0xf]
  %v3987 = vld [vmem:[%s5 + $0x8] sm:$0xf]
  %v3988 = vld [vmem:[%s5 + $0xc] sm:$0xf]
  %v3989 = vld [vmem:[%s5 + $0x10] sm:$0xf]
  %v3990 = vld [vmem:[%s5 + $0x14] sm:$0xf]
  %v3991 = vld [vmem:[%s5 + $0x18] sm:$0xf]
  %v3992 = vld [vmem:[%s5 + $0x1c] sm:$0xf]
  %v3993 = vld [vmem:[%s5 + $0x20] sm:$0xf]
  %v3994 = vld [vmem:[%s5 + $0x24] sm:$0xf]
  %v3995 = vld [vmem:[%s5 + $0x28] sm:$0xf]
  %v3996 = vld [vmem:[%s5 + $0x2c] sm:$0xf]
  %v3997 = vld [vmem:[%s5 + $0x30] sm:$0xf]
  %v3998 = vld [vmem:[%s5 + $0x34] sm:$0xf]
  %v3999 = vld [vmem:[%s5 + $0x38] sm:$0xf]
  %v4000 = vld [vmem:[%s5 + $0x3c] sm:$0xf]
  %v4001 = vld [vmem:[%s6] sm:$0x1]
  %v4003 = vlaneseq
  %v4004 = vshrl.u32 %v4003, 7
  %v4005 = vsub.s32 0, %v4004
  %v4006 = vrot.slane %v4001, %v4005
  %v4024 = vunpack.c.l.b16 %v3985
  %v4025 = vunpack.c.l.b16 %v3986
  %v4026 = vunpack.c.l.b16 %v3987
  %v4027 = vunpack.c.l.b16 %v3988
  %v4028 = vunpack.c.l.b16 %v3989
  %v4029 = vunpack.c.l.b16 %v3990
  %v4030 = vunpack.c.l.b16 %v3991
  %v4031 = vunpack.c.l.b16 %v3992
  %v4032 = vunpack.c.l.b16 %v3993
  %v4033 = vunpack.c.l.b16 %v3994
  %v4034 = vunpack.c.l.b16 %v3995
  %v4035 = vunpack.c.l.b16 %v3996
  %v4036 = vunpack.c.l.b16 %v3997
  %v4037 = vunpack.c.l.b16 %v3998
  %v4038 = vunpack.c.l.b16 %v3999
  %v4039 = vunpack.c.l.b16 %v4000
  %v4040 = vpack.c.b16 %v4025, %v4024
  %v4041 = vpack.c.b16 %v4027, %v4026
  %v4042 = vpack.c.b16 %v4029, %v4028
  %v4043 = vpack.c.b16 %v4031, %v4030
  %v4044 = vpack.c.b16 %v4033, %v4032
  %v4045 = vpack.c.b16 %v4035, %v4034
  %v4046 = vpack.c.b16 %v4037, %v4036
  %v4047 = vpack.c.b16 %v4039, %v4038
  %4056 = vmatprep.subr.bf16.mxu0 0
  %4057 = vmatpush1.bf16.msra.mxu0 %v4040
  %4058 = vmatprep.subr.bf16.mxu0 0
  %4059 = vmatpush1.bf16.msra.mxu0 %v4041
  %4060 = vmatprep.subr.bf16.mxu0 0
  %4061 = vmatpush1.bf16.msra.mxu0 %v4042
  %4062 = vmatprep.subr.bf16.mxu0 0
  %4063 = vmatpush1.bf16.msra.mxu0 %v4043
  %4064 = vmatprep.subr.bf16.mxu0 0
  %4065 = vmatpush1.bf16.msra.mxu0 %v4044
  %4066 = vmatprep.subr.bf16.mxu0 0
  %4067 = vmatpush1.bf16.msra.mxu0 %v4045
  %4068 = vmatprep.subr.bf16.mxu0 0
  %4069 = vmatpush1.bf16.msra.mxu0 %v4046
  %4070 = vmatprep.subr.bf16.mxu0 0
  %4071 = vmatpush1.bf16.msra.mxu0 %v4047
  %4072 = vmatprep.subr.bf16.mxu0 0
  %4073 = vmatpush1.bf16.msra.mxu0 0
  %4074 = vmatprep.subr.bf16.mxu0 0
  %4075 = vmatpush1.bf16.msra.mxu0 0
  %4076 = vmatprep.subr.bf16.mxu0 0
  %4077 = vmatpush1.bf16.msra.mxu0 0
  %4078 = vmatprep.subr.bf16.mxu0 0
  %4079 = vmatpush1.bf16.msra.mxu0 0
  %4080 = vmatprep.subr.bf16.mxu0 0
  %4081 = vmatpush1.bf16.msra.mxu0 0
  %4082 = vmatprep.subr.bf16.mxu0 0
  %4083 = vmatpush1.bf16.msra.mxu0 0
  %4084 = vmatprep.subr.bf16.mxu0 0
  %4085 = vmatpush1.bf16.msra.mxu0 0
  %4086 = vmatprep.subr.bf16.mxu0 0
  %4087 = vmatpush1.bf16.msra.mxu0 0
  %4088 = vmatprep.mubr.bf16.mxu0 0
  %4089 = vmatmul.mubr.bf16.gmra.mrb[0].mxu0 %v3984
  %v4090 = vpop.f32.mrb[0].mxu0
  %v4091 = vadd.f32 %v4006, %v4090
  %v4092 = vpop.f32.mrb[0].mxu0
  %v4093 = vpop.f32.mrb[0].mxu0
  %v4094 = vpop.f32.mrb[0].mxu0
  %4095 = vdwg.mxu0
  %v4096 = vmax.f32 %v4091, 0.0
  %v4097 = vpack.c.bf16 %v4096, %v4096
  %v4098 = vld [vmem:[%s7] sm:$0xf]
  %v4099 = vld [vmem:[%s7 + $0x4] sm:$0xf]
  %v4100 = vld [vmem:[%s7 + $0x8] sm:$0xf]
  %v4101 = vld [vmem:[%s7 + $0xc] sm:$0xf]
  %v4102 = vld [vmem:[%s7 + $0x10] sm:$0xf]
  %v4103 = vld [vmem:[%s7 + $0x14] sm:$0xf]
  %v4104 = vld [vmem:[%s7 + $0x18] sm:$0xf]
  %v4105 = vld [vmem:[%s7 + $0x1c] sm:$0xf]
  %v4106 = vld [vmem:[%s7 + $0x20] sm:$0xf]
  %v4107 = vld [vmem:[%s7 + $0x24] sm:$0xf]
  %v4108 = vld [vmem:[%s7 + $0x28] sm:$0xf]
  %v4109 = vld [vmem:[%s7 + $0x2c] sm:$0xf]
  %v4110 = vld [vmem:[%s7 + $0x30] sm:$0xf]
  %v4111 = vld [vmem:[%s7 + $0x34] sm:$0xf]
  %v4112 = vld [vmem:[%s7 + $0x38] sm:$0xf]
  %v4113 = vld [vmem:[%s7 + $0x3c] sm:$0xf]
  %v4114 = vld [vmem:[%s8] sm:$0x1]
  %v4116 = vlaneseq
  %v4117 = vshrl.u32 %v4116, 7
  %v4118 = vsub.s32 0, %v4117
  %v4119 = vrot.slane %v4114, %v4118
  %v4137 = vunpack.c.l.b16 %v4098
  %v4138 = vunpack.c.l.b16 %v4099
  %v4139 = vunpack.c.l.b16 %v4100
  %v4140 = vunpack.c.l.b16 %v4101
  %v4141 = vunpack.c.l.b16 %v4102
  %v4142 = vunpack.c.l.b16 %v4103
  %v4143 = vunpack.c.l.b16 %v4104
  %v4144 = vunpack.c.l.b16 %v4105
  %v4145 = vunpack.c.l.b16 %v4106
  %v4146 = vunpack.c.l.b16 %v4107
  %v4147 = vunpack.c.l.b16 %v4108
  %v4148 = vunpack.c.l.b16 %v4109
  %v4149 = vunpack.c.l.b16 %v4110
  %v4150 = vunpack.c.l.b16 %v4111
  %v4151 = vunpack.c.l.b16 %v4112
  %v4152 = vunpack.c.l.b16 %v4113
  %v4153 = vpack.c.b16 %v4138, %v4137
  %v4154 = vpack.c.b16 %v4140, %v4139
  %v4155 = vpack.c.b16 %v4142, %v4141
  %v4156 = vpack.c.b16 %v4144, %v4143
  %v4157 = vpack.c.b16 %v4146, %v4145
  %v4158 = vpack.c.b16 %v4148, %v4147
  %v4159 = vpack.c.b16 %v4150, %v4149
  %v4160 = vpack.c.b16 %v4152, %v4151
  %4169 = vmatprep.subr.bf16.mxu0 0
  %4170 = vmatpush1.bf16.msra.mxu0 %v4153
  %4171 = vmatprep.subr.bf16.mxu0 0
  %4172 = vmatpush1.bf16.msra.mxu0 %v4154
  %4173 = vmatprep.subr.bf16.mxu0 0
  %4174 = vmatpush1.bf16.msra.mxu0 %v4155
  %4175 = vmatprep.subr.bf16.mxu0 0
  %4176 = vmatpush1.bf16.msra.mxu0 %v4156
  %4177 = vmatprep.subr.bf16.mxu0 0
  %4178 = vmatpush1.bf16.msra.mxu0 %v4157
  %4179 = vmatprep.subr.bf16.mxu0 0
  %4180 = vmatpush1.bf16.msra.mxu0 %v4158
  %4181 = vmatprep.subr.bf16.mxu0 0
  %4182 = vmatpush1.bf16.msra.mxu0 %v4159
  %4183 = vmatprep.subr.bf16.mxu0 0
  %4184 = vmatpush1.bf16.msra.mxu0 %v4160
  %4185 = vmatprep.subr.bf16.mxu0 0
  %4186 = vmatpush1.bf16.msra.mxu0 0
  %4187 = vmatprep.subr.bf16.mxu0 0
  %4188 = vmatpush1.bf16.msra.mxu0 0
  %4189 = vmatprep.subr.bf16.mxu0 0
  %4190 = vmatpush1.bf16.msra.mxu0 0
  %4191 = vmatprep.subr.bf16.mxu0 0
  %4192 = vmatpush1.bf16.msra.mxu0 0
  %4193 = vmatprep.subr.bf16.mxu0 0
  %4194 = vmatpush1.bf16.msra.mxu0 0
  %4195 = vmatprep.subr.bf16.mxu0 0
  %4196 = vmatpush1.bf16.msra.mxu0 0
  %4197 = vmatprep.subr.bf16.mxu0 0
  %4198 = vmatpush1.bf16.msra.mxu0 0
  %4199 = vmatprep.subr.bf16.mxu0 0
  %4200 = vmatpush1.bf16.msra.mxu0 0
  %4201 = vmatprep.mubr.bf16.mxu0 0
  %4202 = vmatmul.mubr.bf16.gmra.mrb[0].mxu0 %v4097
  %v4203 = vpop.f32.mrb[0].mxu0
  %v4204 = vadd.f32 %v4119, %v4203
  %v4205 = vpop.f32.mrb[0].mxu0
  %v4206 = vpop.f32.mrb[0].mxu0
  %v4207 = vpop.f32.mrb[0].mxu0
  %4208 = vdwg.mxu0
  %4209 = vst [vmem:[%s9] sm:$0xff] %v4204
  // Predicated region
  $region38: #{_lambda_.3} parent=0 // pred_check
    _
  $region39: #{_lambda_.3} parent=0 // pred_check_branch
    %4211 = sbr.rel (0) target = $region41
  $region40: #{_lambda_.3} parent=0 // pred_region
    _
  $region41: #{_lambda_.3} parent=0 // pred_fallthru
    _
  // Predicated region
  $region42: #{_lambda_.3} parent=0 // pred_check
    _
  $region43: #{_lambda_.3} parent=0 // pred_check_branch
    %4213 = sbr.rel (0) target = $region45
  $region44: #{_lambda_.3} parent=0 // pred_region
    _
  $region45: #{_lambda_.3} parent=0 // pred_fallthru
    _

</llo_original>
